<compile_context>
chip_gen: v7x
topology: tpu7x:2x2x1
jax: 0.10.0
libtpu: 0.0.40
codegen_flags: <defaults>
</compile_context>

<pallas_src>
import functools

import jax
import jax.numpy as jnp
from jax.experimental import pallas as pl
from jax.experimental.pallas import tpu as pltpu

INPUT_DIM = 230
HIDDEN_DIM = 256
OUTPUT_DIM = 1
DEPTH = 4          # hidden Linear+ReLU layers, plus a final Linear

PAD_IN = 256       # first-layer contraction dim, padded in-kernel (zeros in cols 230:256)


def _round_up(x, m):
    return ((x + m - 1) // m) * m


def dense_model_kernel(z_ref,
                       w1_ref, b1_ref,
                       w2_ref, b2_ref,
                       w3_ref, b3_ref,
                       w4_ref, b4_ref,
                       w5t_ref, b5_ref,
                       o_ref,
                       zpad_ref):
    """Fused MLP forward for one batch tile.

    Hidden matmuls: MXU, bf16 inputs, f32 accumulation; bias-add/ReLU: VPU, f32.
    Final 256->1 layer: f32 VPU multiply + XLU lane reduction, stored as (tile, 1).
    """
    cd = w1_ref.dtype          # bf16 compute dtype for MXU inputs
    bt = zpad_ref.shape[0]

    # In-kernel input prep: zero the padded contraction columns (every step; scratch is
    # per-core and not guaranteed initialized), then drop the cast input into the
    # aligned K=256 buffer.  Both are cheap masked VMEM stores.
    zpad_ref[:, INPUT_DIM:] = jnp.zeros((bt, PAD_IN - INPUT_DIM), cd)
    zpad_ref[:, :INPUT_DIM] = z_ref[...].astype(cd)

    h = jnp.dot(zpad_ref[...], w1_ref[...], preferred_element_type=jnp.float32)
    h = jnp.maximum(h + b1_ref[...], 0.0)

    for w_ref, b_ref in ((w2_ref, b2_ref), (w3_ref, b3_ref), (w4_ref, b4_ref)):
        h = jnp.dot(h.astype(cd), w_ref[...], preferred_element_type=jnp.float32)
        h = jnp.maximum(h + b_ref[...], 0.0)

    # Final Linear(256 -> 1): per-row dot product as VPU multiply + XLU lane reduce.
    out = jnp.sum(h * w5t_ref[...], axis=-1, keepdims=True) + b5_ref[...]
    # output_act = Identity
    o_ref[...] = out.astype(o_ref.dtype)


def pack_params(params, compute_dtype=jnp.bfloat16):
    """One-time param prep (hoisted out of the jitted forward).

    Weights for the hidden layers are cast to bf16 (MXU inputs); w1 is row-padded
    230 -> 256 with zeros; w5 is kept in f32 and transposed to a (1, 256) row for the
    in-kernel VPU reduction; biases stay f32.
    """
    (w1, b1), (w2, b2), (w3, b3), (w4, b4), (w5, b5) = params
    w1_p = jnp.pad(w1.astype(compute_dtype), ((0, PAD_IN - INPUT_DIM), (0, 0)))
    w2_p = w2.astype(compute_dtype)
    w3_p = w3.astype(compute_dtype)
    w4_p = w4.astype(compute_dtype)
    w5t = jnp.transpose(w5.astype(jnp.float32))        # (1, 256)
    b1_p = b1.astype(jnp.float32)
    b2_p = b2.astype(jnp.float32)
    b3_p = b3.astype(jnp.float32)
    b4_p = b4.astype(jnp.float32)
    b5_p = b5.astype(jnp.float32)                       # (1, 1)
    return (w1_p, b1_p, w2_p, b2_p, w3_p, b3_p, w4_p, b4_p, w5t, b5_p)


def _pick_batch_tile(B, requested):
    """Multiple of 128 where possible; >= 2 grid steps whenever B > 128 (keeps both
    v7x TensorCores busy); never bigger than the 8-aligned batch."""
    tile = min(int(requested), max(128, _round_up((B + 1) // 2, 128)))
    tile = min(tile, _round_up(B, 8))
    return max(8, tile)


@functools.partial(jax.jit, static_argnames=("batch_tile",))
def dense_model_forward(z, packed_params, *, batch_tile=2048):
    """z: [B, INPUT_DIM] float32.  packed_params: output of pack_params().
    Returns [B, OUTPUT_DIM] float32."""
    B, D = z.shape
    assert D == INPUT_DIM
    (w1_p, b1_p, w2_p, b2_p, w3_p, b3_p, w4_p, b4_p, w5t, b5_p) = packed_params

    tile = _pick_batch_tile(B, batch_tile)
    num_tiles = pl.cdiv(B, tile)

    # Raw f32 input blocks; last dim 230 equals the full array dim so it is exempt
    # from the 128 rule.  The cast/pad happens in-kernel.
    z_spec = pl.BlockSpec((tile, INPUT_DIM), lambda i: (i, 0))

    def resident(arr):
        # Constant index_map -> weight/bias stays resident in VMEM across the grid.
        nd = arr.ndim
        return pl.BlockSpec(arr.shape, lambda i, _nd=nd: (0,) * _nd)

    weight_arrays = (w1_p, b1_p, w2_p, b2_p, w3_p, b3_p, w4_p, b4_p, w5t, b5_p)
    in_specs = [z_spec] + [resident(a) for a in weight_arrays]
    out_spec = pl.BlockSpec((tile, OUTPUT_DIM), lambda i: (i, 0))

    # Advisory cost estimate for XLA's scheduler.
    flops_per_row = 2 * (PAD_IN * HIDDEN_DIM
                         + (DEPTH - 1) * HIDDEN_DIM * HIDDEN_DIM
                         + HIDDEN_DIM * OUTPUT_DIM)
    weight_bytes = sum(int(a.size) * a.dtype.itemsize for a in weight_arrays)
    cost = pl.CostEstimate(
        flops=int(B) * flops_per_row,
        transcendentals=0,
        bytes_accessed=int(z.size) * 4 + weight_bytes + int(B) * OUTPUT_DIM * 4)

    return pl.pallas_call(
        dense_model_kernel,
        out_shape=jax.ShapeDtypeStruct((B, OUTPUT_DIM), jnp.float32),
        grid_spec=pltpu.PrefetchScalarGridSpec(
            num_scalar_prefetch=0,
            grid=(num_tiles,),
            in_specs=in_specs,
            out_specs=out_spec,
            scratch_shapes=[pltpu.VMEM((tile, PAD_IN), w1_p.dtype)],
        ),
        compiler_params=pltpu.CompilerParams(
            dimension_semantics=("parallel",),
            vmem_limit_bytes=40 * 1024 * 1024,
        ),
        cost_estimate=cost,
    )(z, *weight_arrays)


def init_params(key):
    """Deterministic init mimicking PyTorch Linear default (uniform +-1/sqrt(fan_in))."""
    dims = [INPUT_DIM] + [HIDDEN_DIM] * DEPTH + [OUTPUT_DIM]
    params = []
    for i in range(len(dims) - 1):
        fan_in, fan_out = dims[i], dims[i + 1]
        key, kw, kb = jax.random.split(key, 3)
        bound = 1.0 / jnp.sqrt(jnp.float32(fan_in))
        w = jax.random.uniform(kw, (fan_in, fan_out), jnp.float32, -bound, bound)
        b = jax.random.uniform(kb, (1, fan_out), jnp.float32, -bound, bound)
        params.append((w, b))
    return params


def reference_forward(z, params):
    """Pure-JAX f32 reference of the PyTorch module."""
    h = z
    n = len(params)
    for i, (w, b) in enumerate(params):
        h = jnp.dot(h, w, preferred_element_type=jnp.float32) + b
        if i < n - 1:
            h = jnp.maximum(h, 0.0)
    return h


def reference_forward_matched(z, params):
    """Pure-JAX reference matching the kernel numerics: bf16 MXU inputs with f32
    accumulation for the hidden layers, f32 bias/ReLU, f32 VPU reduce for the last."""
    h = z
    for w, b in params[:-1]:
        h = jnp.dot(h.astype(jnp.bfloat16), w.astype(jnp.bfloat16),
                    preferred_element_type=jnp.float32) + b
        h = jnp.maximum(h, 0.0)
    w5, b5 = params[-1]
    return jnp.sum(h * jnp.transpose(w5), axis=-1, keepdims=True) + b5


if __name__ == "__main__":
    key = jax.random.PRNGKey(0)
    key, kz = jax.random.split(key)

    # B is deliberately not a tile multiple (exercises the ragged last block) and the
    # tile picker chooses 256 -> 2 parallel grid steps (both TensorCores on v7x).
    B = 300
    z = jax.random.normal(kz, (B, INPUT_DIM), jnp.float32)
    params = init_params(key)
    packed = pack_params(params)

    out = dense_model_forward(z, packed)
    out = jax.block_until_ready(out)
    assert out.shape == (B, OUTPUT_DIM)

    # Tight check against a reference with matched bf16/f32 rounding points.
    ref_m = reference_forward_matched(z, params)
    assert jnp.allclose(out, ref_m, atol=2e-3, rtol=2e-3), "mismatch vs matched reference"

    # Loose check against the full-f32 reference (bf16 weight rounding error only).
    ref_f32 = reference_forward(z, params)
    assert jnp.allclose(out, ref_f32, atol=5e-2, rtol=5e-2), "mismatch vs f32 reference"

    print("KERNEL_OK")
</pallas_src>

<mosaic_0001>
module attributes {stable_mosaic.version = 11 : i64} {
  func.func @dense_model_kernel(%arg0: i32, %arg1: memref<256x230xf32, #tpu.memory_space<vmem>>, %arg2: memref<256x256xbf16, #tpu.memory_space<vmem>>, %arg3: memref<1x256xf32, #tpu.memory_space<vmem>>, %arg4: memref<256x256xbf16, #tpu.memory_space<vmem>>, %arg5: memref<1x256xf32, #tpu.memory_space<vmem>>, %arg6: memref<256x256xbf16, #tpu.memory_space<vmem>>, %arg7: memref<1x256xf32, #tpu.memory_space<vmem>>, %arg8: memref<256x256xbf16, #tpu.memory_space<vmem>>, %arg9: memref<1x256xf32, #tpu.memory_space<vmem>>, %arg10: memref<1x256xf32, #tpu.memory_space<vmem>>, %arg11: memref<1x1xf32, #tpu.memory_space<vmem>>, %arg12: memref<256x1xf32, #tpu.memory_space<vmem>>, %arg13: memref<256x256xbf16, #tpu.memory_space<vmem>>) attributes {dimension_semantics = [#tpu.dimension_semantics<parallel>], iteration_bounds = array<i64: 2>, scalar_prefetch = 0 : i64, scratch_operands = 1 : i64, tpu.core_type = #tpu.core_type<tc>, window_params = [{transform_indices = @transform_0, window_bounds = array<i64: 256, 230>}, {pipeline_mode = #tpu.pipeline_mode<synchronous>, transform_indices = @transform_1, window_bounds = array<i64: 256, 256>}, {pipeline_mode = #tpu.pipeline_mode<synchronous>, transform_indices = @transform_2, window_bounds = array<i64: 1, 256>}, {pipeline_mode = #tpu.pipeline_mode<synchronous>, transform_indices = @transform_3, window_bounds = array<i64: 256, 256>}, {pipeline_mode = #tpu.pipeline_mode<synchronous>, transform_indices = @transform_4, window_bounds = array<i64: 1, 256>}, {pipeline_mode = #tpu.pipeline_mode<synchronous>, transform_indices = @transform_5, window_bounds = array<i64: 256, 256>}, {pipeline_mode = #tpu.pipeline_mode<synchronous>, transform_indices = @transform_6, window_bounds = array<i64: 1, 256>}, {pipeline_mode = #tpu.pipeline_mode<synchronous>, transform_indices = @transform_7, window_bounds = array<i64: 256, 256>}, {pipeline_mode = #tpu.pipeline_mode<synchronous>, transform_indices = @transform_8, window_bounds = array<i64: 1, 256>}, {pipeline_mode = #tpu.pipeline_mode<synchronous>, transform_indices = @transform_9, window_bounds = array<i64: 1, 256>}, {pipeline_mode = #tpu.pipeline_mode<synchronous>, transform_indices = @transform_10, window_bounds = array<i64: 1, 1>}, {transform_indices = @transform_11, window_bounds = array<i64: 256, 1>}]} {
    %cst = arith.constant 0.000000e+00 : bf16
    %0 = vector.broadcast %cst : bf16 to vector<256x26xbf16>
    %c0 = arith.constant 0 : index
    %c230 = arith.constant 230 : index
    %1 = vector.load %arg13[%c0, %c230] : memref<256x256xbf16, #tpu.memory_space<vmem>>, vector<256x26xbf16>
    tpu.vector_store %arg13[%c0, %c230], %0 {strides = array<i32>} : memref<256x256xbf16, #tpu.memory_space<vmem>>, vector<256x26xbf16>,
    %c0_0 = arith.constant 0 : index
    %c0_1 = arith.constant 0 : index
    %2 = vector.load %arg1[%c0_0, %c0_1] : memref<256x230xf32, #tpu.memory_space<vmem>>, vector<256x230xf32>
    %3 = arith.truncf %2 : vector<256x230xf32> to vector<256x230xbf16>
    %c0_2 = arith.constant 0 : index
    %c0_3 = arith.constant 0 : index
    %4 = vector.load %arg13[%c0_2, %c0_3] : memref<256x256xbf16, #tpu.memory_space<vmem>>, vector<256x230xbf16>
    tpu.vector_store %arg13[%c0_2, %c0_3], %3 {strides = array<i32>} : memref<256x256xbf16, #tpu.memory_space<vmem>>, vector<256x230xbf16>,
    %c0_4 = arith.constant 0 : index
    %c0_5 = arith.constant 0 : index
    %5 = vector.load %arg13[%c0_4, %c0_5] : memref<256x256xbf16, #tpu.memory_space<vmem>>, vector<256x256xbf16>
    %c0_6 = arith.constant 0 : index
    %c0_7 = arith.constant 0 : index
    %6 = vector.load %arg2[%c0_6, %c0_7] : memref<256x256xbf16, #tpu.memory_space<vmem>>, vector<256x256xbf16>
    %cst_8 = arith.constant dense<0.000000e+00> : vector<256x256xf32>
    %7 = tpu.matmul %5, %6, %cst_8 {dimension_numbers = #tpu.dot_dimension_numbers<[1], [0], [0], [1], [0, 0, 1, 1], [], []>} : vector<256x256xbf16>, vector<256x256xbf16>, vector<256x256xf32> -> vector<256x256xf32>
    %c0_9 = arith.constant 0 : index
    %c0_10 = arith.constant 0 : index
    %8 = vector.load %arg3[%c0_9, %c0_10] : memref<1x256xf32, #tpu.memory_space<vmem>>, vector<1x256xf32>
    %9 = vector.broadcast %8 : vector<1x256xf32> to vector<256x256xf32>
    %10 = arith.addf %7, %9 : vector<256x256xf32>
    %cst_11 = arith.constant 0.000000e+00 : f32
    %11 = vector.broadcast %cst_11 : f32 to vector<256x256xf32>
    %12 = arith.maximumf %10, %11 : vector<256x256xf32>
    %13 = arith.truncf %12 : vector<256x256xf32> to vector<256x256xbf16>
    %c0_12 = arith.constant 0 : index
    %c0_13 = arith.constant 0 : index
    %14 = vector.load %arg4[%c0_12, %c0_13] : memref<256x256xbf16, #tpu.memory_space<vmem>>, vector<256x256xbf16>
    %cst_14 = arith.constant dense<0.000000e+00> : vector<256x256xf32>
    %15 = tpu.matmul %13, %14, %cst_14 {dimension_numbers = #tpu.dot_dimension_numbers<[1], [0], [0], [1], [0, 0, 1, 1], [], []>} : vector<256x256xbf16>, vector<256x256xbf16>, vector<256x256xf32> -> vector<256x256xf32>
    %c0_15 = arith.constant 0 : index
    %c0_16 = arith.constant 0 : index
    %16 = vector.load %arg5[%c0_15, %c0_16] : memref<1x256xf32, #tpu.memory_space<vmem>>, vector<1x256xf32>
    %17 = vector.broadcast %16 : vector<1x256xf32> to vector<256x256xf32>
    %18 = arith.addf %15, %17 : vector<256x256xf32>
    %cst_17 = arith.constant 0.000000e+00 : f32
    %19 = vector.broadcast %cst_17 : f32 to vector<256x256xf32>
    %20 = arith.maximumf %18, %19 : vector<256x256xf32>
    %21 = arith.truncf %20 : vector<256x256xf32> to vector<256x256xbf16>
    %c0_18 = arith.constant 0 : index
    %c0_19 = arith.constant 0 : index
    %22 = vector.load %arg6[%c0_18, %c0_19] : memref<256x256xbf16, #tpu.memory_space<vmem>>, vector<256x256xbf16>
    %cst_20 = arith.constant dense<0.000000e+00> : vector<256x256xf32>
    %23 = tpu.matmul %21, %22, %cst_20 {dimension_numbers = #tpu.dot_dimension_numbers<[1], [0], [0], [1], [0, 0, 1, 1], [], []>} : vector<256x256xbf16>, vector<256x256xbf16>, vector<256x256xf32> -> vector<256x256xf32>
    %c0_21 = arith.constant 0 : index
    %c0_22 = arith.constant 0 : index
    %24 = vector.load %arg7[%c0_21, %c0_22] : memref<1x256xf32, #tpu.memory_space<vmem>>, vector<1x256xf32>
    %25 = vector.broadcast %24 : vector<1x256xf32> to vector<256x256xf32>
    %26 = arith.addf %23, %25 : vector<256x256xf32>
    %cst_23 = arith.constant 0.000000e+00 : f32
    %27 = vector.broadcast %cst_23 : f32 to vector<256x256xf32>
    %28 = arith.maximumf %26, %27 : vector<256x256xf32>
    %29 = arith.truncf %28 : vector<256x256xf32> to vector<256x256xbf16>
    %c0_24 = arith.constant 0 : index
    %c0_25 = arith.constant 0 : index
    %30 = vector.load %arg8[%c0_24, %c0_25] : memref<256x256xbf16, #tpu.memory_space<vmem>>, vector<256x256xbf16>
    %cst_26 = arith.constant dense<0.000000e+00> : vector<256x256xf32>
    %31 = tpu.matmul %29, %30, %cst_26 {dimension_numbers = #tpu.dot_dimension_numbers<[1], [0], [0], [1], [0, 0, 1, 1], [], []>} : vector<256x256xbf16>, vector<256x256xbf16>, vector<256x256xf32> -> vector<256x256xf32>
    %c0_27 = arith.constant 0 : index
    %c0_28 = arith.constant 0 : index
    %32 = vector.load %arg9[%c0_27, %c0_28] : memref<1x256xf32, #tpu.memory_space<vmem>>, vector<1x256xf32>
    %33 = vector.broadcast %32 : vector<1x256xf32> to vector<256x256xf32>
    %34 = arith.addf %31, %33 : vector<256x256xf32>
    %cst_29 = arith.constant 0.000000e+00 : f32
    %35 = vector.broadcast %cst_29 : f32 to vector<256x256xf32>
    %36 = arith.maximumf %34, %35 : vector<256x256xf32>
    %c0_30 = arith.constant 0 : index
    %c0_31 = arith.constant 0 : index
    %37 = vector.load %arg10[%c0_30, %c0_31] : memref<1x256xf32, #tpu.memory_space<vmem>>, vector<1x256xf32>
    %38 = vector.broadcast %37 : vector<1x256xf32> to vector<256x256xf32>
    %39 = arith.mulf %36, %38 : vector<256x256xf32>
    %cst_32 = arith.constant dense<0.000000e+00> : vector<256xf32>
    %40 = vector.multi_reduction <add>, %39, %cst_32 [1] : vector<256x256xf32> to vector<256xf32>
    %41 = vector.shape_cast %40 : vector<256xf32> to vector<256x1xf32>
    %c0_33 = arith.constant 0 : index
    %c0_34 = arith.constant 0 : index
    %42 = vector.load %arg11[%c0_33, %c0_34] : memref<1x1xf32, #tpu.memory_space<vmem>>, vector<1x1xf32>
    %43 = vector.broadcast %42 : vector<1x1xf32> to vector<256x1xf32>
    %44 = arith.addf %41, %43 : vector<256x1xf32>
    %c0_35 = arith.constant 0 : index
    %c0_36 = arith.constant 0 : index
    %45 = vector.load %arg12[%c0_35, %c0_36] : memref<256x1xf32, #tpu.memory_space<vmem>>, vector<256x1xf32>
    tpu.vector_store %arg12[%c0_35, %c0_36], %44 {strides = array<i32>} : memref<256x1xf32, #tpu.memory_space<vmem>>, vector<256x1xf32>,
    return
  }
  func.func @transform_0(%arg0: i32) -> (i32, i32) {
    %c0_i32 = arith.constant 0 : i32
    %c0_i32_0 = arith.constant 0 : i32
    return %arg0, %c0_i32 : i32, i32
  }
  func.func @transform_1(%arg0: i32) -> (i32, i32) {
    %c0_i32 = arith.constant 0 : i32
    %c0_i32_0 = arith.constant 0 : i32
    %c0_i32_1 = arith.constant 0 : i32
    return %c0_i32, %c0_i32_0 : i32, i32
  }
  func.func @transform_2(%arg0: i32) -> (i32, i32) {
    %c0_i32 = arith.constant 0 : i32
    %c0_i32_0 = arith.constant 0 : i32
    %c0_i32_1 = arith.constant 0 : i32
    return %c0_i32, %c0_i32_0 : i32, i32
  }
  func.func @transform_3(%arg0: i32) -> (i32, i32) {
    %c0_i32 = arith.constant 0 : i32
    %c0_i32_0 = arith.constant 0 : i32
    %c0_i32_1 = arith.constant 0 : i32
    return %c0_i32, %c0_i32_0 : i32, i32
  }
  func.func @transform_4(%arg0: i32) -> (i32, i32) {
    %c0_i32 = arith.constant 0 : i32
    %c0_i32_0 = arith.constant 0 : i32
    %c0_i32_1 = arith.constant 0 : i32
    return %c0_i32, %c0_i32_0 : i32, i32
  }
  func.func @transform_5(%arg0: i32) -> (i32, i32) {
    %c0_i32 = arith.constant 0 : i32
    %c0_i32_0 = arith.constant 0 : i32
    %c0_i32_1 = arith.constant 0 : i32
    return %c0_i32, %c0_i32_0 : i32, i32
  }
  func.func @transform_6(%arg0: i32) -> (i32, i32) {
    %c0_i32 = arith.constant 0 : i32
    %c0_i32_0 = arith.constant 0 : i32
    %c0_i32_1 = arith.constant 0 : i32
    return %c0_i32, %c0_i32_0 : i32, i32
  }
  func.func @transform_7(%arg0: i32) -> (i32, i32) {
    %c0_i32 = arith.constant 0 : i32
    %c0_i32_0 = arith.constant 0 : i32
    %c0_i32_1 = arith.constant 0 : i32
    return %c0_i32, %c0_i32_0 : i32, i32
  }
  func.func @transform_8(%arg0: i32) -> (i32, i32) {
    %c0_i32 = arith.constant 0 : i32
    %c0_i32_0 = arith.constant 0 : i32
    %c0_i32_1 = arith.constant 0 : i32
    return %c0_i32, %c0_i32_0 : i32, i32
  }
  func.func @transform_9(%arg0: i32) -> (i32, i32) {
    %c0_i32 = arith.constant 0 : i32
    %c0_i32_0 = arith.constant 0 : i32
    %c0_i32_1 = arith.constant 0 : i32
    return %c0_i32, %c0_i32_0 : i32, i32
  }
  func.func @transform_10(%arg0: i32) -> (i32, i32) {
    %c0_i32 = arith.constant 0 : i32
    %c0_i32_0 = arith.constant 0 : i32
    %c0_i32_1 = arith.constant 0 : i32
    return %c0_i32, %c0_i32_0 : i32, i32
  }
  func.func @transform_11(%arg0: i32) -> (i32, i32) {
    %c0_i32 = arith.constant 0 : i32
    %c0_i32_0 = arith.constant 0 : i32
    return %arg0, %c0_i32 : i32, i32
  }
}

</mosaic_0001>

<llo_original>
// kernel: dense_model_forward.1
$region0: #{dense_model_forward.1}
  #allocation0 [shape = 'u32[]', space=smem, size = 0x4, offset = 0x4, fixed_abs, tag = 'smem constant byte address 0x4 - core index']
  #allocation1 [shape = 'u32[144,128]{1,0:T(1,128)}', space=vmem, size = 0x12000, scoped, tag = 'internal scratch']
  #allocation2 [shape = 'bf16[256,256]{1,0:T(16,128)(2,1)}', space=vmem, size = 0x20000, scoped, tag = 'scratch operand']
  #allocation3 [shape = 'f32[1,1]{1,0:T(1,128)S(1)}', space=vmem, size = 0x200, scoped, tag = 'scoped memory for dense_model_forward.1']
  %s0 = inlined_call_operand.hbm [shape: f32[300,230], index: 0, kind: input, shape index: {}]
  %s1 = inlined_call_operand.hbm [shape: bf16[256,256], index: 1, kind: input, shape index: {}]
  %s2 = inlined_call_operand.vmem [shape: f32[1,256], index: 2, kind: input, shape index: {}]
  %s3 = inlined_call_operand.hbm [shape: bf16[256,256], index: 3, kind: input, shape index: {}]
  %s4 = inlined_call_operand.vmem [shape: f32[1,256], index: 4, kind: input, shape index: {}]
  %s5 = inlined_call_operand.hbm [shape: bf16[256,256], index: 5, kind: input, shape index: {}]
  %s6 = inlined_call_operand.vmem [shape: f32[1,256], index: 6, kind: input, shape index: {}]
  %s7 = inlined_call_operand.hbm [shape: bf16[256,256], index: 7, kind: input, shape index: {}]
  %s8 = inlined_call_operand.vmem [shape: f32[1,256], index: 8, kind: input, shape index: {}]
  %s9 = inlined_call_operand.vmem [shape: f32[1,256], index: 9, kind: input, shape index: {}]
  %s10 = inlined_call_operand.<no memory space> [shape: f32[1,1], index: 10, kind: input, shape index: {}]
  %s11 = inlined_call_operand.vmem [shape: f32[300,1], index: 11, kind: output, shape index: {}]
  %s12 = sld [smem:[#allocation0]]
  $region145: #{dense_model_forward.1} parent=0
    _
  %s14 = ssub.s32 1, %s12
  %s15 = scalar_select 0, %s14, %s12
  %v16 = vstv %s10
  %17 = vst [vmem:[#allocation3] sm:$0x1] %v16
  $region1: #{dense_model_forward.1} parent=0
    #allocation4 [shape = 'u8[524288]{0}', space=vmem, size = 0x80000, scoped, tag = 'input window, operand 0']
    #allocation5 [shape = 's32[2]{0}', space=sflag, size = 0x8, scoped, tag = 'scoped memory for dense_model_forward.1']
    #allocation6 [shape = 'u8[131072]{0}', space=vmem, size = 0x20000, scoped, tag = 'input window, operand 1, single buffered']
    #allocation7 [shape = 's32[1]{0}', space=sflag, size = 0x4, scoped, tag = 'scoped memory for dense_model_forward.1']
    #allocation8 [shape = 'u8[131072]{0}', space=vmem, size = 0x20000, scoped, tag = 'input window, operand 3, single buffered']
    #allocation9 [shape = 'u8[131072]{0}', space=vmem, size = 0x20000, scoped, tag = 'input window, operand 5, single buffered']
    #allocation10 [shape = 's32[1]{0}', space=sflag, size = 0x4, scoped, tag = 'scoped memory for dense_model_forward.1']
    #allocation11 [shape = 'u8[131072]{0}', space=vmem, size = 0x20000, scoped, tag = 'input window, operand 7, single buffered']
    #allocation12 [shape = 'u8[262144]{0}', space=vmem, size = 0x40000, scoped, tag = 'output window, operand 0']
    %18 = vsyncpa [#allocation5], 0
    %s19 = scalar_lea.sflag [#allocation5], 1
    %20 = vsyncpa %s19, 0
    %21 = vsyncpa [#allocation7], 0
    %22 = vsyncpa [#allocation10], 0
    loop: start=0, step=1, limit=4
    $region2: #{dense_model_forward.1} parent=1 // loop_pre_header
      _
    $region3: #{dense_model_forward.1} parent=1 // loop_header
      %s24 = sphi 0, %s28
      %p25 = scmp.ge.s32.totalorder %s24, 4
      %s34 = sphi 0, %s36
      %s37 = sphi 0, %s34
      %s38 = sphi 0, %s37
      %s54 = sphi 0, %s38
      %s58 = sphi 0, %s58
      %s60 = sphi 0, %s58
      %s61 = sphi 0, %s60
      %s75 = sphi 0, %s61
      %s79 = sphi 0, %s79
      %s81 = sphi 0, %s79
      %s82 = sphi 0, %s81
      %s96 = sphi 0, %s82
      %s100 = sphi 0, %s100
      %s102 = sphi 0, %s100
      %s103 = sphi 0, %s102
      %s117 = sphi 0, %s103
      %s121 = sphi 0, %s121
      %s123 = sphi 0, %s121
      %s124 = sphi 0, %s123
      %s138 = sphi 0, %s124
      %s142 = sphi 0, %s142
      %s144 = sphi 0, %s142
      %s145 = sphi 0, %s144
      %s159 = sphi 0, %s145
      %s163 = sphi 0, %s163
      %s165 = sphi 0, %s163
      %s166 = sphi 0, %s165
      %s180 = sphi 0, %s166
      %s184 = sphi 0, %s184
      %s186 = sphi 0, %s184
      %s187 = sphi 0, %s186
      %s201 = sphi 0, %s187
      %s205 = sphi 0, %s205
      %s207 = sphi 0, %s205
      %s208 = sphi 0, %s207
      %s222 = sphi 0, %s208
      %s226 = sphi 0, %s226
      %s228 = sphi 0, %s226
      %s229 = sphi 0, %s228
      %s243 = sphi 0, %s229
      %s247 = sphi 0, %s247
      %s249 = sphi 0, %s247
      %s250 = sphi 0, %s249
      %s264 = sphi 0, %s250
      %s270 = sphi 0, %s272
      %s273 = sphi 0, %s270
      %s274 = sphi 0, %s273
      %s290 = sphi 0, %s274
    $region4: #{dense_model_forward.1} parent=1 // loop_header_branch
      %27 = sbr.rel (%p25) target = $region8
    $region5: #{dense_model_forward.1} parent=1 // loop_body
      %s29 = ssub.s32 %s24, 1
      %s30 = ssub.s32 %s24, 2
      %s31 = sadd.s32 %s24, 1
      %s32 = ssub.s32 %s24, %s31
      %p33 = scmp.eq.s32.totalorder %s32, 0
      %s35 = sadd.s32 %s34, 1
      %s36 = scalar_select %p33, %s34, %s35
      %p39 = pneg %p33
      %p40 = scmp.eq.s32.totalorder %s24, 1
      %p41 = por %p39, %p40
      %p42 = scmp.ne.s32.totalorder %s34, %s37
      %p43 = scmp.eq.s32.totalorder %s24, 0
      %p44 = por %p42, %p43
      %p45 = scmp.ne.s32.totalorder %s34, %s37
      %p46 = scmp.eq.s32.totalorder %s29, 1
      %p47 = por %p45, %p46
      %p48 = scmp.ne.s32.totalorder %s37, %s38
      %p49 = scmp.eq.s32.totalorder %s29, 0
      %p50 = por %p48, %p49
      %p51 = scmp.ne.s32.totalorder %s37, %s38
      %p52 = scmp.eq.s32.totalorder %s30, 1
      %p53 = por %p51, %p52
      %p55 = scmp.ne.s32.totalorder %s38, %s54
      %p56 = scmp.eq.s32.totalorder %s30, 0
      %p57 = por %p55, %p56
      %s59 = sadd.s32 %s58, 1
      %p62 = scmp.eq.s32.totalorder %s24, 1
      %p63 = scmp.ne.s32.totalorder %s58, %s60
      %p64 = scmp.eq.s32.totalorder %s24, 0
      %p65 = por %p63, %p64
      %p66 = scmp.ne.s32.totalorder %s58, %s60
      %p67 = scmp.eq.s32.totalorder %s29, 1
      %p68 = por %p66, %p67
      %p69 = scmp.ne.s32.totalorder %s60, %s61
      %p70 = scmp.eq.s32.totalorder %s29, 0
      %p71 = por %p69, %p70
      %p72 = scmp.ne.s32.totalorder %s60, %s61
      %p73 = scmp.eq.s32.totalorder %s30, 1
      %p74 = por %p72, %p73
      %p76 = scmp.ne.s32.totalorder %s61, %s75
      %p77 = scmp.eq.s32.totalorder %s30, 0
      %p78 = por %p76, %p77
      %s80 = sadd.s32 %s79, 1
      %p83 = scmp.eq.s32.totalorder %s24, 1
      %p84 = scmp.ne.s32.totalorder %s79, %s81
      %p85 = scmp.eq.s32.totalorder %s24, 0
      %p86 = por %p84, %p85
      %p87 = scmp.ne.s32.totalorder %s79, %s81
      %p88 = scmp.eq.s32.totalorder %s29, 1
      %p89 = por %p87, %p88
      %p90 = scmp.ne.s32.totalorder %s81, %s82
      %p91 = scmp.eq.s32.totalorder %s29, 0
      %p92 = por %p90, %p91
      %p93 = scmp.ne.s32.totalorder %s81, %s82
      %p94 = scmp.eq.s32.totalorder %s30, 1
      %p95 = por %p93, %p94
      %p97 = scmp.ne.s32.totalorder %s82, %s96
      %p98 = scmp.eq.s32.totalorder %s30, 0
      %p99 = por %p97, %p98
      %s101 = sadd.s32 %s100, 1
      %p104 = scmp.eq.s32.totalorder %s24, 1
      %p105 = scmp.ne.s32.totalorder %s100, %s102
      %p106 = scmp.eq.s32.totalorder %s24, 0
      %p107 = por %p105, %p106
      %p108 = scmp.ne.s32.totalorder %s100, %s102
      %p109 = scmp.eq.s32.totalorder %s29, 1
      %p110 = por %p108, %p109
      %p111 = scmp.ne.s32.totalorder %s102, %s103
      %p112 = scmp.eq.s32.totalorder %s29, 0
      %p113 = por %p111, %p112
      %p114 = scmp.ne.s32.totalorder %s102, %s103
      %p115 = scmp.eq.s32.totalorder %s30, 1
      %p116 = por %p114, %p115
      %p118 = scmp.ne.s32.totalorder %s103, %s117
      %p119 = scmp.eq.s32.totalorder %s30, 0
      %p120 = por %p118, %p119
      %s122 = sadd.s32 %s121, 1
      %p125 = scmp.eq.s32.totalorder %s24, 1
      %p126 = scmp.ne.s32.totalorder %s121, %s123
      %p127 = scmp.eq.s32.totalorder %s24, 0
      %p128 = por %p126, %p127
      %p129 = scmp.ne.s32.totalorder %s121, %s123
      %p130 = scmp.eq.s32.totalorder %s29, 1
      %p131 = por %p129, %p130
      %p132 = scmp.ne.s32.totalorder %s123, %s124
      %p133 = scmp.eq.s32.totalorder %s29, 0
      %p134 = por %p132, %p133
      %p135 = scmp.ne.s32.totalorder %s123, %s124
      %p136 = scmp.eq.s32.totalorder %s30, 1
      %p137 = por %p135, %p136
      %p139 = scmp.ne.s32.totalorder %s124, %s138
      %p140 = scmp.eq.s32.totalorder %s30, 0
      %p141 = por %p139, %p140
      %s143 = sadd.s32 %s142, 1
      %p146 = scmp.eq.s32.totalorder %s24, 1
      %p147 = scmp.ne.s32.totalorder %s142, %s144
      %p148 = scmp.eq.s32.totalorder %s24, 0
      %p149 = por %p147, %p148
      %p150 = scmp.ne.s32.totalorder %s142, %s144
      %p151 = scmp.eq.s32.totalorder %s29, 1
      %p152 = por %p150, %p151
      %p153 = scmp.ne.s32.totalorder %s144, %s145
      %p154 = scmp.eq.s32.totalorder %s29, 0
      %p155 = por %p153, %p154
      %p156 = scmp.ne.s32.totalorder %s144, %s145
      %p157 = scmp.eq.s32.totalorder %s30, 1
      %p158 = por %p156, %p157
      %p160 = scmp.ne.s32.totalorder %s145, %s159
      %p161 = scmp.eq.s32.totalorder %s30, 0
      %p162 = por %p160, %p161
      %s164 = sadd.s32 %s163, 1
      %p167 = scmp.eq.s32.totalorder %s24, 1
      %p168 = scmp.ne.s32.totalorder %s163, %s165
      %p169 = scmp.eq.s32.totalorder %s24, 0
      %p170 = por %p168, %p169
      %p171 = scmp.ne.s32.totalorder %s163, %s165
      %p172 = scmp.eq.s32.totalorder %s29, 1
      %p173 = por %p171, %p172
      %p174 = scmp.ne.s32.totalorder %s165, %s166
      %p175 = scmp.eq.s32.totalorder %s29, 0
      %p176 = por %p174, %p175
      %p177 = scmp.ne.s32.totalorder %s165, %s166
      %p178 = scmp.eq.s32.totalorder %s30, 1
      %p179 = por %p177, %p178
      %p181 = scmp.ne.s32.totalorder %s166, %s180
      %p182 = scmp.eq.s32.totalorder %s30, 0
      %p183 = por %p181, %p182
      %s185 = sadd.s32 %s184, 1
      %p188 = scmp.eq.s32.totalorder %s24, 1
      %p189 = scmp.ne.s32.totalorder %s184, %s186
      %p190 = scmp.eq.s32.totalorder %s24, 0
      %p191 = por %p189, %p190
      %p192 = scmp.ne.s32.totalorder %s184, %s186
      %p193 = scmp.eq.s32.totalorder %s29, 1
      %p194 = por %p192, %p193
      %p195 = scmp.ne.s32.totalorder %s186, %s187
      %p196 = scmp.eq.s32.totalorder %s29, 0
      %p197 = por %p195, %p196
      %p198 = scmp.ne.s32.totalorder %s186, %s187
      %p199 = scmp.eq.s32.totalorder %s30, 1
      %p200 = por %p198, %p199
      %p202 = scmp.ne.s32.totalorder %s187, %s201
      %p203 = scmp.eq.s32.totalorder %s30, 0
      %p204 = por %p202, %p203
      %s206 = sadd.s32 %s205, 1
      %p209 = scmp.eq.s32.totalorder %s24, 1
      %p210 = scmp.ne.s32.totalorder %s205, %s207
      %p211 = scmp.eq.s32.totalorder %s24, 0
      %p212 = por %p210, %p211
      %p213 = scmp.ne.s32.totalorder %s205, %s207
      %p214 = scmp.eq.s32.totalorder %s29, 1
      %p215 = por %p213, %p214
      %p216 = scmp.ne.s32.totalorder %s207, %s208
      %p217 = scmp.eq.s32.totalorder %s29, 0
      %p218 = por %p216, %p217
      %p219 = scmp.ne.s32.totalorder %s207, %s208
      %p220 = scmp.eq.s32.totalorder %s30, 1
      %p221 = por %p219, %p220
      %p223 = scmp.ne.s32.totalorder %s208, %s222
      %p224 = scmp.eq.s32.totalorder %s30, 0
      %p225 = por %p223, %p224
      %s227 = sadd.s32 %s226, 1
      %p230 = scmp.eq.s32.totalorder %s24, 1
      %p231 = scmp.ne.s32.totalorder %s226, %s228
      %p232 = scmp.eq.s32.totalorder %s24, 0
      %p233 = por %p231, %p232
      %p234 = scmp.ne.s32.totalorder %s226, %s228
      %p235 = scmp.eq.s32.totalorder %s29, 1
      %p236 = por %p234, %p235
      %p237 = scmp.ne.s32.totalorder %s228, %s229
      %p238 = scmp.eq.s32.totalorder %s29, 0
      %p239 = por %p237, %p238
      %p240 = scmp.ne.s32.totalorder %s228, %s229
      %p241 = scmp.eq.s32.totalorder %s30, 1
      %p242 = por %p240, %p241
      %p244 = scmp.ne.s32.totalorder %s229, %s243
      %p245 = scmp.eq.s32.totalorder %s30, 0
      %p246 = por %p244, %p245
      %s248 = sadd.s32 %s247, 1
      %p251 = scmp.eq.s32.totalorder %s24, 1
      %p252 = scmp.ne.s32.totalorder %s247, %s249
      %p253 = scmp.eq.s32.totalorder %s24, 0
      %p254 = por %p252, %p253
      %p255 = scmp.ne.s32.totalorder %s247, %s249
      %p256 = scmp.eq.s32.totalorder %s29, 1
      %p257 = por %p255, %p256
      %p258 = scmp.ne.s32.totalorder %s249, %s250
      %p259 = scmp.eq.s32.totalorder %s29, 0
      %p260 = por %p258, %p259
      %p261 = scmp.ne.s32.totalorder %s249, %s250
      %p262 = scmp.eq.s32.totalorder %s30, 1
      %p263 = por %p261, %p262
      %p265 = scmp.ne.s32.totalorder %s250, %s264
      %p266 = scmp.eq.s32.totalorder %s30, 0
      %p267 = por %p265, %p266
      %s268 = ssub.s32 %s24, %s31
      %p269 = scmp.eq.s32.totalorder %s268, 0
      %s271 = sadd.s32 %s270, 1
      %s272 = scalar_select %p269, %s270, %s271
      %p275 = pneg %p269
      %p276 = scmp.eq.s32.totalorder %s24, 1
      %p277 = por %p275, %p276
      %p278 = scmp.ne.s32.totalorder %s270, %s273
      %p279 = scmp.eq.s32.totalorder %s24, 0
      %p280 = por %p278, %p279
      %p281 = scmp.ne.s32.totalorder %s270, %s273
      %p282 = scmp.eq.s32.totalorder %s29, 1
      %p283 = por %p281, %p282
      %p284 = scmp.ne.s32.totalorder %s273, %s274
      %p285 = scmp.eq.s32.totalorder %s29, 0
      %p286 = por %p284, %p285
      %p287 = scmp.ne.s32.totalorder %s273, %s274
      %p288 = scmp.eq.s32.totalorder %s30, 1
      %p289 = por %p287, %p288
      %p291 = scmp.ne.s32.totalorder %s274, %s290
      %p292 = scmp.eq.s32.totalorder %s30, 0
      %p293 = por %p291, %p292
      %p294 = scmp.le.s32.totalorder 1, %s24
      %p295 = scmp.lt.s32.totalorder %s24, 3
      %p296 = pnand %p294, %p295
      %p297 = pneg %p296
      // Predicated region
      $region9: #{dense_model_forward.1} parent=5 // pred_check
        _
      $region10: #{dense_model_forward.1} parent=5 // pred_check_branch
        %299 = sbr.rel (%p296) target = $region12
      $region11: #{dense_model_forward.1} parent=5 // pred_region
        %s300 = ssub.s32 %s24, 1
        // Predicated region
        $region13: #{dense_model_forward.1} parent=11 // pred_check
          %p301 = pneg %p71
        $region14: #{dense_model_forward.1} parent=11 // pred_check_branch
          %303 = sbr.rel (%p301) target = $region16
        $region15: #{dense_model_forward.1} parent=11 // pred_region
          %s305 = ssub.s32 4096, 4096
          %306 = vsyncadd [#allocation7], %s305
          %s307 = sshll.u32 [#allocation6], 4
          %s308 = int_to_ptr.vmem [resolvable:$true] %s307
          %313 = dma.hbm_to_vmem [thread:$0]  %s1, 4096, %s308, [#allocation7], 128, 128, 8
        $region16: #{dense_model_forward.1} parent=11 // pred_fallthru
          _
        // Predicated region
        $region17: #{dense_model_forward.1} parent=11 // pred_check
          %p314 = pneg %p92
        $region18: #{dense_model_forward.1} parent=11 // pred_check_branch
          %316 = sbr.rel (%p314) target = $region20
        $region19: #{dense_model_forward.1} parent=11 // pred_region
          _
        $region20: #{dense_model_forward.1} parent=11 // pred_fallthru
          _
        // Predicated region
        $region21: #{dense_model_forward.1} parent=11 // pred_check
          %p317 = pneg %p113
        $region22: #{dense_model_forward.1} parent=11 // pred_check_branch
          %319 = sbr.rel (%p317) target = $region24
        $region23: #{dense_model_forward.1} parent=11 // pred_region
          %s321 = ssub.s32 4096, 4096
          %322 = vsyncadd [#allocation7], %s321
          %s323 = sshll.u32 [#allocation8], 4
          %s324 = int_to_ptr.vmem [resolvable:$true] %s323
          %329 = dma.hbm_to_vmem [thread:$0]  %s3, 4096, %s324, [#allocation7], 128, 128, 8
        $region24: #{dense_model_forward.1} parent=11 // pred_fallthru
          _
        // Predicated region
        $region25: #{dense_model_forward.1} parent=11 // pred_check
          %p330 = pneg %p134
        $region26: #{dense_model_forward.1} parent=11 // pred_check_branch
          %332 = sbr.rel (%p330) target = $region28
        $region27: #{dense_model_forward.1} parent=11 // pred_region
          _
        $region28: #{dense_model_forward.1} parent=11 // pred_fallthru
          _
        // Predicated region
        $region29: #{dense_model_forward.1} parent=11 // pred_check
          %p333 = pneg %p155
        $region30: #{dense_model_forward.1} parent=11 // pred_check_branch
          %335 = sbr.rel (%p333) target = $region32
        $region31: #{dense_model_forward.1} parent=11 // pred_region
          %s337 = ssub.s32 4096, 4096
          %338 = vsyncadd [#allocation10], %s337
          %s339 = sshll.u32 [#allocation9], 4
          %s340 = int_to_ptr.vmem [resolvable:$true] %s339
          %345 = dma.hbm_to_vmem [thread:$0]  %s5, 4096, %s340, [#allocation10], 128, 128, 8
        $region32: #{dense_model_forward.1} parent=11 // pred_fallthru
          _
        // Predicated region
        $region33: #{dense_model_forward.1} parent=11 // pred_check
          %p346 = pneg %p176
        $region34: #{dense_model_forward.1} parent=11 // pred_check_branch
          %348 = sbr.rel (%p346) target = $region36
        $region35: #{dense_model_forward.1} parent=11 // pred_region
          _
        $region36: #{dense_model_forward.1} parent=11 // pred_fallthru
          _
        // Predicated region
        $region37: #{dense_model_forward.1} parent=11 // pred_check
          %p349 = pneg %p197
        $region38: #{dense_model_forward.1} parent=11 // pred_check_branch
          %351 = sbr.rel (%p349) target = $region40
        $region39: #{dense_model_forward.1} parent=11 // pred_region
          %s353 = ssub.s32 4096, 4096
          %354 = vsyncadd [#allocation10], %s353
          %s355 = sshll.u32 [#allocation11], 4
          %s356 = int_to_ptr.vmem [resolvable:$true] %s355
          %361 = dma.hbm_to_vmem [thread:$0]  %s7, 4096, %s356, [#allocation10], 128, 128, 8
        $region40: #{dense_model_forward.1} parent=11 // pred_fallthru
          _
        // Predicated region
        $region41: #{dense_model_forward.1} parent=11 // pred_check
          %p362 = pneg %p218
        $region42: #{dense_model_forward.1} parent=11 // pred_check_branch
          %364 = sbr.rel (%p362) target = $region44
        $region43: #{dense_model_forward.1} parent=11 // pred_region
          _
        $region44: #{dense_model_forward.1} parent=11 // pred_fallthru
          _
        // Predicated region
        $region45: #{dense_model_forward.1} parent=11 // pred_check
          %p365 = pneg %p239
        $region46: #{dense_model_forward.1} parent=11 // pred_check_branch
          %367 = sbr.rel (%p365) target = $region48
        $region47: #{dense_model_forward.1} parent=11 // pred_region
          _
        $region48: #{dense_model_forward.1} parent=11 // pred_fallthru
          _
        // Predicated region
        $region49: #{dense_model_forward.1} parent=11 // pred_check
          %p368 = pneg %p260
        $region50: #{dense_model_forward.1} parent=11 // pred_check_branch
          %370 = sbr.rel (%p368) target = $region52
        $region51: #{dense_model_forward.1} parent=11 // pred_region
          _
        $region52: #{dense_model_forward.1} parent=11 // pred_fallthru
          _
      $region12: #{dense_model_forward.1} parent=5 // pred_fallthru
        _
      %p371 = scmp.lt.s32.totalorder %s24, 2
      // Predicated region
      $region53: #{dense_model_forward.1} parent=5 // pred_check
        %p372 = pneg %p371
      $region54: #{dense_model_forward.1} parent=5 // pred_check_branch
        %374 = sbr.rel (%p372) target = $region56
      $region55: #{dense_model_forward.1} parent=5 // pred_region
        // Predicated region
        $region57: #{dense_model_forward.1} parent=55 // pred_check
          %p375 = pneg %p44
        $region58: #{dense_model_forward.1} parent=55 // pred_check_branch
          %377 = sbr.rel (%p375) target = $region60
        $region59: #{dense_model_forward.1} parent=55 // pred_region
          %s378 = sand.u32 %s34, 1
          %s379 = scalar_lea.sflag [#allocation5], %s378
          %s380 = sand.u32 %s34, 1
          %s381 = smul.addr %s380, 512
          %s382 = scalar_lea.vmem [#allocation4], %s381
          %s383 = smul.u32 32, %s24
          %s384 = ssub.s32 38, %s383
          %p385 = scmp.lt.s32.totalorder %s384, 32
          %s386 = scalar_select %p385, %s384, 32
          %s387 = smul.u32 128, %s386
          %s388 = smul.u32 %s387, 2
          %s390 = ssub.s32 8192, %s388
          %391 = vsyncadd %s379, %s390
          %p392 = scmp.ne.s32.totalorder 0, %s388
          %s393 = smul.addr %s383, 2
          %s394 = smul.addr %s393, 128
          %s395 = scalar_lea.hbm %s0, %s394
          %s396 = smul.u32 16, %s386
          %s397 = sshll.u32 %s382, 4
          %s398 = int_to_ptr.vmem [resolvable:$true] %s397
          %s399 = sshll.u32 %s396, 4
          %403 = dma.hbm_to_vmem [thread:$0]  (%p392), %s395, %s399, %s398, %s379, 256, 256, 16
        $region60: #{dense_model_forward.1} parent=55 // pred_fallthru
          _
      $region56: #{dense_model_forward.1} parent=5 // pred_fallthru
        _
      %p404 = scmp.le.s32.totalorder 1, %s24
      %p405 = scmp.lt.s32.totalorder %s24, 3
      %p406 = pnand %p404, %p405
      %p407 = pneg %p406
      // Predicated region
      $region61: #{dense_model_forward.1} parent=5 // pred_check
        _
      $region62: #{dense_model_forward.1} parent=5 // pred_check_branch
        %409 = sbr.rel (%p406) target = $region64
      $region63: #{dense_model_forward.1} parent=5 // pred_region
        %s410 = ssub.s32 %s24, 1
        %s411 = sand.u32 %s37, 1
        %s412 = scalar_lea.sflag [#allocation5], %s411
        %s413 = sand.u32 %s37, 1
        %s414 = smul.addr %s413, 512
        %s415 = scalar_lea.vmem [#allocation4], %s414
        // Predicated region
        $region65: #{dense_model_forward.1} parent=63 // pred_check
          %p416 = pneg %p50
        $region66: #{dense_model_forward.1} parent=63 // pred_check_branch
          %418 = sbr.rel (%p416) target = $region68
        $region67: #{dense_model_forward.1} parent=63 // pred_region
          %419 = dma.done %s412, 8192
        $region68: #{dense_model_forward.1} parent=63 // pred_fallthru
          _
        // Predicated region
        $region69: #{dense_model_forward.1} parent=63 // pred_check
          %p420 = pneg %p71
        $region70: #{dense_model_forward.1} parent=63 // pred_check_branch
          %422 = sbr.rel (%p420) target = $region72
        $region71: #{dense_model_forward.1} parent=63 // pred_region
          %423 = dma.done [#allocation7], 4096
        $region72: #{dense_model_forward.1} parent=63 // pred_fallthru
          _
        // Predicated region
        $region73: #{dense_model_forward.1} parent=63 // pred_check
          %p424 = pneg %p113
        $region74: #{dense_model_forward.1} parent=63 // pred_check_branch
          %426 = sbr.rel (%p424) target = $region76
        $region75: #{dense_model_forward.1} parent=63 // pred_region
          %427 = dma.done [#allocation7], 4096
        $region76: #{dense_model_forward.1} parent=63 // pred_fallthru
          _
        // Predicated region
        $region77: #{dense_model_forward.1} parent=63 // pred_check
          %p428 = pneg %p155
        $region78: #{dense_model_forward.1} parent=63 // pred_check_branch
          %430 = sbr.rel (%p428) target = $region80
        $region79: #{dense_model_forward.1} parent=63 // pred_region
          %431 = dma.done [#allocation10], 4096
        $region80: #{dense_model_forward.1} parent=63 // pred_fallthru
          _
        // Predicated region
        $region81: #{dense_model_forward.1} parent=63 // pred_check
          %p432 = pneg %p197
        $region82: #{dense_model_forward.1} parent=63 // pred_check_branch
          %434 = sbr.rel (%p432) target = $region84
        $region83: #{dense_model_forward.1} parent=63 // pred_region
          %435 = dma.done [#allocation10], 4096
        $region84: #{dense_model_forward.1} parent=63 // pred_fallthru
          _
        %s436 = sand.u32 %s37, 1
        %s437 = scalar_lea.sflag [#allocation5], %s436
        %s438 = sand.u32 %s37, 1
        %s439 = smul.addr %s438, 512
        %s440 = scalar_lea.vmem [#allocation4], %s439
        %p441 = pneg %p50
        %p442 = pneg %p47
        %p443 = pneg %p71
        %p444 = pneg %p68
        %p445 = pneg %p92
        %p446 = pneg %p89
        %p447 = pneg %p113
        %p448 = pneg %p110
        %p449 = pneg %p134
        %p450 = pneg %p131
        %p451 = pneg %p155
        %p452 = pneg %p152
        %p453 = pneg %p176
        %p454 = pneg %p173
        %p455 = pneg %p197
        %p456 = pneg %p194
        %p457 = pneg %p218
        %p458 = pneg %p215
        %p459 = pneg %p239
        %p460 = pneg %p236
        %p461 = pneg %p260
        %p462 = pneg %p257
        %p463 = pneg %p286
        %p464 = pneg %p283
        %s465 = sand.u32 %s273, 1
        %s466 = sand.u32 %s273, 1
        %s467 = smul.addr %s466, 256
        %s468 = scalar_lea.vmem [#allocation12], %s467
        %s469 = smul.u32 32, %s29
        %s470 = ssub.s32 38, %s469
        %p471 = scmp.lt.s32.totalorder %s470, 32
        %s472 = scalar_select %p471, %s470, 32
        %s473 = smul.u32 128, %s472
        %s474 = smul.u32 %s473, 2
        %s475 = smul.u32 32, %s29
        %s476 = ssub.s32 38, %s475
        %p477 = scmp.lt.s32.totalorder %s476, 32
        %s478 = scalar_select %p477, %s476, 32
        %s479 = smul.u32 128, %s478
        %vm481 = vcmask 1048368
        %482 = vst.msk [vmem:[#allocation2 + $0x8] sm:$0xff] %vm481, 0
        %483 = vst.msk [vmem:[#allocation2 + $0x18] sm:$0xff] %vm481, 0
        %484 = vst.msk [vmem:[#allocation2 + $0x28] sm:$0xff] %vm481, 0
        %485 = vst.msk [vmem:[#allocation2 + $0x38] sm:$0xff] %vm481, 0
        %486 = vst.msk [vmem:[#allocation2 + $0x48] sm:$0xff] %vm481, 0
        %487 = vst.msk [vmem:[#allocation2 + $0x58] sm:$0xff] %vm481, 0
        %488 = vst.msk [vmem:[#allocation2 + $0x68] sm:$0xff] %vm481, 0
        %489 = vst.msk [vmem:[#allocation2 + $0x78] sm:$0xff] %vm481, 0
        %490 = vst.msk [vmem:[#allocation2 + $0x88] sm:$0xff] %vm481, 0
        %491 = vst.msk [vmem:[#allocation2 + $0x98] sm:$0xff] %vm481, 0
        %492 = vst.msk [vmem:[#allocation2 + $0xa8] sm:$0xff] %vm481, 0
        %493 = vst.msk [vmem:[#allocation2 + $0xb8] sm:$0xff] %vm481, 0
        %494 = vst.msk [vmem:[#allocation2 + $0xc8] sm:$0xff] %vm481, 0
        %495 = vst.msk [vmem:[#allocation2 + $0xd8] sm:$0xff] %vm481, 0
        %496 = vst.msk [vmem:[#allocation2 + $0xe8] sm:$0xff] %vm481, 0
        %497 = vst.msk [vmem:[#allocation2 + $0xf8] sm:$0xff] %vm481, 0
        %v498 = vld [vmem:[%s415] sm:$0xff]
        %v499 = vld [vmem:[%s415 + $0x8] sm:$0xff]
        %v500 = vld [vmem:[%s415 + $0x10] sm:$0xff]
        %v501 = vld [vmem:[%s415 + $0x18] sm:$0xff]
        %v502 = vld [vmem:[%s415 + $0x20] sm:$0xff]
        %v503 = vld [vmem:[%s415 + $0x28] sm:$0xff]
        %v504 = vld [vmem:[%s415 + $0x30] sm:$0xff]
        %v505 = vld [vmem:[%s415 + $0x38] sm:$0xff]
        %v506 = vld [vmem:[%s415 + $0x40] sm:$0xff]
        %v507 = vld [vmem:[%s415 + $0x48] sm:$0xff]
        %v508 = vld [vmem:[%s415 + $0x50] sm:$0xff]
        %v509 = vld [vmem:[%s415 + $0x58] sm:$0xff]
        %v510 = vld [vmem:[%s415 + $0x60] sm:$0xff]
        %v511 = vld [vmem:[%s415 + $0x68] sm:$0xff]
        %v512 = vld [vmem:[%s415 + $0x70] sm:$0xff]
        %v513 = vld [vmem:[%s415 + $0x78] sm:$0xff]
        %v514 = vld [vmem:[%s415 + $0x80] sm:$0xff]
        %v515 = vld [vmem:[%s415 + $0x88] sm:$0xff]
        %v516 = vld [vmem:[%s415 + $0x90] sm:$0xff]
        %v517 = vld [vmem:[%s415 + $0x98] sm:$0xff]
        %v518 = vld [vmem:[%s415 + $0xa0] sm:$0xff]
        %v519 = vld [vmem:[%s415 + $0xa8] sm:$0xff]
        %v520 = vld [vmem:[%s415 + $0xb0] sm:$0xff]
        %v521 = vld [vmem:[%s415 + $0xb8] sm:$0xff]
        %v522 = vld [vmem:[%s415 + $0xc0] sm:$0xff]
        %v523 = vld [vmem:[%s415 + $0xc8] sm:$0xff]
        %v524 = vld [vmem:[%s415 + $0xd0] sm:$0xff]
        %v525 = vld [vmem:[%s415 + $0xd8] sm:$0xff]
        %v526 = vld [vmem:[%s415 + $0xe0] sm:$0xff]
        %v527 = vld [vmem:[%s415 + $0xe8] sm:$0xff]
        %v528 = vld [vmem:[%s415 + $0xf0] sm:$0xff]
        %v529 = vld [vmem:[%s415 + $0xf8] sm:$0xff]
        %v530 = vld [vmem:[%s415 + $0x100] sm:$0xff]
        %v531 = vld [vmem:[%s415 + $0x108] sm:$0xff]
        %v532 = vld [vmem:[%s415 + $0x110] sm:$0xff]
        %v533 = vld [vmem:[%s415 + $0x118] sm:$0xff]
        %v534 = vld [vmem:[%s415 + $0x120] sm:$0xff]
        %v535 = vld [vmem:[%s415 + $0x128] sm:$0xff]
        %v536 = vld [vmem:[%s415 + $0x130] sm:$0xff]
        %v537 = vld [vmem:[%s415 + $0x138] sm:$0xff]
        %v538 = vld [vmem:[%s415 + $0x140] sm:$0xff]
        %v539 = vld [vmem:[%s415 + $0x148] sm:$0xff]
        %v540 = vld [vmem:[%s415 + $0x150] sm:$0xff]
        %v541 = vld [vmem:[%s415 + $0x158] sm:$0xff]
        %v542 = vld [vmem:[%s415 + $0x160] sm:$0xff]
        %v543 = vld [vmem:[%s415 + $0x168] sm:$0xff]
        %v544 = vld [vmem:[%s415 + $0x170] sm:$0xff]
        %v545 = vld [vmem:[%s415 + $0x178] sm:$0xff]
        %v546 = vld [vmem:[%s415 + $0x180] sm:$0xff]
        %v547 = vld [vmem:[%s415 + $0x188] sm:$0xff]
        %v548 = vld [vmem:[%s415 + $0x190] sm:$0xff]
        %v549 = vld [vmem:[%s415 + $0x198] sm:$0xff]
        %v550 = vld [vmem:[%s415 + $0x1a0] sm:$0xff]
        %v551 = vld [vmem:[%s415 + $0x1a8] sm:$0xff]
        %v552 = vld [vmem:[%s415 + $0x1b0] sm:$0xff]
        %v553 = vld [vmem:[%s415 + $0x1b8] sm:$0xff]
        %v554 = vld [vmem:[%s415 + $0x1c0] sm:$0xff]
        %v555 = vld [vmem:[%s415 + $0x1c8] sm:$0xff]
        %v556 = vld [vmem:[%s415 + $0x1d0] sm:$0xff]
        %v557 = vld [vmem:[%s415 + $0x1d8] sm:$0xff]
        %v558 = vld [vmem:[%s415 + $0x1e0] sm:$0xff]
        %v559 = vld [vmem:[%s415 + $0x1e8] sm:$0xff]
        %v560 = vld [vmem:[%s415 + $0x1f0] sm:$0xff]
        %v561 = vld [vmem:[%s415 + $0x1f8] sm:$0xff]
        %v562 = vpack.c.bf16 %v500, %v498
        %v563 = vpack.c.bf16 %v501, %v499
        %v564 = vpack.c.bf16 %v504, %v502
        %v565 = vpack.c.bf16 %v505, %v503
        %v566 = vpack.c.bf16 %v508, %v506
        %v567 = vpack.c.bf16 %v509, %v507
        %v568 = vpack.c.bf16 %v512, %v510
        %v569 = vpack.c.bf16 %v513, %v511
        %v570 = vpack.c.bf16 %v516, %v514
        %v571 = vpack.c.bf16 %v517, %v515
        %v572 = vpack.c.bf16 %v520, %v518
        %v573 = vpack.c.bf16 %v521, %v519
        %v574 = vpack.c.bf16 %v524, %v522
        %v575 = vpack.c.bf16 %v525, %v523
        %v576 = vpack.c.bf16 %v528, %v526
        %v577 = vpack.c.bf16 %v529, %v527
        %v578 = vpack.c.bf16 %v532, %v530
        %v579 = vpack.c.bf16 %v533, %v531
        %v580 = vpack.c.bf16 %v536, %v534
        %v581 = vpack.c.bf16 %v537, %v535
        %v582 = vpack.c.bf16 %v540, %v538
        %v583 = vpack.c.bf16 %v541, %v539
        %v584 = vpack.c.bf16 %v544, %v542
        %v585 = vpack.c.bf16 %v545, %v543
        %v586 = vpack.c.bf16 %v548, %v546
        %v587 = vpack.c.bf16 %v549, %v547
        %v588 = vpack.c.bf16 %v552, %v550
        %v589 = vpack.c.bf16 %v553, %v551
        %v590 = vpack.c.bf16 %v556, %v554
        %v591 = vpack.c.bf16 %v557, %v555
        %v592 = vpack.c.bf16 %v560, %v558
        %v593 = vpack.c.bf16 %v561, %v559
        %594 = vst [vmem:[#allocation2] sm:$0xff] %v562
        %vm595 = vcmask 834560
        %596 = vst.msk [vmem:[#allocation2 + $0x8] sm:$0xff] %vm595, %v563
        %597 = vst [vmem:[#allocation2 + $0x10] sm:$0xff] %v564
        %598 = vst.msk [vmem:[#allocation2 + $0x18] sm:$0xff] %vm595, %v565
        %599 = vst [vmem:[#allocation2 + $0x20] sm:$0xff] %v566
        %600 = vst.msk [vmem:[#allocation2 + $0x28] sm:$0xff] %vm595, %v567
        %601 = vst [vmem:[#allocation2 + $0x30] sm:$0xff] %v568
        %602 = vst.msk [vmem:[#allocation2 + $0x38] sm:$0xff] %vm595, %v569
        %603 = vst [vmem:[#allocation2 + $0x40] sm:$0xff] %v570
        %604 = vst.msk [vmem:[#allocation2 + $0x48] sm:$0xff] %vm595, %v571
        %605 = vst [vmem:[#allocation2 + $0x50] sm:$0xff] %v572
        %606 = vst.msk [vmem:[#allocation2 + $0x58] sm:$0xff] %vm595, %v573
        %607 = vst [vmem:[#allocation2 + $0x60] sm:$0xff] %v574
        %608 = vst.msk [vmem:[#allocation2 + $0x68] sm:$0xff] %vm595, %v575
        %609 = vst [vmem:[#allocation2 + $0x70] sm:$0xff] %v576
        %610 = vst.msk [vmem:[#allocation2 + $0x78] sm:$0xff] %vm595, %v577
        %611 = vst [vmem:[#allocation2 + $0x80] sm:$0xff] %v578
        %612 = vst.msk [vmem:[#allocation2 + $0x88] sm:$0xff] %vm595, %v579
        %613 = vst [vmem:[#allocation2 + $0x90] sm:$0xff] %v580
        %614 = vst.msk [vmem:[#allocation2 + $0x98] sm:$0xff] %vm595, %v581
        %615 = vst [vmem:[#allocation2 + $0xa0] sm:$0xff] %v582
        %616 = vst.msk [vmem:[#allocation2 + $0xa8] sm:$0xff] %vm595, %v583
        %617 = vst [vmem:[#allocation2 + $0xb0] sm:$0xff] %v584
        %618 = vst.msk [vmem:[#allocation2 + $0xb8] sm:$0xff] %vm595, %v585
        %619 = vst [vmem:[#allocation2 + $0xc0] sm:$0xff] %v586
        %620 = vst.msk [vmem:[#allocation2 + $0xc8] sm:$0xff] %vm595, %v587
        %621 = vst [vmem:[#allocation2 + $0xd0] sm:$0xff] %v588
        %622 = vst.msk [vmem:[#allocation2 + $0xd8] sm:$0xff] %vm595, %v589
        %623 = vst [vmem:[#allocation2 + $0xe0] sm:$0xff] %v590
        %624 = vst.msk [vmem:[#allocation2 + $0xe8] sm:$0xff] %vm595, %v591
        %625 = vst [vmem:[#allocation2 + $0xf0] sm:$0xff] %v592
        %626 = vst.msk [vmem:[#allocation2 + $0xf8] sm:$0xff] %vm595, %v593
        %v627 = vld [vmem:[#allocation2] sm:$0xff]
        %v628 = vld [vmem:[#allocation2 + $0x8] sm:$0xff]
        %v629 = vld [vmem:[#allocation2 + $0x10] sm:$0xff]
        %v630 = vld [vmem:[#allocation2 + $0x18] sm:$0xff]
        %v631 = vld [vmem:[#allocation2 + $0x20] sm:$0xff]
        %v632 = vld [vmem:[#allocation2 + $0x28] sm:$0xff]
        %v633 = vld [vmem:[#allocation2 + $0x30] sm:$0xff]
        %v634 = vld [vmem:[#allocation2 + $0x38] sm:$0xff]
        %v635 = vld [vmem:[#allocation2 + $0x40] sm:$0xff]
        %v636 = vld [vmem:[#allocation2 + $0x48] sm:$0xff]
        %v637 = vld [vmem:[#allocation2 + $0x50] sm:$0xff]
        %v638 = vld [vmem:[#allocation2 + $0x58] sm:$0xff]
        %v639 = vld [vmem:[#allocation2 + $0x60] sm:$0xff]
        %v640 = vld [vmem:[#allocation2 + $0x68] sm:$0xff]
        %v641 = vld [vmem:[#allocation2 + $0x70] sm:$0xff]
        %v642 = vld [vmem:[#allocation2 + $0x78] sm:$0xff]
        %v643 = vld [vmem:[#allocation2 + $0x80] sm:$0xff]
        %v644 = vld [vmem:[#allocation2 + $0x88] sm:$0xff]
        %v645 = vld [vmem:[#allocation2 + $0x90] sm:$0xff]
        %v646 = vld [vmem:[#allocation2 + $0x98] sm:$0xff]
        %v647 = vld [vmem:[#allocation2 + $0xa0] sm:$0xff]
        %v648 = vld [vmem:[#allocation2 + $0xa8] sm:$0xff]
        %v649 = vld [vmem:[#allocation2 + $0xb0] sm:$0xff]
        %v650 = vld [vmem:[#allocation2 + $0xb8] sm:$0xff]
        %v651 = vld [vmem:[#allocation2 + $0xc0] sm:$0xff]
        %v652 = vld [vmem:[#allocation2 + $0xc8] sm:$0xff]
        %v653 = vld [vmem:[#allocation2 + $0xd0] sm:$0xff]
        %v654 = vld [vmem:[#allocation2 + $0xd8] sm:$0xff]
        %v655 = vld [vmem:[#allocation2 + $0xe0] sm:$0xff]
        %v656 = vld [vmem:[#allocation2 + $0xe8] sm:$0xff]
        %v657 = vld [vmem:[#allocation2 + $0xf0] sm:$0xff]
        %v658 = vld [vmem:[#allocation2 + $0xf8] sm:$0xff]
        %v659 = vld [vmem:[#allocation6] sm:$0xff]
        %v660 = vld [vmem:[#allocation6 + $0x8] sm:$0xff]
        %v661 = vld [vmem:[#allocation6 + $0x10] sm:$0xff]
        %v662 = vld [vmem:[#allocation6 + $0x18] sm:$0xff]
        %v663 = vld [vmem:[#allocation6 + $0x20] sm:$0xff]
        %v664 = vld [vmem:[#allocation6 + $0x28] sm:$0xff]
        %v665 = vld [vmem:[#allocation6 + $0x30] sm:$0xff]
        %v666 = vld [vmem:[#allocation6 + $0x38] sm:$0xff]
        %v667 = vld [vmem:[#allocation6 + $0x40] sm:$0xff]
        %v668 = vld [vmem:[#allocation6 + $0x48] sm:$0xff]
        %v669 = vld [vmem:[#allocation6 + $0x50] sm:$0xff]
        %v670 = vld [vmem:[#allocation6 + $0x58] sm:$0xff]
        %v671 = vld [vmem:[#allocation6 + $0x60] sm:$0xff]
        %v672 = vld [vmem:[#allocation6 + $0x68] sm:$0xff]
        %v673 = vld [vmem:[#allocation6 + $0x70] sm:$0xff]
        %v674 = vld [vmem:[#allocation6 + $0x78] sm:$0xff]
        %v675 = vld [vmem:[#allocation6 + $0x80] sm:$0xff]
        %v676 = vld [vmem:[#allocation6 + $0x88] sm:$0xff]
        %v677 = vld [vmem:[#allocation6 + $0x90] sm:$0xff]
        %v678 = vld [vmem:[#allocation6 + $0x98] sm:$0xff]
        %v679 = vld [vmem:[#allocation6 + $0xa0] sm:$0xff]
        %v680 = vld [vmem:[#allocation6 + $0xa8] sm:$0xff]
        %v681 = vld [vmem:[#allocation6 + $0xb0] sm:$0xff]
        %v682 = vld [vmem:[#allocation6 + $0xb8] sm:$0xff]
        %v683 = vld [vmem:[#allocation6 + $0xc0] sm:$0xff]
        %v684 = vld [vmem:[#allocation6 + $0xc8] sm:$0xff]
        %v685 = vld [vmem:[#allocation6 + $0xd0] sm:$0xff]
        %v686 = vld [vmem:[#allocation6 + $0xd8] sm:$0xff]
        %v687 = vld [vmem:[#allocation6 + $0xe0] sm:$0xff]
        %v688 = vld [vmem:[#allocation6 + $0xe8] sm:$0xff]
        %v689 = vld [vmem:[#allocation6 + $0xf0] sm:$0xff]
        %v690 = vld [vmem:[#allocation6 + $0xf8] sm:$0xff]
        %v691 = vld [vmem:[%s2] sm:$0x3]
        %v693 = vlaneseq
        %v694 = vshrl.u32 %v693, 7
        %v695 = vsub.s32 0, %v694
        %v696 = vrot.slane %v691, %v695
        %v697 = vlaneseq
        %v698 = vshrl.u32 %v697, 7
        %v699 = vsub.s32 1, %v698
        %v700 = vrot.slane %v691, %v699
        %v735 = vunpack.c.l.b16 %v659
        %v736 = vunpack.c.h.b16 %v659
        %v737 = vunpack.c.l.b16 %v660
        %v738 = vunpack.c.h.b16 %v660
        %v739 = vunpack.c.l.b16 %v661
        %v740 = vunpack.c.h.b16 %v661
        %v741 = vunpack.c.l.b16 %v662
        %v742 = vunpack.c.h.b16 %v662
        %v743 = vunpack.c.l.b16 %v663
        %v744 = vunpack.c.h.b16 %v663
        %v745 = vunpack.c.l.b16 %v664
        %v746 = vunpack.c.h.b16 %v664
        %v747 = vunpack.c.l.b16 %v665
        %v748 = vunpack.c.h.b16 %v665
        %v749 = vunpack.c.l.b16 %v666
        %v750 = vunpack.c.h.b16 %v666
        %v751 = vunpack.c.l.b16 %v667
        %v752 = vunpack.c.h.b16 %v667
        %v753 = vunpack.c.l.b16 %v668
        %v754 = vunpack.c.h.b16 %v668
        %v755 = vunpack.c.l.b16 %v669
        %v756 = vunpack.c.h.b16 %v669
        %v757 = vunpack.c.l.b16 %v670
        %v758 = vunpack.c.h.b16 %v670
        %v759 = vunpack.c.l.b16 %v671
        %v760 = vunpack.c.h.b16 %v671
        %v761 = vunpack.c.l.b16 %v672
        %v762 = vunpack.c.h.b16 %v672
        %v763 = vunpack.c.l.b16 %v673
        %v764 = vunpack.c.h.b16 %v673
        %v765 = vunpack.c.l.b16 %v674
        %v766 = vunpack.c.h.b16 %v674
        %v767 = vunpack.c.l.b16 %v675
        %v768 = vunpack.c.h.b16 %v675
        %v769 = vunpack.c.l.b16 %v676
        %v770 = vunpack.c.h.b16 %v676
        %v771 = vunpack.c.l.b16 %v677
        %v772 = vunpack.c.h.b16 %v677
        %v773 = vunpack.c.l.b16 %v678
        %v774 = vunpack.c.h.b16 %v678
        %v775 = vunpack.c.l.b16 %v679
        %v776 = vunpack.c.h.b16 %v679
        %v777 = vunpack.c.l.b16 %v680
        %v778 = vunpack.c.h.b16 %v680
        %v779 = vunpack.c.l.b16 %v681
        %v780 = vunpack.c.h.b16 %v681
        %v781 = vunpack.c.l.b16 %v682
        %v782 = vunpack.c.h.b16 %v682
        %v783 = vunpack.c.l.b16 %v683
        %v784 = vunpack.c.h.b16 %v683
        %v785 = vunpack.c.l.b16 %v684
        %v786 = vunpack.c.h.b16 %v684
        %v787 = vunpack.c.l.b16 %v685
        %v788 = vunpack.c.h.b16 %v685
        %v789 = vunpack.c.l.b16 %v686
        %v790 = vunpack.c.h.b16 %v686
        %v791 = vunpack.c.l.b16 %v687
        %v792 = vunpack.c.h.b16 %v687
        %v793 = vunpack.c.l.b16 %v688
        %v794 = vunpack.c.h.b16 %v688
        %v795 = vunpack.c.l.b16 %v689
        %v796 = vunpack.c.h.b16 %v689
        %v797 = vunpack.c.l.b16 %v690
        %v798 = vunpack.c.h.b16 %v690
        %v799 = vpack.c.b16 %v737, %v735
        %v800 = vpack.c.b16 %v738, %v736
        %v801 = vpack.c.b16 %v741, %v739
        %v802 = vpack.c.b16 %v742, %v740
        %v803 = vpack.c.b16 %v745, %v743
        %v804 = vpack.c.b16 %v746, %v744
        %v805 = vpack.c.b16 %v749, %v747
        %v806 = vpack.c.b16 %v750, %v748
        %v807 = vpack.c.b16 %v753, %v751
        %v808 = vpack.c.b16 %v754, %v752
        %v809 = vpack.c.b16 %v757, %v755
        %v810 = vpack.c.b16 %v758, %v756
        %v811 = vpack.c.b16 %v761, %v759
        %v812 = vpack.c.b16 %v762, %v760
        %v813 = vpack.c.b16 %v765, %v763
        %v814 = vpack.c.b16 %v766, %v764
        %v815 = vpack.c.b16 %v769, %v767
        %v816 = vpack.c.b16 %v770, %v768
        %v817 = vpack.c.b16 %v773, %v771
        %v818 = vpack.c.b16 %v774, %v772
        %v819 = vpack.c.b16 %v777, %v775
        %v820 = vpack.c.b16 %v778, %v776
        %v821 = vpack.c.b16 %v781, %v779
        %v822 = vpack.c.b16 %v782, %v780
        %v823 = vpack.c.b16 %v785, %v783
        %v824 = vpack.c.b16 %v786, %v784
        %v825 = vpack.c.b16 %v789, %v787
        %v826 = vpack.c.b16 %v790, %v788
        %v827 = vpack.c.b16 %v793, %v791
        %v828 = vpack.c.b16 %v794, %v792
        %v829 = vpack.c.b16 %v797, %v795
        %v830 = vpack.c.b16 %v798, %v796
        %863 = vmatprep.subr.bf16.mxu0 %v800
        %864 = vmatpush1.bf16.msra.mxu0 %v799
        %865 = vmatprep.subr.bf16.mxu0 %v802
        %866 = vmatpush1.bf16.msra.mxu0 %v801
        %867 = vmatprep.subr.bf16.mxu0 %v804
        %868 = vmatpush1.bf16.msra.mxu0 %v803
        %869 = vmatprep.subr.bf16.mxu0 %v806
        %870 = vmatpush1.bf16.msra.mxu0 %v805
        %871 = vmatprep.subr.bf16.mxu0 %v808
        %872 = vmatpush1.bf16.msra.mxu0 %v807
        %873 = vmatprep.subr.bf16.mxu0 %v810
        %874 = vmatpush1.bf16.msra.mxu0 %v809
        %875 = vmatprep.subr.bf16.mxu0 %v812
        %876 = vmatpush1.bf16.msra.mxu0 %v811
        %877 = vmatprep.subr.bf16.mxu0 %v814
        %878 = vmatpush1.bf16.msra.mxu0 %v813
        %879 = vmatprep.subr.bf16.mxu0 %v816
        %880 = vmatpush1.bf16.msra.mxu0 %v815
        %881 = vmatprep.subr.bf16.mxu0 %v818
        %882 = vmatpush1.bf16.msra.mxu0 %v817
        %883 = vmatprep.subr.bf16.mxu0 %v820
        %884 = vmatpush1.bf16.msra.mxu0 %v819
        %885 = vmatprep.subr.bf16.mxu0 %v822
        %886 = vmatpush1.bf16.msra.mxu0 %v821
        %887 = vmatprep.subr.bf16.mxu0 %v824
        %888 = vmatpush1.bf16.msra.mxu0 %v823
        %889 = vmatprep.subr.bf16.mxu0 %v826
        %890 = vmatpush1.bf16.msra.mxu0 %v825
        %891 = vmatprep.subr.bf16.mxu0 %v828
        %892 = vmatpush1.bf16.msra.mxu0 %v827
        %893 = vmatprep.subr.bf16.mxu0 %v830
        %894 = vmatpush1.bf16.msra.mxu0 %v829
        %895 = vmatprep.mubr.bf16.mxu0 %v628
        %896 = vmatmul.mubr.bf16.gmra.mrb[0].mxu0 %v627
        %v897 = vpop.f32.mrb[0].mxu0
        %v898 = vadd.f32 %v696, %v897
        %v899 = vpop.f32.mrb[0].mxu0
        %v900 = vadd.f32 %v700, %v899
        %v901 = vpop.f32.mrb[0].mxu0
        %v902 = vadd.f32 %v696, %v901
        %v903 = vpop.f32.mrb[0].mxu0
        %v904 = vadd.f32 %v700, %v903
        %905 = vmatprep.mubr.bf16.mxu0 %v630
        %906 = vmatmul.mubr.bf16.gmra.mrb[0].mxu0 %v629
        %v907 = vpop.f32.mrb[0].mxu0
        %v908 = vadd.f32 %v696, %v907
        %v909 = vpop.f32.mrb[0].mxu0
        %v910 = vadd.f32 %v700, %v909
        %v911 = vpop.f32.mrb[0].mxu0
        %v912 = vadd.f32 %v696, %v911
        %v913 = vpop.f32.mrb[0].mxu0
        %v914 = vadd.f32 %v700, %v913
        %915 = vmatprep.mubr.bf16.mxu0 %v632
        %916 = vmatmul.mubr.bf16.gmra.mrb[0].mxu0 %v631
        %v917 = vpop.f32.mrb[0].mxu0
        %v918 = vadd.f32 %v696, %v917
        %v919 = vpop.f32.mrb[0].mxu0
        %v920 = vadd.f32 %v700, %v919
        %v921 = vpop.f32.mrb[0].mxu0
        %v922 = vadd.f32 %v696, %v921
        %v923 = vpop.f32.mrb[0].mxu0
        %v924 = vadd.f32 %v700, %v923
        %925 = vmatprep.mubr.bf16.mxu0 %v634
        %926 = vmatmul.mubr.bf16.gmra.mrb[0].mxu0 %v633
        %v927 = vpop.f32.mrb[0].mxu0
        %v928 = vadd.f32 %v696, %v927
        %v929 = vpop.f32.mrb[0].mxu0
        %v930 = vadd.f32 %v700, %v929
        %v931 = vpop.f32.mrb[0].mxu0
        %v932 = vadd.f32 %v696, %v931
        %v933 = vpop.f32.mrb[0].mxu0
        %v934 = vadd.f32 %v700, %v933
        %935 = vmatprep.mubr.bf16.mxu0 %v636
        %936 = vmatmul.mubr.bf16.gmra.mrb[0].mxu0 %v635
        %v937 = vpop.f32.mrb[0].mxu0
        %v938 = vadd.f32 %v696, %v937
        %v939 = vpop.f32.mrb[0].mxu0
        %v940 = vadd.f32 %v700, %v939
        %v941 = vpop.f32.mrb[0].mxu0
        %v942 = vadd.f32 %v696, %v941
        %v943 = vpop.f32.mrb[0].mxu0
        %v944 = vadd.f32 %v700, %v943
        %945 = vmatprep.mubr.bf16.mxu0 %v638
        %946 = vmatmul.mubr.bf16.gmra.mrb[0].mxu0 %v637
        %v947 = vpop.f32.mrb[0].mxu0
        %v948 = vadd.f32 %v696, %v947
        %v949 = vpop.f32.mrb[0].mxu0
        %v950 = vadd.f32 %v700, %v949
        %v951 = vpop.f32.mrb[0].mxu0
        %v952 = vadd.f32 %v696, %v951
        %v953 = vpop.f32.mrb[0].mxu0
        %v954 = vadd.f32 %v700, %v953
        %955 = vmatprep.mubr.bf16.mxu0 %v640
        %956 = vmatmul.mubr.bf16.gmra.mrb[0].mxu0 %v639
        %v957 = vpop.f32.mrb[0].mxu0
        %v958 = vadd.f32 %v696, %v957
        %v959 = vpop.f32.mrb[0].mxu0
        %v960 = vadd.f32 %v700, %v959
        %v961 = vpop.f32.mrb[0].mxu0
        %v962 = vadd.f32 %v696, %v961
        %v963 = vpop.f32.mrb[0].mxu0
        %v964 = vadd.f32 %v700, %v963
        %965 = vmatprep.mubr.bf16.mxu0 %v642
        %966 = vmatmul.mubr.bf16.gmra.mrb[0].mxu0 %v641
        %v967 = vpop.f32.mrb[0].mxu0
        %v968 = vadd.f32 %v696, %v967
        %v969 = vpop.f32.mrb[0].mxu0
        %v970 = vadd.f32 %v700, %v969
        %v971 = vpop.f32.mrb[0].mxu0
        %v972 = vadd.f32 %v696, %v971
        %v973 = vpop.f32.mrb[0].mxu0
        %v974 = vadd.f32 %v700, %v973
        %975 = vmatprep.mubr.bf16.mxu0 %v644
        %976 = vmatmul.mubr.bf16.gmra.mrb[0].mxu0 %v643
        %v977 = vpop.f32.mrb[0].mxu0
        %v978 = vadd.f32 %v696, %v977
        %v979 = vpop.f32.mrb[0].mxu0
        %v980 = vadd.f32 %v700, %v979
        %v981 = vpop.f32.mrb[0].mxu0
        %v982 = vadd.f32 %v696, %v981
        %v983 = vpop.f32.mrb[0].mxu0
        %v984 = vadd.f32 %v700, %v983
        %985 = vmatprep.mubr.bf16.mxu0 %v646
        %986 = vmatmul.mubr.bf16.gmra.mrb[0].mxu0 %v645
        %v987 = vpop.f32.mrb[0].mxu0
        %v988 = vadd.f32 %v696, %v987
        %v989 = vpop.f32.mrb[0].mxu0
        %v990 = vadd.f32 %v700, %v989
        %v991 = vpop.f32.mrb[0].mxu0
        %v992 = vadd.f32 %v696, %v991
        %v993 = vpop.f32.mrb[0].mxu0
        %v994 = vadd.f32 %v700, %v993
        %995 = vmatprep.mubr.bf16.mxu0 %v648
        %996 = vmatmul.mubr.bf16.gmra.mrb[0].mxu0 %v647
        %v997 = vpop.f32.mrb[0].mxu0
        %v998 = vadd.f32 %v696, %v997
        %v999 = vpop.f32.mrb[0].mxu0
        %v1000 = vadd.f32 %v700, %v999
        %v1001 = vpop.f32.mrb[0].mxu0
        %v1002 = vadd.f32 %v696, %v1001
        %v1003 = vpop.f32.mrb[0].mxu0
        %v1004 = vadd.f32 %v700, %v1003
        %1005 = vmatprep.mubr.bf16.mxu0 %v650
        %1006 = vmatmul.mubr.bf16.gmra.mrb[0].mxu0 %v649
        %v1007 = vpop.f32.mrb[0].mxu0
        %v1008 = vadd.f32 %v696, %v1007
        %v1009 = vpop.f32.mrb[0].mxu0
        %v1010 = vadd.f32 %v700, %v1009
        %v1011 = vpop.f32.mrb[0].mxu0
        %v1012 = vadd.f32 %v696, %v1011
        %v1013 = vpop.f32.mrb[0].mxu0
        %v1014 = vadd.f32 %v700, %v1013
        %1015 = vmatprep.mubr.bf16.mxu0 %v652
        %1016 = vmatmul.mubr.bf16.gmra.mrb[0].mxu0 %v651
        %v1017 = vpop.f32.mrb[0].mxu0
        %v1018 = vadd.f32 %v696, %v1017
        %v1019 = vpop.f32.mrb[0].mxu0
        %v1020 = vadd.f32 %v700, %v1019
        %v1021 = vpop.f32.mrb[0].mxu0
        %v1022 = vadd.f32 %v696, %v1021
        %v1023 = vpop.f32.mrb[0].mxu0
        %v1024 = vadd.f32 %v700, %v1023
        %1025 = vmatprep.mubr.bf16.mxu0 %v654
        %1026 = vmatmul.mubr.bf16.gmra.mrb[0].mxu0 %v653
        %v1027 = vpop.f32.mrb[0].mxu0
        %v1028 = vadd.f32 %v696, %v1027
        %v1029 = vpop.f32.mrb[0].mxu0
        %v1030 = vadd.f32 %v700, %v1029
        %v1031 = vpop.f32.mrb[0].mxu0
        %v1032 = vadd.f32 %v696, %v1031
        %v1033 = vpop.f32.mrb[0].mxu0
        %v1034 = vadd.f32 %v700, %v1033
        %1035 = vmatprep.mubr.bf16.mxu0 %v656
        %1036 = vmatmul.mubr.bf16.gmra.mrb[0].mxu0 %v655
        %v1037 = vpop.f32.mrb[0].mxu0
        %v1038 = vadd.f32 %v696, %v1037
        %v1039 = vpop.f32.mrb[0].mxu0
        %v1040 = vadd.f32 %v700, %v1039
        %v1041 = vpop.f32.mrb[0].mxu0
        %v1042 = vadd.f32 %v696, %v1041
        %v1043 = vpop.f32.mrb[0].mxu0
        %v1044 = vadd.f32 %v700, %v1043
        %1045 = vmatprep.mubr.bf16.mxu0 %v658
        %1046 = vmatmul.mubr.bf16.gmra.mrb[0].mxu0 %v657
        %v1047 = vpop.f32.mrb[0].mxu0
        %v1048 = vadd.f32 %v696, %v1047
        %v1049 = vpop.f32.mrb[0].mxu0
        %v1050 = vadd.f32 %v700, %v1049
        %v1051 = vpop.f32.mrb[0].mxu0
        %v1052 = vadd.f32 %v696, %v1051
        %v1053 = vpop.f32.mrb[0].mxu0
        %v1054 = vadd.f32 %v700, %v1053
        %1055 = vdwg.mxu0
        %v1056 = vmax.f32 %v898, 0.0
        %v1057 = vmax.f32 %v900, 0.0
        %v1058 = vmax.f32 %v902, 0.0
        %v1059 = vmax.f32 %v904, 0.0
        %v1060 = vmax.f32 %v908, 0.0
        %v1061 = vmax.f32 %v910, 0.0
        %v1062 = vmax.f32 %v912, 0.0
        %v1063 = vmax.f32 %v914, 0.0
        %v1064 = vmax.f32 %v918, 0.0
        %v1065 = vmax.f32 %v920, 0.0
        %v1066 = vmax.f32 %v922, 0.0
        %v1067 = vmax.f32 %v924, 0.0
        %v1068 = vmax.f32 %v928, 0.0
        %v1069 = vmax.f32 %v930, 0.0
        %v1070 = vmax.f32 %v932, 0.0
        %v1071 = vmax.f32 %v934, 0.0
        %v1072 = vmax.f32 %v938, 0.0
        %v1073 = vmax.f32 %v940, 0.0
        %v1074 = vmax.f32 %v942, 0.0
        %v1075 = vmax.f32 %v944, 0.0
        %v1076 = vmax.f32 %v948, 0.0
        %v1077 = vmax.f32 %v950, 0.0
        %v1078 = vmax.f32 %v952, 0.0
        %v1079 = vmax.f32 %v954, 0.0
        %v1080 = vmax.f32 %v958, 0.0
        %v1081 = vmax.f32 %v960, 0.0
        %v1082 = vmax.f32 %v962, 0.0
        %v1083 = vmax.f32 %v964, 0.0
        %v1084 = vmax.f32 %v968, 0.0
        %v1085 = vmax.f32 %v970, 0.0
        %v1086 = vmax.f32 %v972, 0.0
        %v1087 = vmax.f32 %v974, 0.0
        %v1088 = vmax.f32 %v978, 0.0
        %v1089 = vmax.f32 %v980, 0.0
        %v1090 = vmax.f32 %v982, 0.0
        %v1091 = vmax.f32 %v984, 0.0
        %v1092 = vmax.f32 %v988, 0.0
        %v1093 = vmax.f32 %v990, 0.0
        %v1094 = vmax.f32 %v992, 0.0
        %v1095 = vmax.f32 %v994, 0.0
        %v1096 = vmax.f32 %v998, 0.0
        %v1097 = vmax.f32 %v1000, 0.0
        %v1098 = vmax.f32 %v1002, 0.0
        %v1099 = vmax.f32 %v1004, 0.0
        %v1100 = vmax.f32 %v1008, 0.0
        %v1101 = vmax.f32 %v1010, 0.0
        %v1102 = vmax.f32 %v1012, 0.0
        %v1103 = vmax.f32 %v1014, 0.0
        %v1104 = vmax.f32 %v1018, 0.0
        %v1105 = vmax.f32 %v1020, 0.0
        %v1106 = vmax.f32 %v1022, 0.0
        %v1107 = vmax.f32 %v1024, 0.0
        %v1108 = vmax.f32 %v1028, 0.0
        %v1109 = vmax.f32 %v1030, 0.0
        %v1110 = vmax.f32 %v1032, 0.0
        %v1111 = vmax.f32 %v1034, 0.0
        %v1112 = vmax.f32 %v1038, 0.0
        %v1113 = vmax.f32 %v1040, 0.0
        %v1114 = vmax.f32 %v1042, 0.0
        %v1115 = vmax.f32 %v1044, 0.0
        %v1116 = vmax.f32 %v1048, 0.0
        %v1117 = vmax.f32 %v1050, 0.0
        %v1118 = vmax.f32 %v1052, 0.0
        %v1119 = vmax.f32 %v1054, 0.0
        %v1120 = vpack.c.bf16 %v1058, %v1056
        %v1121 = vpack.c.bf16 %v1059, %v1057
        %v1122 = vpack.c.bf16 %v1062, %v1060
        %v1123 = vpack.c.bf16 %v1063, %v1061
        %v1124 = vpack.c.bf16 %v1066, %v1064
        %v1125 = vpack.c.bf16 %v1067, %v1065
        %v1126 = vpack.c.bf16 %v1070, %v1068
        %v1127 = vpack.c.bf16 %v1071, %v1069
        %v1128 = vpack.c.bf16 %v1074, %v1072
        %v1129 = vpack.c.bf16 %v1075, %v1073
        %v1130 = vpack.c.bf16 %v1078, %v1076
        %v1131 = vpack.c.bf16 %v1079, %v1077
        %v1132 = vpack.c.bf16 %v1082, %v1080
        %v1133 = vpack.c.bf16 %v1083, %v1081
        %v1134 = vpack.c.bf16 %v1086, %v1084
        %v1135 = vpack.c.bf16 %v1087, %v1085
        %v1136 = vpack.c.bf16 %v1090, %v1088
        %v1137 = vpack.c.bf16 %v1091, %v1089
        %v1138 = vpack.c.bf16 %v1094, %v1092
        %v1139 = vpack.c.bf16 %v1095, %v1093
        %v1140 = vpack.c.bf16 %v1098, %v1096
        %v1141 = vpack.c.bf16 %v1099, %v1097
        %v1142 = vpack.c.bf16 %v1102, %v1100
        %v1143 = vpack.c.bf16 %v1103, %v1101
        %v1144 = vpack.c.bf16 %v1106, %v1104
        %v1145 = vpack.c.bf16 %v1107, %v1105
        %v1146 = vpack.c.bf16 %v1110, %v1108
        %v1147 = vpack.c.bf16 %v1111, %v1109
        %v1148 = vpack.c.bf16 %v1114, %v1112
        %v1149 = vpack.c.bf16 %v1115, %v1113
        %v1150 = vpack.c.bf16 %v1118, %v1116
        %v1151 = vpack.c.bf16 %v1119, %v1117
        %v1152 = vld [vmem:[#allocation8] sm:$0xff]
        %v1153 = vld [vmem:[#allocation8 + $0x8] sm:$0xff]
        %v1154 = vld [vmem:[#allocation8 + $0x10] sm:$0xff]
        %v1155 = vld [vmem:[#allocation8 + $0x18] sm:$0xff]
        %v1156 = vld [vmem:[#allocation8 + $0x20] sm:$0xff]
        %v1157 = vld [vmem:[#allocation8 + $0x28] sm:$0xff]
        %v1158 = vld [vmem:[#allocation8 + $0x30] sm:$0xff]
        %v1159 = vld [vmem:[#allocation8 + $0x38] sm:$0xff]
        %v1160 = vld [vmem:[#allocation8 + $0x40] sm:$0xff]
        %v1161 = vld [vmem:[#allocation8 + $0x48] sm:$0xff]
        %v1162 = vld [vmem:[#allocation8 + $0x50] sm:$0xff]
        %v1163 = vld [vmem:[#allocation8 + $0x58] sm:$0xff]
        %v1164 = vld [vmem:[#allocation8 + $0x60] sm:$0xff]
        %v1165 = vld [vmem:[#allocation8 + $0x68] sm:$0xff]
        %v1166 = vld [vmem:[#allocation8 + $0x70] sm:$0xff]
        %v1167 = vld [vmem:[#allocation8 + $0x78] sm:$0xff]
        %v1168 = vld [vmem:[#allocation8 + $0x80] sm:$0xff]
        %v1169 = vld [vmem:[#allocation8 + $0x88] sm:$0xff]
        %v1170 = vld [vmem:[#allocation8 + $0x90] sm:$0xff]
        %v1171 = vld [vmem:[#allocation8 + $0x98] sm:$0xff]
        %v1172 = vld [vmem:[#allocation8 + $0xa0] sm:$0xff]
        %v1173 = vld [vmem:[#allocation8 + $0xa8] sm:$0xff]
        %v1174 = vld [vmem:[#allocation8 + $0xb0] sm:$0xff]
        %v1175 = vld [vmem:[#allocation8 + $0xb8] sm:$0xff]
        %v1176 = vld [vmem:[#allocation8 + $0xc0] sm:$0xff]
        %v1177 = vld [vmem:[#allocation8 + $0xc8] sm:$0xff]
        %v1178 = vld [vmem:[#allocation8 + $0xd0] sm:$0xff]
        %v1179 = vld [vmem:[#allocation8 + $0xd8] sm:$0xff]
        %v1180 = vld [vmem:[#allocation8 + $0xe0] sm:$0xff]
        %v1181 = vld [vmem:[#allocation8 + $0xe8] sm:$0xff]
        %v1182 = vld [vmem:[#allocation8 + $0xf0] sm:$0xff]
        %v1183 = vld [vmem:[#allocation8 + $0xf8] sm:$0xff]
        %v1184 = vld [vmem:[%s4] sm:$0x3]
        %v1186 = vlaneseq
        %v1187 = vshrl.u32 %v1186, 7
        %v1188 = vsub.s32 0, %v1187
        %v1189 = vrot.slane %v1184, %v1188
        %v1190 = vlaneseq
        %v1191 = vshrl.u32 %v1190, 7
        %v1192 = vsub.s32 1, %v1191
        %v1193 = vrot.slane %v1184, %v1192
        %v1228 = vunpack.c.l.b16 %v1152
        %v1229 = vunpack.c.h.b16 %v1152
        %v1230 = vunpack.c.l.b16 %v1153
        %v1231 = vunpack.c.h.b16 %v1153
        %v1232 = vunpack.c.l.b16 %v1154
        %v1233 = vunpack.c.h.b16 %v1154
        %v1234 = vunpack.c.l.b16 %v1155
        %v1235 = vunpack.c.h.b16 %v1155
        %v1236 = vunpack.c.l.b16 %v1156
        %v1237 = vunpack.c.h.b16 %v1156
        %v1238 = vunpack.c.l.b16 %v1157
        %v1239 = vunpack.c.h.b16 %v1157
        %v1240 = vunpack.c.l.b16 %v1158
        %v1241 = vunpack.c.h.b16 %v1158
        %v1242 = vunpack.c.l.b16 %v1159
        %v1243 = vunpack.c.h.b16 %v1159
        %v1244 = vunpack.c.l.b16 %v1160
        %v1245 = vunpack.c.h.b16 %v1160
        %v1246 = vunpack.c.l.b16 %v1161
        %v1247 = vunpack.c.h.b16 %v1161
        %v1248 = vunpack.c.l.b16 %v1162
        %v1249 = vunpack.c.h.b16 %v1162
        %v1250 = vunpack.c.l.b16 %v1163
        %v1251 = vunpack.c.h.b16 %v1163
        %v1252 = vunpack.c.l.b16 %v1164
        %v1253 = vunpack.c.h.b16 %v1164
        %v1254 = vunpack.c.l.b16 %v1165
        %v1255 = vunpack.c.h.b16 %v1165
        %v1256 = vunpack.c.l.b16 %v1166
        %v1257 = vunpack.c.h.b16 %v1166
        %v1258 = vunpack.c.l.b16 %v1167
        %v1259 = vunpack.c.h.b16 %v1167
        %v1260 = vunpack.c.l.b16 %v1168
        %v1261 = vunpack.c.h.b16 %v1168
        %v1262 = vunpack.c.l.b16 %v1169
        %v1263 = vunpack.c.h.b16 %v1169
        %v1264 = vunpack.c.l.b16 %v1170
        %v1265 = vunpack.c.h.b16 %v1170
        %v1266 = vunpack.c.l.b16 %v1171
        %v1267 = vunpack.c.h.b16 %v1171
        %v1268 = vunpack.c.l.b16 %v1172
        %v1269 = vunpack.c.h.b16 %v1172
        %v1270 = vunpack.c.l.b16 %v1173
        %v1271 = vunpack.c.h.b16 %v1173
        %v1272 = vunpack.c.l.b16 %v1174
        %v1273 = vunpack.c.h.b16 %v1174
        %v1274 = vunpack.c.l.b16 %v1175
        %v1275 = vunpack.c.h.b16 %v1175
        %v1276 = vunpack.c.l.b16 %v1176
        %v1277 = vunpack.c.h.b16 %v1176
        %v1278 = vunpack.c.l.b16 %v1177
        %v1279 = vunpack.c.h.b16 %v1177
        %v1280 = vunpack.c.l.b16 %v1178
        %v1281 = vunpack.c.h.b16 %v1178
        %v1282 = vunpack.c.l.b16 %v1179
        %v1283 = vunpack.c.h.b16 %v1179
        %v1284 = vunpack.c.l.b16 %v1180
        %v1285 = vunpack.c.h.b16 %v1180
        %v1286 = vunpack.c.l.b16 %v1181
        %v1287 = vunpack.c.h.b16 %v1181
        %v1288 = vunpack.c.l.b16 %v1182
        %v1289 = vunpack.c.h.b16 %v1182
        %v1290 = vunpack.c.l.b16 %v1183
        %v1291 = vunpack.c.h.b16 %v1183
        %v1292 = vpack.c.b16 %v1230, %v1228
        %v1293 = vpack.c.b16 %v1231, %v1229
        %v1294 = vpack.c.b16 %v1234, %v1232
        %v1295 = vpack.c.b16 %v1235, %v1233
        %v1296 = vpack.c.b16 %v1238, %v1236
        %v1297 = vpack.c.b16 %v1239, %v1237
        %v1298 = vpack.c.b16 %v1242, %v1240
        %v1299 = vpack.c.b16 %v1243, %v1241
        %v1300 = vpack.c.b16 %v1246, %v1244
        %v1301 = vpack.c.b16 %v1247, %v1245
        %v1302 = vpack.c.b16 %v1250, %v1248
        %v1303 = vpack.c.b16 %v1251, %v1249
        %v1304 = vpack.c.b16 %v1254, %v1252
        %v1305 = vpack.c.b16 %v1255, %v1253
        %v1306 = vpack.c.b16 %v1258, %v1256
        %v1307 = vpack.c.b16 %v1259, %v1257
        %v1308 = vpack.c.b16 %v1262, %v1260
        %v1309 = vpack.c.b16 %v1263, %v1261
        %v1310 = vpack.c.b16 %v1266, %v1264
        %v1311 = vpack.c.b16 %v1267, %v1265
        %v1312 = vpack.c.b16 %v1270, %v1268
        %v1313 = vpack.c.b16 %v1271, %v1269
        %v1314 = vpack.c.b16 %v1274, %v1272
        %v1315 = vpack.c.b16 %v1275, %v1273
        %v1316 = vpack.c.b16 %v1278, %v1276
        %v1317 = vpack.c.b16 %v1279, %v1277
        %v1318 = vpack.c.b16 %v1282, %v1280
        %v1319 = vpack.c.b16 %v1283, %v1281
        %v1320 = vpack.c.b16 %v1286, %v1284
        %v1321 = vpack.c.b16 %v1287, %v1285
        %v1322 = vpack.c.b16 %v1290, %v1288
        %v1323 = vpack.c.b16 %v1291, %v1289
        %1356 = vmatprep.subr.bf16.mxu0 %v1293
        %1357 = vmatpush1.bf16.msra.mxu0 %v1292
        %1358 = vmatprep.subr.bf16.mxu0 %v1295
        %1359 = vmatpush1.bf16.msra.mxu0 %v1294
        %1360 = vmatprep.subr.bf16.mxu0 %v1297
        %1361 = vmatpush1.bf16.msra.mxu0 %v1296
        %1362 = vmatprep.subr.bf16.mxu0 %v1299
        %1363 = vmatpush1.bf16.msra.mxu0 %v1298
        %1364 = vmatprep.subr.bf16.mxu0 %v1301
        %1365 = vmatpush1.bf16.msra.mxu0 %v1300
        %1366 = vmatprep.subr.bf16.mxu0 %v1303
        %1367 = vmatpush1.bf16.msra.mxu0 %v1302
        %1368 = vmatprep.subr.bf16.mxu0 %v1305
        %1369 = vmatpush1.bf16.msra.mxu0 %v1304
        %1370 = vmatprep.subr.bf16.mxu0 %v1307
        %1371 = vmatpush1.bf16.msra.mxu0 %v1306
        %1372 = vmatprep.subr.bf16.mxu0 %v1309
        %1373 = vmatpush1.bf16.msra.mxu0 %v1308
        %1374 = vmatprep.subr.bf16.mxu0 %v1311
        %1375 = vmatpush1.bf16.msra.mxu0 %v1310
        %1376 = vmatprep.subr.bf16.mxu0 %v1313
        %1377 = vmatpush1.bf16.msra.mxu0 %v1312
        %1378 = vmatprep.subr.bf16.mxu0 %v1315
        %1379 = vmatpush1.bf16.msra.mxu0 %v1314
        %1380 = vmatprep.subr.bf16.mxu0 %v1317
        %1381 = vmatpush1.bf16.msra.mxu0 %v1316
        %1382 = vmatprep.subr.bf16.mxu0 %v1319
        %1383 = vmatpush1.bf16.msra.mxu0 %v1318
        %1384 = vmatprep.subr.bf16.mxu0 %v1321
        %1385 = vmatpush1.bf16.msra.mxu0 %v1320
        %1386 = vmatprep.subr.bf16.mxu0 %v1323
        %1387 = vmatpush1.bf16.msra.mxu0 %v1322
        %1388 = vmatprep.mubr.bf16.mxu0 %v1121
        %1389 = vmatmul.mubr.bf16.gmra.mrb[0].mxu0 %v1120
        %v1390 = vpop.f32.mrb[0].mxu0
        %v1391 = vadd.f32 %v1189, %v1390
        %v1392 = vpop.f32.mrb[0].mxu0
        %v1393 = vadd.f32 %v1193, %v1392
        %v1394 = vpop.f32.mrb[0].mxu0
        %v1395 = vadd.f32 %v1189, %v1394
        %v1396 = vpop.f32.mrb[0].mxu0
        %v1397 = vadd.f32 %v1193, %v1396
        %1398 = vmatprep.mubr.bf16.mxu0 %v1123
        %1399 = vmatmul.mubr.bf16.gmra.mrb[0].mxu0 %v1122
        %v1400 = vpop.f32.mrb[0].mxu0
        %v1401 = vadd.f32 %v1189, %v1400
        %v1402 = vpop.f32.mrb[0].mxu0
        %v1403 = vadd.f32 %v1193, %v1402
        %v1404 = vpop.f32.mrb[0].mxu0
        %v1405 = vadd.f32 %v1189, %v1404
        %v1406 = vpop.f32.mrb[0].mxu0
        %v1407 = vadd.f32 %v1193, %v1406
        %1408 = vmatprep.mubr.bf16.mxu0 %v1125
        %1409 = vmatmul.mubr.bf16.gmra.mrb[0].mxu0 %v1124
        %v1410 = vpop.f32.mrb[0].mxu0
        %v1411 = vadd.f32 %v1189, %v1410
        %v1412 = vpop.f32.mrb[0].mxu0
        %v1413 = vadd.f32 %v1193, %v1412
        %v1414 = vpop.f32.mrb[0].mxu0
        %v1415 = vadd.f32 %v1189, %v1414
        %v1416 = vpop.f32.mrb[0].mxu0
        %v1417 = vadd.f32 %v1193, %v1416
        %1418 = vmatprep.mubr.bf16.mxu0 %v1127
        %1419 = vmatmul.mubr.bf16.gmra.mrb[0].mxu0 %v1126
        %v1420 = vpop.f32.mrb[0].mxu0
        %v1421 = vadd.f32 %v1189, %v1420
        %v1422 = vpop.f32.mrb[0].mxu0
        %v1423 = vadd.f32 %v1193, %v1422
        %v1424 = vpop.f32.mrb[0].mxu0
        %v1425 = vadd.f32 %v1189, %v1424
        %v1426 = vpop.f32.mrb[0].mxu0
        %v1427 = vadd.f32 %v1193, %v1426
        %1428 = vmatprep.mubr.bf16.mxu0 %v1129
        %1429 = vmatmul.mubr.bf16.gmra.mrb[0].mxu0 %v1128
        %v1430 = vpop.f32.mrb[0].mxu0
        %v1431 = vadd.f32 %v1189, %v1430
        %v1432 = vpop.f32.mrb[0].mxu0
        %v1433 = vadd.f32 %v1193, %v1432
        %v1434 = vpop.f32.mrb[0].mxu0
        %v1435 = vadd.f32 %v1189, %v1434
        %v1436 = vpop.f32.mrb[0].mxu0
        %v1437 = vadd.f32 %v1193, %v1436
        %1438 = vmatprep.mubr.bf16.mxu0 %v1131
        %1439 = vmatmul.mubr.bf16.gmra.mrb[0].mxu0 %v1130
        %v1440 = vpop.f32.mrb[0].mxu0
        %v1441 = vadd.f32 %v1189, %v1440
        %v1442 = vpop.f32.mrb[0].mxu0
        %v1443 = vadd.f32 %v1193, %v1442
        %v1444 = vpop.f32.mrb[0].mxu0
        %v1445 = vadd.f32 %v1189, %v1444
        %v1446 = vpop.f32.mrb[0].mxu0
        %v1447 = vadd.f32 %v1193, %v1446
        %1448 = vmatprep.mubr.bf16.mxu0 %v1133
        %1449 = vmatmul.mubr.bf16.gmra.mrb[0].mxu0 %v1132
        %v1450 = vpop.f32.mrb[0].mxu0
        %v1451 = vadd.f32 %v1189, %v1450
        %v1452 = vpop.f32.mrb[0].mxu0
        %v1453 = vadd.f32 %v1193, %v1452
        %v1454 = vpop.f32.mrb[0].mxu0
        %v1455 = vadd.f32 %v1189, %v1454
        %v1456 = vpop.f32.mrb[0].mxu0
        %v1457 = vadd.f32 %v1193, %v1456
        %1458 = vmatprep.mubr.bf16.mxu0 %v1135
        %1459 = vmatmul.mubr.bf16.gmra.mrb[0].mxu0 %v1134
        %v1460 = vpop.f32.mrb[0].mxu0
        %v1461 = vadd.f32 %v1189, %v1460
        %v1462 = vpop.f32.mrb[0].mxu0
        %v1463 = vadd.f32 %v1193, %v1462
        %v1464 = vpop.f32.mrb[0].mxu0
        %v1465 = vadd.f32 %v1189, %v1464
        %v1466 = vpop.f32.mrb[0].mxu0
        %v1467 = vadd.f32 %v1193, %v1466
        %1468 = vmatprep.mubr.bf16.mxu0 %v1137
        %1469 = vmatmul.mubr.bf16.gmra.mrb[0].mxu0 %v1136
        %v1470 = vpop.f32.mrb[0].mxu0
        %v1471 = vadd.f32 %v1189, %v1470
        %v1472 = vpop.f32.mrb[0].mxu0
        %v1473 = vadd.f32 %v1193, %v1472
        %v1474 = vpop.f32.mrb[0].mxu0
        %v1475 = vadd.f32 %v1189, %v1474
        %v1476 = vpop.f32.mrb[0].mxu0
        %v1477 = vadd.f32 %v1193, %v1476
        %1478 = vmatprep.mubr.bf16.mxu0 %v1139
        %1479 = vmatmul.mubr.bf16.gmra.mrb[0].mxu0 %v1138
        %v1480 = vpop.f32.mrb[0].mxu0
        %v1481 = vadd.f32 %v1189, %v1480
        %v1482 = vpop.f32.mrb[0].mxu0
        %v1483 = vadd.f32 %v1193, %v1482
        %v1484 = vpop.f32.mrb[0].mxu0
        %v1485 = vadd.f32 %v1189, %v1484
        %v1486 = vpop.f32.mrb[0].mxu0
        %v1487 = vadd.f32 %v1193, %v1486
        %1488 = vmatprep.mubr.bf16.mxu0 %v1141
        %1489 = vmatmul.mubr.bf16.gmra.mrb[0].mxu0 %v1140
        %v1490 = vpop.f32.mrb[0].mxu0
        %v1491 = vadd.f32 %v1189, %v1490
        %v1492 = vpop.f32.mrb[0].mxu0
        %v1493 = vadd.f32 %v1193, %v1492
        %v1494 = vpop.f32.mrb[0].mxu0
        %v1495 = vadd.f32 %v1189, %v1494
        %v1496 = vpop.f32.mrb[0].mxu0
        %v1497 = vadd.f32 %v1193, %v1496
        %1498 = vmatprep.mubr.bf16.mxu0 %v1143
        %1499 = vmatmul.mubr.bf16.gmra.mrb[0].mxu0 %v1142
        %v1500 = vpop.f32.mrb[0].mxu0
        %v1501 = vadd.f32 %v1189, %v1500
        %v1502 = vpop.f32.mrb[0].mxu0
        %v1503 = vadd.f32 %v1193, %v1502
        %v1504 = vpop.f32.mrb[0].mxu0
        %v1505 = vadd.f32 %v1189, %v1504
        %v1506 = vpop.f32.mrb[0].mxu0
        %v1507 = vadd.f32 %v1193, %v1506
        %1508 = vmatprep.mubr.bf16.mxu0 %v1145
        %1509 = vmatmul.mubr.bf16.gmra.mrb[0].mxu0 %v1144
        %v1510 = vpop.f32.mrb[0].mxu0
        %v1511 = vadd.f32 %v1189, %v1510
        %v1512 = vpop.f32.mrb[0].mxu0
        %v1513 = vadd.f32 %v1193, %v1512
        %v1514 = vpop.f32.mrb[0].mxu0
        %v1515 = vadd.f32 %v1189, %v1514
        %v1516 = vpop.f32.mrb[0].mxu0
        %v1517 = vadd.f32 %v1193, %v1516
        %1518 = vmatprep.mubr.bf16.mxu0 %v1147
        %1519 = vmatmul.mubr.bf16.gmra.mrb[0].mxu0 %v1146
        %v1520 = vpop.f32.mrb[0].mxu0
        %v1521 = vadd.f32 %v1189, %v1520
        %v1522 = vpop.f32.mrb[0].mxu0
        %v1523 = vadd.f32 %v1193, %v1522
        %v1524 = vpop.f32.mrb[0].mxu0
        %v1525 = vadd.f32 %v1189, %v1524
        %v1526 = vpop.f32.mrb[0].mxu0
        %v1527 = vadd.f32 %v1193, %v1526
        %1528 = vmatprep.mubr.bf16.mxu0 %v1149
        %1529 = vmatmul.mubr.bf16.gmra.mrb[0].mxu0 %v1148
        %v1530 = vpop.f32.mrb[0].mxu0
        %v1531 = vadd.f32 %v1189, %v1530
        %v1532 = vpop.f32.mrb[0].mxu0
        %v1533 = vadd.f32 %v1193, %v1532
        %v1534 = vpop.f32.mrb[0].mxu0
        %v1535 = vadd.f32 %v1189, %v1534
        %v1536 = vpop.f32.mrb[0].mxu0
        %v1537 = vadd.f32 %v1193, %v1536
        %1538 = vmatprep.mubr.bf16.mxu0 %v1151
        %1539 = vmatmul.mubr.bf16.gmra.mrb[0].mxu0 %v1150
        %v1540 = vpop.f32.mrb[0].mxu0
        %v1541 = vadd.f32 %v1189, %v1540
        %v1542 = vpop.f32.mrb[0].mxu0
        %v1543 = vadd.f32 %v1193, %v1542
        %v1544 = vpop.f32.mrb[0].mxu0
        %v1545 = vadd.f32 %v1189, %v1544
        %v1546 = vpop.f32.mrb[0].mxu0
        %v1547 = vadd.f32 %v1193, %v1546
        %1548 = vdwg.mxu0
        %v1549 = vmax.f32 %v1391, 0.0
        %v1550 = vmax.f32 %v1393, 0.0
        %v1551 = vmax.f32 %v1395, 0.0
        %v1552 = vmax.f32 %v1397, 0.0
        %v1553 = vmax.f32 %v1401, 0.0
        %v1554 = vmax.f32 %v1403, 0.0
        %v1555 = vmax.f32 %v1405, 0.0
        %v1556 = vmax.f32 %v1407, 0.0
        %v1557 = vmax.f32 %v1411, 0.0
        %v1558 = vmax.f32 %v1413, 0.0
        %v1559 = vmax.f32 %v1415, 0.0
        %v1560 = vmax.f32 %v1417, 0.0
        %v1561 = vmax.f32 %v1421, 0.0
        %v1562 = vmax.f32 %v1423, 0.0
        %v1563 = vmax.f32 %v1425, 0.0
        %v1564 = vmax.f32 %v1427, 0.0
        %v1565 = vmax.f32 %v1431, 0.0
        %v1566 = vmax.f32 %v1433, 0.0
        %v1567 = vmax.f32 %v1435, 0.0
        %v1568 = vmax.f32 %v1437, 0.0
        %v1569 = vmax.f32 %v1441, 0.0
        %v1570 = vmax.f32 %v1443, 0.0
        %v1571 = vmax.f32 %v1445, 0.0
        %v1572 = vmax.f32 %v1447, 0.0
        %v1573 = vmax.f32 %v1451, 0.0
        %v1574 = vmax.f32 %v1453, 0.0
        %v1575 = vmax.f32 %v1455, 0.0
        %v1576 = vmax.f32 %v1457, 0.0
        %v1577 = vmax.f32 %v1461, 0.0
        %v1578 = vmax.f32 %v1463, 0.0
        %v1579 = vmax.f32 %v1465, 0.0
        %v1580 = vmax.f32 %v1467, 0.0
        %v1581 = vmax.f32 %v1471, 0.0
        %v1582 = vmax.f32 %v1473, 0.0
        %v1583 = vmax.f32 %v1475, 0.0
        %v1584 = vmax.f32 %v1477, 0.0
        %v1585 = vmax.f32 %v1481, 0.0
        %v1586 = vmax.f32 %v1483, 0.0
        %v1587 = vmax.f32 %v1485, 0.0
        %v1588 = vmax.f32 %v1487, 0.0
        %v1589 = vmax.f32 %v1491, 0.0
        %v1590 = vmax.f32 %v1493, 0.0
        %v1591 = vmax.f32 %v1495, 0.0
        %v1592 = vmax.f32 %v1497, 0.0
        %v1593 = vmax.f32 %v1501, 0.0
        %v1594 = vmax.f32 %v1503, 0.0
        %v1595 = vmax.f32 %v1505, 0.0
        %v1596 = vmax.f32 %v1507, 0.0
        %v1597 = vmax.f32 %v1511, 0.0
        %v1598 = vmax.f32 %v1513, 0.0
        %v1599 = vmax.f32 %v1515, 0.0
        %v1600 = vmax.f32 %v1517, 0.0
        %v1601 = vmax.f32 %v1521, 0.0
        %v1602 = vmax.f32 %v1523, 0.0
        %v1603 = vmax.f32 %v1525, 0.0
        %v1604 = vmax.f32 %v1527, 0.0
        %v1605 = vmax.f32 %v1531, 0.0
        %v1606 = vmax.f32 %v1533, 0.0
        %v1607 = vmax.f32 %v1535, 0.0
        %v1608 = vmax.f32 %v1537, 0.0
        %v1609 = vmax.f32 %v1541, 0.0
        %v1610 = vmax.f32 %v1543, 0.0
        %v1611 = vmax.f32 %v1545, 0.0
        %v1612 = vmax.f32 %v1547, 0.0
        %v1613 = vpack.c.bf16 %v1551, %v1549
        %v1614 = vpack.c.bf16 %v1552, %v1550
        %v1615 = vpack.c.bf16 %v1555, %v1553
        %v1616 = vpack.c.bf16 %v1556, %v1554
        %v1617 = vpack.c.bf16 %v1559, %v1557
        %v1618 = vpack.c.bf16 %v1560, %v1558
        %v1619 = vpack.c.bf16 %v1563, %v1561
        %v1620 = vpack.c.bf16 %v1564, %v1562
        %v1621 = vpack.c.bf16 %v1567, %v1565
        %v1622 = vpack.c.bf16 %v1568, %v1566
        %v1623 = vpack.c.bf16 %v1571, %v1569
        %v1624 = vpack.c.bf16 %v1572, %v1570
        %v1625 = vpack.c.bf16 %v1575, %v1573
        %v1626 = vpack.c.bf16 %v1576, %v1574
        %v1627 = vpack.c.bf16 %v1579, %v1577
        %v1628 = vpack.c.bf16 %v1580, %v1578
        %v1629 = vpack.c.bf16 %v1583, %v1581
        %v1630 = vpack.c.bf16 %v1584, %v1582
        %v1631 = vpack.c.bf16 %v1587, %v1585
        %v1632 = vpack.c.bf16 %v1588, %v1586
        %v1633 = vpack.c.bf16 %v1591, %v1589
        %v1634 = vpack.c.bf16 %v1592, %v1590
        %v1635 = vpack.c.bf16 %v1595, %v1593
        %v1636 = vpack.c.bf16 %v1596, %v1594
        %v1637 = vpack.c.bf16 %v1599, %v1597
        %v1638 = vpack.c.bf16 %v1600, %v1598
        %v1639 = vpack.c.bf16 %v1603, %v1601
        %v1640 = vpack.c.bf16 %v1604, %v1602
        %v1641 = vpack.c.bf16 %v1607, %v1605
        %v1642 = vpack.c.bf16 %v1608, %v1606
        %v1643 = vpack.c.bf16 %v1611, %v1609
        %v1644 = vpack.c.bf16 %v1612, %v1610
        %v1645 = vld [vmem:[#allocation9] sm:$0xff]
        %v1646 = vld [vmem:[#allocation9 + $0x8] sm:$0xff]
        %v1647 = vld [vmem:[#allocation9 + $0x10] sm:$0xff]
        %v1648 = vld [vmem:[#allocation9 + $0x18] sm:$0xff]
        %v1649 = vld [vmem:[#allocation9 + $0x20] sm:$0xff]
        %v1650 = vld [vmem:[#allocation9 + $0x28] sm:$0xff]
        %v1651 = vld [vmem:[#allocation9 + $0x30] sm:$0xff]
        %v1652 = vld [vmem:[#allocation9 + $0x38] sm:$0xff]
        %v1653 = vld [vmem:[#allocation9 + $0x40] sm:$0xff]
        %v1654 = vld [vmem:[#allocation9 + $0x48] sm:$0xff]
        %v1655 = vld [vmem:[#allocation9 + $0x50] sm:$0xff]
        %v1656 = vld [vmem:[#allocation9 + $0x58] sm:$0xff]
        %v1657 = vld [vmem:[#allocation9 + $0x60] sm:$0xff]
        %v1658 = vld [vmem:[#allocation9 + $0x68] sm:$0xff]
        %v1659 = vld [vmem:[#allocation9 + $0x70] sm:$0xff]
        %v1660 = vld [vmem:[#allocation9 + $0x78] sm:$0xff]
        %v1661 = vld [vmem:[#allocation9 + $0x80] sm:$0xff]
        %v1662 = vld [vmem:[#allocation9 + $0x88] sm:$0xff]
        %v1663 = vld [vmem:[#allocation9 + $0x90] sm:$0xff]
        %v1664 = vld [vmem:[#allocation9 + $0x98] sm:$0xff]
        %v1665 = vld [vmem:[#allocation9 + $0xa0] sm:$0xff]
        %v1666 = vld [vmem:[#allocation9 + $0xa8] sm:$0xff]
        %v1667 = vld [vmem:[#allocation9 + $0xb0] sm:$0xff]
        %v1668 = vld [vmem:[#allocation9 + $0xb8] sm:$0xff]
        %v1669 = vld [vmem:[#allocation9 + $0xc0] sm:$0xff]
        %v1670 = vld [vmem:[#allocation9 + $0xc8] sm:$0xff]
        %v1671 = vld [vmem:[#allocation9 + $0xd0] sm:$0xff]
        %v1672 = vld [vmem:[#allocation9 + $0xd8] sm:$0xff]
        %v1673 = vld [vmem:[#allocation9 + $0xe0] sm:$0xff]
        %v1674 = vld [vmem:[#allocation9 + $0xe8] sm:$0xff]
        %v1675 = vld [vmem:[#allocation9 + $0xf0] sm:$0xff]
        %v1676 = vld [vmem:[#allocation9 + $0xf8] sm:$0xff]
        %v1677 = vld [vmem:[%s6] sm:$0x3]
        %v1679 = vlaneseq
        %v1680 = vshrl.u32 %v1679, 7
        %v1681 = vsub.s32 0, %v1680
        %v1682 = vrot.slane %v1677, %v1681
        %v1683 = vlaneseq
        %v1684 = vshrl.u32 %v1683, 7
        %v1685 = vsub.s32 1, %v1684
        %v1686 = vrot.slane %v1677, %v1685
        %v1721 = vunpack.c.l.b16 %v1645
        %v1722 = vunpack.c.h.b16 %v1645
        %v1723 = vunpack.c.l.b16 %v1646
        %v1724 = vunpack.c.h.b16 %v1646
        %v1725 = vunpack.c.l.b16 %v1647
        %v1726 = vunpack.c.h.b16 %v1647
        %v1727 = vunpack.c.l.b16 %v1648
        %v1728 = vunpack.c.h.b16 %v1648
        %v1729 = vunpack.c.l.b16 %v1649
        %v1730 = vunpack.c.h.b16 %v1649
        %v1731 = vunpack.c.l.b16 %v1650
        %v1732 = vunpack.c.h.b16 %v1650
        %v1733 = vunpack.c.l.b16 %v1651
        %v1734 = vunpack.c.h.b16 %v1651
        %v1735 = vunpack.c.l.b16 %v1652
        %v1736 = vunpack.c.h.b16 %v1652
        %v1737 = vunpack.c.l.b16 %v1653
        %v1738 = vunpack.c.h.b16 %v1653
        %v1739 = vunpack.c.l.b16 %v1654
        %v1740 = vunpack.c.h.b16 %v1654
        %v1741 = vunpack.c.l.b16 %v1655
        %v1742 = vunpack.c.h.b16 %v1655
        %v1743 = vunpack.c.l.b16 %v1656
        %v1744 = vunpack.c.h.b16 %v1656
        %v1745 = vunpack.c.l.b16 %v1657
        %v1746 = vunpack.c.h.b16 %v1657
        %v1747 = vunpack.c.l.b16 %v1658
        %v1748 = vunpack.c.h.b16 %v1658
        %v1749 = vunpack.c.l.b16 %v1659
        %v1750 = vunpack.c.h.b16 %v1659
        %v1751 = vunpack.c.l.b16 %v1660
        %v1752 = vunpack.c.h.b16 %v1660
        %v1753 = vunpack.c.l.b16 %v1661
        %v1754 = vunpack.c.h.b16 %v1661
        %v1755 = vunpack.c.l.b16 %v1662
        %v1756 = vunpack.c.h.b16 %v1662
        %v1757 = vunpack.c.l.b16 %v1663
        %v1758 = vunpack.c.h.b16 %v1663
        %v1759 = vunpack.c.l.b16 %v1664
        %v1760 = vunpack.c.h.b16 %v1664
        %v1761 = vunpack.c.l.b16 %v1665
        %v1762 = vunpack.c.h.b16 %v1665
        %v1763 = vunpack.c.l.b16 %v1666
        %v1764 = vunpack.c.h.b16 %v1666
        %v1765 = vunpack.c.l.b16 %v1667
        %v1766 = vunpack.c.h.b16 %v1667
        %v1767 = vunpack.c.l.b16 %v1668
        %v1768 = vunpack.c.h.b16 %v1668
        %v1769 = vunpack.c.l.b16 %v1669
        %v1770 = vunpack.c.h.b16 %v1669
        %v1771 = vunpack.c.l.b16 %v1670
        %v1772 = vunpack.c.h.b16 %v1670
        %v1773 = vunpack.c.l.b16 %v1671
        %v1774 = vunpack.c.h.b16 %v1671
        %v1775 = vunpack.c.l.b16 %v1672
        %v1776 = vunpack.c.h.b16 %v1672
        %v1777 = vunpack.c.l.b16 %v1673
        %v1778 = vunpack.c.h.b16 %v1673
        %v1779 = vunpack.c.l.b16 %v1674
        %v1780 = vunpack.c.h.b16 %v1674
        %v1781 = vunpack.c.l.b16 %v1675
        %v1782 = vunpack.c.h.b16 %v1675
        %v1783 = vunpack.c.l.b16 %v1676
        %v1784 = vunpack.c.h.b16 %v1676
        %v1785 = vpack.c.b16 %v1723, %v1721
        %v1786 = vpack.c.b16 %v1724, %v1722
        %v1787 = vpack.c.b16 %v1727, %v1725
        %v1788 = vpack.c.b16 %v1728, %v1726
        %v1789 = vpack.c.b16 %v1731, %v1729
        %v1790 = vpack.c.b16 %v1732, %v1730
        %v1791 = vpack.c.b16 %v1735, %v1733
        %v1792 = vpack.c.b16 %v1736, %v1734
        %v1793 = vpack.c.b16 %v1739, %v1737
        %v1794 = vpack.c.b16 %v1740, %v1738
        %v1795 = vpack.c.b16 %v1743, %v1741
        %v1796 = vpack.c.b16 %v1744, %v1742
        %v1797 = vpack.c.b16 %v1747, %v1745
        %v1798 = vpack.c.b16 %v1748, %v1746
        %v1799 = vpack.c.b16 %v1751, %v1749
        %v1800 = vpack.c.b16 %v1752, %v1750
        %v1801 = vpack.c.b16 %v1755, %v1753
        %v1802 = vpack.c.b16 %v1756, %v1754
        %v1803 = vpack.c.b16 %v1759, %v1757
        %v1804 = vpack.c.b16 %v1760, %v1758
        %v1805 = vpack.c.b16 %v1763, %v1761
        %v1806 = vpack.c.b16 %v1764, %v1762
        %v1807 = vpack.c.b16 %v1767, %v1765
        %v1808 = vpack.c.b16 %v1768, %v1766
        %v1809 = vpack.c.b16 %v1771, %v1769
        %v1810 = vpack.c.b16 %v1772, %v1770
        %v1811 = vpack.c.b16 %v1775, %v1773
        %v1812 = vpack.c.b16 %v1776, %v1774
        %v1813 = vpack.c.b16 %v1779, %v1777
        %v1814 = vpack.c.b16 %v1780, %v1778
        %v1815 = vpack.c.b16 %v1783, %v1781
        %v1816 = vpack.c.b16 %v1784, %v1782
        %1849 = vmatprep.subr.bf16.mxu0 %v1786
        %1850 = vmatpush1.bf16.msra.mxu0 %v1785
        %1851 = vmatprep.subr.bf16.mxu0 %v1788
        %1852 = vmatpush1.bf16.msra.mxu0 %v1787
        %1853 = vmatprep.subr.bf16.mxu0 %v1790
        %1854 = vmatpush1.bf16.msra.mxu0 %v1789
        %1855 = vmatprep.subr.bf16.mxu0 %v1792
        %1856 = vmatpush1.bf16.msra.mxu0 %v1791
        %1857 = vmatprep.subr.bf16.mxu0 %v1794
        %1858 = vmatpush1.bf16.msra.mxu0 %v1793
        %1859 = vmatprep.subr.bf16.mxu0 %v1796
        %1860 = vmatpush1.bf16.msra.mxu0 %v1795
        %1861 = vmatprep.subr.bf16.mxu0 %v1798
        %1862 = vmatpush1.bf16.msra.mxu0 %v1797
        %1863 = vmatprep.subr.bf16.mxu0 %v1800
        %1864 = vmatpush1.bf16.msra.mxu0 %v1799
        %1865 = vmatprep.subr.bf16.mxu0 %v1802
        %1866 = vmatpush1.bf16.msra.mxu0 %v1801
        %1867 = vmatprep.subr.bf16.mxu0 %v1804
        %1868 = vmatpush1.bf16.msra.mxu0 %v1803
        %1869 = vmatprep.subr.bf16.mxu0 %v1806
        %1870 = vmatpush1.bf16.msra.mxu0 %v1805
        %1871 = vmatprep.subr.bf16.mxu0 %v1808
        %1872 = vmatpush1.bf16.msra.mxu0 %v1807
        %1873 = vmatprep.subr.bf16.mxu0 %v1810
        %1874 = vmatpush1.bf16.msra.mxu0 %v1809
        %1875 = vmatprep.subr.bf16.mxu0 %v1812
        %1876 = vmatpush1.bf16.msra.mxu0 %v1811
        %1877 = vmatprep.subr.bf16.mxu0 %v1814
        %1878 = vmatpush1.bf16.msra.mxu0 %v1813
        %1879 = vmatprep.subr.bf16.mxu0 %v1816
        %1880 = vmatpush1.bf16.msra.mxu0 %v1815
        %1881 = vmatprep.mubr.bf16.mxu0 %v1614
        %1882 = vmatmul.mubr.bf16.gmra.mrb[0].mxu0 %v1613
        %v1883 = vpop.f32.mrb[0].mxu0
        %v1884 = vadd.f32 %v1682, %v1883
        %v1885 = vpop.f32.mrb[0].mxu0
        %v1886 = vadd.f32 %v1686, %v1885
        %v1887 = vpop.f32.mrb[0].mxu0
        %v1888 = vadd.f32 %v1682, %v1887
        %v1889 = vpop.f32.mrb[0].mxu0
        %v1890 = vadd.f32 %v1686, %v1889
        %1891 = vmatprep.mubr.bf16.mxu0 %v1616
        %1892 = vmatmul.mubr.bf16.gmra.mrb[0].mxu0 %v1615
        %v1893 = vpop.f32.mrb[0].mxu0
        %v1894 = vadd.f32 %v1682, %v1893
        %v1895 = vpop.f32.mrb[0].mxu0
        %v1896 = vadd.f32 %v1686, %v1895
        %v1897 = vpop.f32.mrb[0].mxu0
        %v1898 = vadd.f32 %v1682, %v1897
        %v1899 = vpop.f32.mrb[0].mxu0
        %v1900 = vadd.f32 %v1686, %v1899
        %1901 = vmatprep.mubr.bf16.mxu0 %v1618
        %1902 = vmatmul.mubr.bf16.gmra.mrb[0].mxu0 %v1617
        %v1903 = vpop.f32.mrb[0].mxu0
        %v1904 = vadd.f32 %v1682, %v1903
        %v1905 = vpop.f32.mrb[0].mxu0
        %v1906 = vadd.f32 %v1686, %v1905
        %v1907 = vpop.f32.mrb[0].mxu0
        %v1908 = vadd.f32 %v1682, %v1907
        %v1909 = vpop.f32.mrb[0].mxu0
        %v1910 = vadd.f32 %v1686, %v1909
        %1911 = vmatprep.mubr.bf16.mxu0 %v1620
        %1912 = vmatmul.mubr.bf16.gmra.mrb[0].mxu0 %v1619
        %v1913 = vpop.f32.mrb[0].mxu0
        %v1914 = vadd.f32 %v1682, %v1913
        %v1915 = vpop.f32.mrb[0].mxu0
        %v1916 = vadd.f32 %v1686, %v1915
        %v1917 = vpop.f32.mrb[0].mxu0
        %v1918 = vadd.f32 %v1682, %v1917
        %v1919 = vpop.f32.mrb[0].mxu0
        %v1920 = vadd.f32 %v1686, %v1919
        %1921 = vmatprep.mubr.bf16.mxu0 %v1622
        %1922 = vmatmul.mubr.bf16.gmra.mrb[0].mxu0 %v1621
        %v1923 = vpop.f32.mrb[0].mxu0
        %v1924 = vadd.f32 %v1682, %v1923
        %v1925 = vpop.f32.mrb[0].mxu0
        %v1926 = vadd.f32 %v1686, %v1925
        %v1927 = vpop.f32.mrb[0].mxu0
        %v1928 = vadd.f32 %v1682, %v1927
        %v1929 = vpop.f32.mrb[0].mxu0
        %v1930 = vadd.f32 %v1686, %v1929
        %1931 = vmatprep.mubr.bf16.mxu0 %v1624
        %1932 = vmatmul.mubr.bf16.gmra.mrb[0].mxu0 %v1623
        %v1933 = vpop.f32.mrb[0].mxu0
        %v1934 = vadd.f32 %v1682, %v1933
        %v1935 = vpop.f32.mrb[0].mxu0
        %v1936 = vadd.f32 %v1686, %v1935
        %v1937 = vpop.f32.mrb[0].mxu0
        %v1938 = vadd.f32 %v1682, %v1937
        %v1939 = vpop.f32.mrb[0].mxu0
        %v1940 = vadd.f32 %v1686, %v1939
        %1941 = vmatprep.mubr.bf16.mxu0 %v1626
        %1942 = vmatmul.mubr.bf16.gmra.mrb[0].mxu0 %v1625
        %v1943 = vpop.f32.mrb[0].mxu0
        %v1944 = vadd.f32 %v1682, %v1943
        %v1945 = vpop.f32.mrb[0].mxu0
        %v1946 = vadd.f32 %v1686, %v1945
        %v1947 = vpop.f32.mrb[0].mxu0
        %v1948 = vadd.f32 %v1682, %v1947
        %v1949 = vpop.f32.mrb[0].mxu0
        %v1950 = vadd.f32 %v1686, %v1949
        %1951 = vmatprep.mubr.bf16.mxu0 %v1628
        %1952 = vmatmul.mubr.bf16.gmra.mrb[0].mxu0 %v1627
        %v1953 = vpop.f32.mrb[0].mxu0
        %v1954 = vadd.f32 %v1682, %v1953
        %v1955 = vpop.f32.mrb[0].mxu0
        %v1956 = vadd.f32 %v1686, %v1955
        %v1957 = vpop.f32.mrb[0].mxu0
        %v1958 = vadd.f32 %v1682, %v1957
        %v1959 = vpop.f32.mrb[0].mxu0
        %v1960 = vadd.f32 %v1686, %v1959
        %1961 = vmatprep.mubr.bf16.mxu0 %v1630
        %1962 = vmatmul.mubr.bf16.gmra.mrb[0].mxu0 %v1629
        %v1963 = vpop.f32.mrb[0].mxu0
        %v1964 = vadd.f32 %v1682, %v1963
        %v1965 = vpop.f32.mrb[0].mxu0
        %v1966 = vadd.f32 %v1686, %v1965
        %v1967 = vpop.f32.mrb[0].mxu0
        %v1968 = vadd.f32 %v1682, %v1967
        %v1969 = vpop.f32.mrb[0].mxu0
        %v1970 = vadd.f32 %v1686, %v1969
        %1971 = vmatprep.mubr.bf16.mxu0 %v1632
        %1972 = vmatmul.mubr.bf16.gmra.mrb[0].mxu0 %v1631
        %v1973 = vpop.f32.mrb[0].mxu0
        %v1974 = vadd.f32 %v1682, %v1973
        %v1975 = vpop.f32.mrb[0].mxu0
        %v1976 = vadd.f32 %v1686, %v1975
        %v1977 = vpop.f32.mrb[0].mxu0
        %v1978 = vadd.f32 %v1682, %v1977
        %v1979 = vpop.f32.mrb[0].mxu0
        %v1980 = vadd.f32 %v1686, %v1979
        %1981 = vmatprep.mubr.bf16.mxu0 %v1634
        %1982 = vmatmul.mubr.bf16.gmra.mrb[0].mxu0 %v1633
        %v1983 = vpop.f32.mrb[0].mxu0
        %v1984 = vadd.f32 %v1682, %v1983
        %v1985 = vpop.f32.mrb[0].mxu0
        %v1986 = vadd.f32 %v1686, %v1985
        %v1987 = vpop.f32.mrb[0].mxu0
        %v1988 = vadd.f32 %v1682, %v1987
        %v1989 = vpop.f32.mrb[0].mxu0
        %v1990 = vadd.f32 %v1686, %v1989
        %1991 = vmatprep.mubr.bf16.mxu0 %v1636
        %1992 = vmatmul.mubr.bf16.gmra.mrb[0].mxu0 %v1635
        %v1993 = vpop.f32.mrb[0].mxu0
        %v1994 = vadd.f32 %v1682, %v1993
        %v1995 = vpop.f32.mrb[0].mxu0
        %v1996 = vadd.f32 %v1686, %v1995
        %v1997 = vpop.f32.mrb[0].mxu0
        %v1998 = vadd.f32 %v1682, %v1997
        %v1999 = vpop.f32.mrb[0].mxu0
        %v2000 = vadd.f32 %v1686, %v1999
        %2001 = vmatprep.mubr.bf16.mxu0 %v1638
        %2002 = vmatmul.mubr.bf16.gmra.mrb[0].mxu0 %v1637
        %v2003 = vpop.f32.mrb[0].mxu0
        %v2004 = vadd.f32 %v1682, %v2003
        %v2005 = vpop.f32.mrb[0].mxu0
        %v2006 = vadd.f32 %v1686, %v2005
        %v2007 = vpop.f32.mrb[0].mxu0
        %v2008 = vadd.f32 %v1682, %v2007
        %v2009 = vpop.f32.mrb[0].mxu0
        %v2010 = vadd.f32 %v1686, %v2009
        %2011 = vmatprep.mubr.bf16.mxu0 %v1640
        %2012 = vmatmul.mubr.bf16.gmra.mrb[0].mxu0 %v1639
        %v2013 = vpop.f32.mrb[0].mxu0
        %v2014 = vadd.f32 %v1682, %v2013
        %v2015 = vpop.f32.mrb[0].mxu0
        %v2016 = vadd.f32 %v1686, %v2015
        %v2017 = vpop.f32.mrb[0].mxu0
        %v2018 = vadd.f32 %v1682, %v2017
        %v2019 = vpop.f32.mrb[0].mxu0
        %v2020 = vadd.f32 %v1686, %v2019
        %2021 = vmatprep.mubr.bf16.mxu0 %v1642
        %2022 = vmatmul.mubr.bf16.gmra.mrb[0].mxu0 %v1641
        %v2023 = vpop.f32.mrb[0].mxu0
        %v2024 = vadd.f32 %v1682, %v2023
        %v2025 = vpop.f32.mrb[0].mxu0
        %v2026 = vadd.f32 %v1686, %v2025
        %v2027 = vpop.f32.mrb[0].mxu0
        %v2028 = vadd.f32 %v1682, %v2027
        %v2029 = vpop.f32.mrb[0].mxu0
        %v2030 = vadd.f32 %v1686, %v2029
        %2031 = vmatprep.mubr.bf16.mxu0 %v1644
        %2032 = vmatmul.mubr.bf16.gmra.mrb[0].mxu0 %v1643
        %v2033 = vpop.f32.mrb[0].mxu0
        %v2034 = vadd.f32 %v1682, %v2033
        %v2035 = vpop.f32.mrb[0].mxu0
        %v2036 = vadd.f32 %v1686, %v2035
        %v2037 = vpop.f32.mrb[0].mxu0
        %v2038 = vadd.f32 %v1682, %v2037
        %v2039 = vpop.f32.mrb[0].mxu0
        %v2040 = vadd.f32 %v1686, %v2039
        %2041 = vdwg.mxu0
        %v2042 = vmax.f32 %v1884, 0.0
        %v2043 = vmax.f32 %v1886, 0.0
        %v2044 = vmax.f32 %v1888, 0.0
        %v2045 = vmax.f32 %v1890, 0.0
        %v2046 = vmax.f32 %v1894, 0.0
        %v2047 = vmax.f32 %v1896, 0.0
        %v2048 = vmax.f32 %v1898, 0.0
        %v2049 = vmax.f32 %v1900, 0.0
        %v2050 = vmax.f32 %v1904, 0.0
        %v2051 = vmax.f32 %v1906, 0.0
        %v2052 = vmax.f32 %v1908, 0.0
        %v2053 = vmax.f32 %v1910, 0.0
        %v2054 = vmax.f32 %v1914, 0.0
        %v2055 = vmax.f32 %v1916, 0.0
        %v2056 = vmax.f32 %v1918, 0.0
        %v2057 = vmax.f32 %v1920, 0.0
        %v2058 = vmax.f32 %v1924, 0.0
        %v2059 = vmax.f32 %v1926, 0.0
        %v2060 = vmax.f32 %v1928, 0.0
        %v2061 = vmax.f32 %v1930, 0.0
        %v2062 = vmax.f32 %v1934, 0.0
        %v2063 = vmax.f32 %v1936, 0.0
        %v2064 = vmax.f32 %v1938, 0.0
        %v2065 = vmax.f32 %v1940, 0.0
        %v2066 = vmax.f32 %v1944, 0.0
        %v2067 = vmax.f32 %v1946, 0.0
        %v2068 = vmax.f32 %v1948, 0.0
        %v2069 = vmax.f32 %v1950, 0.0
        %v2070 = vmax.f32 %v1954, 0.0
        %v2071 = vmax.f32 %v1956, 0.0
        %v2072 = vmax.f32 %v1958, 0.0
        %v2073 = vmax.f32 %v1960, 0.0
        %v2074 = vmax.f32 %v1964, 0.0
        %v2075 = vmax.f32 %v1966, 0.0
        %v2076 = vmax.f32 %v1968, 0.0
        %v2077 = vmax.f32 %v1970, 0.0
        %v2078 = vmax.f32 %v1974, 0.0
        %v2079 = vmax.f32 %v1976, 0.0
        %v2080 = vmax.f32 %v1978, 0.0
        %v2081 = vmax.f32 %v1980, 0.0
        %v2082 = vmax.f32 %v1984, 0.0
        %v2083 = vmax.f32 %v1986, 0.0
        %v2084 = vmax.f32 %v1988, 0.0
        %v2085 = vmax.f32 %v1990, 0.0
        %v2086 = vmax.f32 %v1994, 0.0
        %v2087 = vmax.f32 %v1996, 0.0
        %v2088 = vmax.f32 %v1998, 0.0
        %v2089 = vmax.f32 %v2000, 0.0
        %v2090 = vmax.f32 %v2004, 0.0
        %v2091 = vmax.f32 %v2006, 0.0
        %v2092 = vmax.f32 %v2008, 0.0
        %v2093 = vmax.f32 %v2010, 0.0
        %v2094 = vmax.f32 %v2014, 0.0
        %v2095 = vmax.f32 %v2016, 0.0
        %v2096 = vmax.f32 %v2018, 0.0
        %v2097 = vmax.f32 %v2020, 0.0
        %v2098 = vmax.f32 %v2024, 0.0
        %v2099 = vmax.f32 %v2026, 0.0
        %v2100 = vmax.f32 %v2028, 0.0
        %v2101 = vmax.f32 %v2030, 0.0
        %v2102 = vmax.f32 %v2034, 0.0
        %v2103 = vmax.f32 %v2036, 0.0
        %v2104 = vmax.f32 %v2038, 0.0
        %v2105 = vmax.f32 %v2040, 0.0
        %v2106 = vpack.c.bf16 %v2044, %v2042
        %v2107 = vpack.c.bf16 %v2045, %v2043
        %v2108 = vpack.c.bf16 %v2048, %v2046
        %v2109 = vpack.c.bf16 %v2049, %v2047
        %v2110 = vpack.c.bf16 %v2052, %v2050
        %v2111 = vpack.c.bf16 %v2053, %v2051
        %v2112 = vpack.c.bf16 %v2056, %v2054
        %v2113 = vpack.c.bf16 %v2057, %v2055
        %v2114 = vpack.c.bf16 %v2060, %v2058
        %v2115 = vpack.c.bf16 %v2061, %v2059
        %v2116 = vpack.c.bf16 %v2064, %v2062
        %v2117 = vpack.c.bf16 %v2065, %v2063
        %v2118 = vpack.c.bf16 %v2068, %v2066
        %v2119 = vpack.c.bf16 %v2069, %v2067
        %v2120 = vpack.c.bf16 %v2072, %v2070
        %v2121 = vpack.c.bf16 %v2073, %v2071
        %v2122 = vpack.c.bf16 %v2076, %v2074
        %v2123 = vpack.c.bf16 %v2077, %v2075
        %v2124 = vpack.c.bf16 %v2080, %v2078
        %v2125 = vpack.c.bf16 %v2081, %v2079
        %v2126 = vpack.c.bf16 %v2084, %v2082
        %v2127 = vpack.c.bf16 %v2085, %v2083
        %v2128 = vpack.c.bf16 %v2088, %v2086
        %v2129 = vpack.c.bf16 %v2089, %v2087
        %v2130 = vpack.c.bf16 %v2092, %v2090
        %v2131 = vpack.c.bf16 %v2093, %v2091
        %v2132 = vpack.c.bf16 %v2096, %v2094
        %v2133 = vpack.c.bf16 %v2097, %v2095
        %v2134 = vpack.c.bf16 %v2100, %v2098
        %v2135 = vpack.c.bf16 %v2101, %v2099
        %v2136 = vpack.c.bf16 %v2104, %v2102
        %v2137 = vpack.c.bf16 %v2105, %v2103
        %v2138 = vld [vmem:[#allocation11] sm:$0xff]
        %v2139 = vld [vmem:[#allocation11 + $0x8] sm:$0xff]
        %v2140 = vld [vmem:[#allocation11 + $0x10] sm:$0xff]
        %v2141 = vld [vmem:[#allocation11 + $0x18] sm:$0xff]
        %v2142 = vld [vmem:[#allocation11 + $0x20] sm:$0xff]
        %v2143 = vld [vmem:[#allocation11 + $0x28] sm:$0xff]
        %v2144 = vld [vmem:[#allocation11 + $0x30] sm:$0xff]
        %v2145 = vld [vmem:[#allocation11 + $0x38] sm:$0xff]
        %v2146 = vld [vmem:[#allocation11 + $0x40] sm:$0xff]
        %v2147 = vld [vmem:[#allocation11 + $0x48] sm:$0xff]
        %v2148 = vld [vmem:[#allocation11 + $0x50] sm:$0xff]
        %v2149 = vld [vmem:[#allocation11 + $0x58] sm:$0xff]
        %v2150 = vld [vmem:[#allocation11 + $0x60] sm:$0xff]
        %v2151 = vld [vmem:[#allocation11 + $0x68] sm:$0xff]
        %v2152 = vld [vmem:[#allocation11 + $0x70] sm:$0xff]
        %v2153 = vld [vmem:[#allocation11 + $0x78] sm:$0xff]
        %v2154 = vld [vmem:[#allocation11 + $0x80] sm:$0xff]
        %v2155 = vld [vmem:[#allocation11 + $0x88] sm:$0xff]
        %v2156 = vld [vmem:[#allocation11 + $0x90] sm:$0xff]
        %v2157 = vld [vmem:[#allocation11 + $0x98] sm:$0xff]
        %v2158 = vld [vmem:[#allocation11 + $0xa0] sm:$0xff]
        %v2159 = vld [vmem:[#allocation11 + $0xa8] sm:$0xff]
        %v2160 = vld [vmem:[#allocation11 + $0xb0] sm:$0xff]
        %v2161 = vld [vmem:[#allocation11 + $0xb8] sm:$0xff]
        %v2162 = vld [vmem:[#allocation11 + $0xc0] sm:$0xff]
        %v2163 = vld [vmem:[#allocation11 + $0xc8] sm:$0xff]
        %v2164 = vld [vmem:[#allocation11 + $0xd0] sm:$0xff]
        %v2165 = vld [vmem:[#allocation11 + $0xd8] sm:$0xff]
        %v2166 = vld [vmem:[#allocation11 + $0xe0] sm:$0xff]
        %v2167 = vld [vmem:[#allocation11 + $0xe8] sm:$0xff]
        %v2168 = vld [vmem:[#allocation11 + $0xf0] sm:$0xff]
        %v2169 = vld [vmem:[#allocation11 + $0xf8] sm:$0xff]
        %v2170 = vld [vmem:[%s8] sm:$0x3]
        %v2172 = vlaneseq
        %v2173 = vshrl.u32 %v2172, 7
        %v2174 = vsub.s32 0, %v2173
        %v2175 = vrot.slane %v2170, %v2174
        %v2176 = vlaneseq
        %v2177 = vshrl.u32 %v2176, 7
        %v2178 = vsub.s32 1, %v2177
        %v2179 = vrot.slane %v2170, %v2178
        %v2214 = vunpack.c.l.b16 %v2138
        %v2215 = vunpack.c.h.b16 %v2138
        %v2216 = vunpack.c.l.b16 %v2139
        %v2217 = vunpack.c.h.b16 %v2139
        %v2218 = vunpack.c.l.b16 %v2140
        %v2219 = vunpack.c.h.b16 %v2140
        %v2220 = vunpack.c.l.b16 %v2141
        %v2221 = vunpack.c.h.b16 %v2141
        %v2222 = vunpack.c.l.b16 %v2142
        %v2223 = vunpack.c.h.b16 %v2142
        %v2224 = vunpack.c.l.b16 %v2143
        %v2225 = vunpack.c.h.b16 %v2143
        %v2226 = vunpack.c.l.b16 %v2144
        %v2227 = vunpack.c.h.b16 %v2144
        %v2228 = vunpack.c.l.b16 %v2145
        %v2229 = vunpack.c.h.b16 %v2145
        %v2230 = vunpack.c.l.b16 %v2146
        %v2231 = vunpack.c.h.b16 %v2146
        %v2232 = vunpack.c.l.b16 %v2147
        %v2233 = vunpack.c.h.b16 %v2147
        %v2234 = vunpack.c.l.b16 %v2148
        %v2235 = vunpack.c.h.b16 %v2148
        %v2236 = vunpack.c.l.b16 %v2149
        %v2237 = vunpack.c.h.b16 %v2149
        %v2238 = vunpack.c.l.b16 %v2150
        %v2239 = vunpack.c.h.b16 %v2150
        %v2240 = vunpack.c.l.b16 %v2151
        %v2241 = vunpack.c.h.b16 %v2151
        %v2242 = vunpack.c.l.b16 %v2152
        %v2243 = vunpack.c.h.b16 %v2152
        %v2244 = vunpack.c.l.b16 %v2153
        %v2245 = vunpack.c.h.b16 %v2153
        %v2246 = vunpack.c.l.b16 %v2154
        %v2247 = vunpack.c.h.b16 %v2154
        %v2248 = vunpack.c.l.b16 %v2155
        %v2249 = vunpack.c.h.b16 %v2155
        %v2250 = vunpack.c.l.b16 %v2156
        %v2251 = vunpack.c.h.b16 %v2156
        %v2252 = vunpack.c.l.b16 %v2157
        %v2253 = vunpack.c.h.b16 %v2157
        %v2254 = vunpack.c.l.b16 %v2158
        %v2255 = vunpack.c.h.b16 %v2158
        %v2256 = vunpack.c.l.b16 %v2159
        %v2257 = vunpack.c.h.b16 %v2159
        %v2258 = vunpack.c.l.b16 %v2160
        %v2259 = vunpack.c.h.b16 %v2160
        %v2260 = vunpack.c.l.b16 %v2161
        %v2261 = vunpack.c.h.b16 %v2161
        %v2262 = vunpack.c.l.b16 %v2162
        %v2263 = vunpack.c.h.b16 %v2162
        %v2264 = vunpack.c.l.b16 %v2163
        %v2265 = vunpack.c.h.b16 %v2163
        %v2266 = vunpack.c.l.b16 %v2164
        %v2267 = vunpack.c.h.b16 %v2164
        %v2268 = vunpack.c.l.b16 %v2165
        %v2269 = vunpack.c.h.b16 %v2165
        %v2270 = vunpack.c.l.b16 %v2166
        %v2271 = vunpack.c.h.b16 %v2166
        %v2272 = vunpack.c.l.b16 %v2167
        %v2273 = vunpack.c.h.b16 %v2167
        %v2274 = vunpack.c.l.b16 %v2168
        %v2275 = vunpack.c.h.b16 %v2168
        %v2276 = vunpack.c.l.b16 %v2169
        %v2277 = vunpack.c.h.b16 %v2169
        %v2278 = vpack.c.b16 %v2216, %v2214
        %v2279 = vpack.c.b16 %v2217, %v2215
        %v2280 = vpack.c.b16 %v2220, %v2218
        %v2281 = vpack.c.b16 %v2221, %v2219
        %v2282 = vpack.c.b16 %v2224, %v2222
        %v2283 = vpack.c.b16 %v2225, %v2223
        %v2284 = vpack.c.b16 %v2228, %v2226
        %v2285 = vpack.c.b16 %v2229, %v2227
        %v2286 = vpack.c.b16 %v2232, %v2230
        %v2287 = vpack.c.b16 %v2233, %v2231
        %v2288 = vpack.c.b16 %v2236, %v2234
        %v2289 = vpack.c.b16 %v2237, %v2235
        %v2290 = vpack.c.b16 %v2240, %v2238
        %v2291 = vpack.c.b16 %v2241, %v2239
        %v2292 = vpack.c.b16 %v2244, %v2242
        %v2293 = vpack.c.b16 %v2245, %v2243
        %v2294 = vpack.c.b16 %v2248, %v2246
        %v2295 = vpack.c.b16 %v2249, %v2247
        %v2296 = vpack.c.b16 %v2252, %v2250
        %v2297 = vpack.c.b16 %v2253, %v2251
        %v2298 = vpack.c.b16 %v2256, %v2254
        %v2299 = vpack.c.b16 %v2257, %v2255
        %v2300 = vpack.c.b16 %v2260, %v2258
        %v2301 = vpack.c.b16 %v2261, %v2259
        %v2302 = vpack.c.b16 %v2264, %v2262
        %v2303 = vpack.c.b16 %v2265, %v2263
        %v2304 = vpack.c.b16 %v2268, %v2266
        %v2305 = vpack.c.b16 %v2269, %v2267
        %v2306 = vpack.c.b16 %v2272, %v2270
        %v2307 = vpack.c.b16 %v2273, %v2271
        %v2308 = vpack.c.b16 %v2276, %v2274
        %v2309 = vpack.c.b16 %v2277, %v2275
        %2342 = vmatprep.subr.bf16.mxu0 %v2279
        %2343 = vmatpush1.bf16.msra.mxu0 %v2278
        %2344 = vmatprep.subr.bf16.mxu0 %v2281
        %2345 = vmatpush1.bf16.msra.mxu0 %v2280
        %2346 = vmatprep.subr.bf16.mxu0 %v2283
        %2347 = vmatpush1.bf16.msra.mxu0 %v2282
        %2348 = vmatprep.subr.bf16.mxu0 %v2285
        %2349 = vmatpush1.bf16.msra.mxu0 %v2284
        %2350 = vmatprep.subr.bf16.mxu0 %v2287
        %2351 = vmatpush1.bf16.msra.mxu0 %v2286
        %2352 = vmatprep.subr.bf16.mxu0 %v2289
        %2353 = vmatpush1.bf16.msra.mxu0 %v2288
        %2354 = vmatprep.subr.bf16.mxu0 %v2291
        %2355 = vmatpush1.bf16.msra.mxu0 %v2290
        %2356 = vmatprep.subr.bf16.mxu0 %v2293
        %2357 = vmatpush1.bf16.msra.mxu0 %v2292
        %2358 = vmatprep.subr.bf16.mxu0 %v2295
        %2359 = vmatpush1.bf16.msra.mxu0 %v2294
        %2360 = vmatprep.subr.bf16.mxu0 %v2297
        %2361 = vmatpush1.bf16.msra.mxu0 %v2296
        %2362 = vmatprep.subr.bf16.mxu0 %v2299
        %2363 = vmatpush1.bf16.msra.mxu0 %v2298
        %2364 = vmatprep.subr.bf16.mxu0 %v2301
        %2365 = vmatpush1.bf16.msra.mxu0 %v2300
        %2366 = vmatprep.subr.bf16.mxu0 %v2303
        %2367 = vmatpush1.bf16.msra.mxu0 %v2302
        %2368 = vmatprep.subr.bf16.mxu0 %v2305
        %2369 = vmatpush1.bf16.msra.mxu0 %v2304
        %2370 = vmatprep.subr.bf16.mxu0 %v2307
        %2371 = vmatpush1.bf16.msra.mxu0 %v2306
        %2372 = vmatprep.subr.bf16.mxu0 %v2309
        %2373 = vmatpush1.bf16.msra.mxu0 %v2308
        %2374 = vmatprep.mubr.bf16.mxu0 %v2107
        %2375 = vmatmul.mubr.bf16.gmra.mrb[0].mxu0 %v2106
        %v2376 = vpop.f32.mrb[0].mxu0
        %v2377 = vadd.f32 %v2175, %v2376
        %v2378 = vpop.f32.mrb[0].mxu0
        %v2379 = vadd.f32 %v2179, %v2378
        %v2380 = vpop.f32.mrb[0].mxu0
        %v2381 = vadd.f32 %v2175, %v2380
        %v2382 = vpop.f32.mrb[0].mxu0
        %v2383 = vadd.f32 %v2179, %v2382
        %2384 = vmatprep.mubr.bf16.mxu0 %v2109
        %2385 = vmatmul.mubr.bf16.gmra.mrb[0].mxu0 %v2108
        %v2386 = vpop.f32.mrb[0].mxu0
        %v2387 = vadd.f32 %v2175, %v2386
        %v2388 = vpop.f32.mrb[0].mxu0
        %v2389 = vadd.f32 %v2179, %v2388
        %v2390 = vpop.f32.mrb[0].mxu0
        %v2391 = vadd.f32 %v2175, %v2390
        %v2392 = vpop.f32.mrb[0].mxu0
        %v2393 = vadd.f32 %v2179, %v2392
        %2394 = vmatprep.mubr.bf16.mxu0 %v2111
        %2395 = vmatmul.mubr.bf16.gmra.mrb[0].mxu0 %v2110
        %v2396 = vpop.f32.mrb[0].mxu0
        %v2397 = vadd.f32 %v2175, %v2396
        %v2398 = vpop.f32.mrb[0].mxu0
        %v2399 = vadd.f32 %v2179, %v2398
        %v2400 = vpop.f32.mrb[0].mxu0
        %v2401 = vadd.f32 %v2175, %v2400
        %v2402 = vpop.f32.mrb[0].mxu0
        %v2403 = vadd.f32 %v2179, %v2402
        %2404 = vmatprep.mubr.bf16.mxu0 %v2113
        %2405 = vmatmul.mubr.bf16.gmra.mrb[0].mxu0 %v2112
        %v2406 = vpop.f32.mrb[0].mxu0
        %v2407 = vadd.f32 %v2175, %v2406
        %v2408 = vpop.f32.mrb[0].mxu0
        %v2409 = vadd.f32 %v2179, %v2408
        %v2410 = vpop.f32.mrb[0].mxu0
        %v2411 = vadd.f32 %v2175, %v2410
        %v2412 = vpop.f32.mrb[0].mxu0
        %v2413 = vadd.f32 %v2179, %v2412
        %2414 = vmatprep.mubr.bf16.mxu0 %v2115
        %2415 = vmatmul.mubr.bf16.gmra.mrb[0].mxu0 %v2114
        %v2416 = vpop.f32.mrb[0].mxu0
        %v2417 = vadd.f32 %v2175, %v2416
        %v2418 = vpop.f32.mrb[0].mxu0
        %v2419 = vadd.f32 %v2179, %v2418
        %v2420 = vpop.f32.mrb[0].mxu0
        %v2421 = vadd.f32 %v2175, %v2420
        %v2422 = vpop.f32.mrb[0].mxu0
        %v2423 = vadd.f32 %v2179, %v2422
        %2424 = vmatprep.mubr.bf16.mxu0 %v2117
        %2425 = vmatmul.mubr.bf16.gmra.mrb[0].mxu0 %v2116
        %v2426 = vpop.f32.mrb[0].mxu0
        %v2427 = vadd.f32 %v2175, %v2426
        %v2428 = vpop.f32.mrb[0].mxu0
        %v2429 = vadd.f32 %v2179, %v2428
        %v2430 = vpop.f32.mrb[0].mxu0
        %v2431 = vadd.f32 %v2175, %v2430
        %v2432 = vpop.f32.mrb[0].mxu0
        %v2433 = vadd.f32 %v2179, %v2432
        %2434 = vmatprep.mubr.bf16.mxu0 %v2119
        %2435 = vmatmul.mubr.bf16.gmra.mrb[0].mxu0 %v2118
        %v2436 = vpop.f32.mrb[0].mxu0
        %v2437 = vadd.f32 %v2175, %v2436
        %v2438 = vpop.f32.mrb[0].mxu0
        %v2439 = vadd.f32 %v2179, %v2438
        %v2440 = vpop.f32.mrb[0].mxu0
        %v2441 = vadd.f32 %v2175, %v2440
        %v2442 = vpop.f32.mrb[0].mxu0
        %v2443 = vadd.f32 %v2179, %v2442
        %2444 = vmatprep.mubr.bf16.mxu0 %v2121
        %2445 = vmatmul.mubr.bf16.gmra.mrb[0].mxu0 %v2120
        %v2446 = vpop.f32.mrb[0].mxu0
        %v2447 = vadd.f32 %v2175, %v2446
        %v2448 = vpop.f32.mrb[0].mxu0
        %v2449 = vadd.f32 %v2179, %v2448
        %v2450 = vpop.f32.mrb[0].mxu0
        %v2451 = vadd.f32 %v2175, %v2450
        %v2452 = vpop.f32.mrb[0].mxu0
        %v2453 = vadd.f32 %v2179, %v2452
        %2454 = vmatprep.mubr.bf16.mxu0 %v2123
        %2455 = vmatmul.mubr.bf16.gmra.mrb[0].mxu0 %v2122
        %v2456 = vpop.f32.mrb[0].mxu0
        %v2457 = vadd.f32 %v2175, %v2456
        %v2458 = vpop.f32.mrb[0].mxu0
        %v2459 = vadd.f32 %v2179, %v2458
        %v2460 = vpop.f32.mrb[0].mxu0
        %v2461 = vadd.f32 %v2175, %v2460
        %v2462 = vpop.f32.mrb[0].mxu0
        %v2463 = vadd.f32 %v2179, %v2462
        %2464 = vmatprep.mubr.bf16.mxu0 %v2125
        %2465 = vmatmul.mubr.bf16.gmra.mrb[0].mxu0 %v2124
        %v2466 = vpop.f32.mrb[0].mxu0
        %v2467 = vadd.f32 %v2175, %v2466
        %v2468 = vpop.f32.mrb[0].mxu0
        %v2469 = vadd.f32 %v2179, %v2468
        %v2470 = vpop.f32.mrb[0].mxu0
        %v2471 = vadd.f32 %v2175, %v2470
        %v2472 = vpop.f32.mrb[0].mxu0
        %v2473 = vadd.f32 %v2179, %v2472
        %2474 = vmatprep.mubr.bf16.mxu0 %v2127
        %2475 = vmatmul.mubr.bf16.gmra.mrb[0].mxu0 %v2126
        %v2476 = vpop.f32.mrb[0].mxu0
        %v2477 = vadd.f32 %v2175, %v2476
        %v2478 = vpop.f32.mrb[0].mxu0
        %v2479 = vadd.f32 %v2179, %v2478
        %v2480 = vpop.f32.mrb[0].mxu0
        %v2481 = vadd.f32 %v2175, %v2480
        %v2482 = vpop.f32.mrb[0].mxu0
        %v2483 = vadd.f32 %v2179, %v2482
        %2484 = vmatprep.mubr.bf16.mxu0 %v2129
        %2485 = vmatmul.mubr.bf16.gmra.mrb[0].mxu0 %v2128
        %v2486 = vpop.f32.mrb[0].mxu0
        %v2487 = vadd.f32 %v2175, %v2486
        %v2488 = vpop.f32.mrb[0].mxu0
        %v2489 = vadd.f32 %v2179, %v2488
        %v2490 = vpop.f32.mrb[0].mxu0
        %v2491 = vadd.f32 %v2175, %v2490
        %v2492 = vpop.f32.mrb[0].mxu0
        %v2493 = vadd.f32 %v2179, %v2492
        %2494 = vmatprep.mubr.bf16.mxu0 %v2131
        %2495 = vmatmul.mubr.bf16.gmra.mrb[0].mxu0 %v2130
        %v2496 = vpop.f32.mrb[0].mxu0
        %v2497 = vadd.f32 %v2175, %v2496
        %v2498 = vpop.f32.mrb[0].mxu0
        %v2499 = vadd.f32 %v2179, %v2498
        %v2500 = vpop.f32.mrb[0].mxu0
        %v2501 = vadd.f32 %v2175, %v2500
        %v2502 = vpop.f32.mrb[0].mxu0
        %v2503 = vadd.f32 %v2179, %v2502
        %2504 = vmatprep.mubr.bf16.mxu0 %v2133
        %2505 = vmatmul.mubr.bf16.gmra.mrb[0].mxu0 %v2132
        %v2506 = vpop.f32.mrb[0].mxu0
        %v2507 = vadd.f32 %v2175, %v2506
        %v2508 = vpop.f32.mrb[0].mxu0
        %v2509 = vadd.f32 %v2179, %v2508
        %v2510 = vpop.f32.mrb[0].mxu0
        %v2511 = vadd.f32 %v2175, %v2510
        %v2512 = vpop.f32.mrb[0].mxu0
        %v2513 = vadd.f32 %v2179, %v2512
        %2514 = vmatprep.mubr.bf16.mxu0 %v2135
        %2515 = vmatmul.mubr.bf16.gmra.mrb[0].mxu0 %v2134
        %v2516 = vpop.f32.mrb[0].mxu0
        %v2517 = vadd.f32 %v2175, %v2516
        %v2518 = vpop.f32.mrb[0].mxu0
        %v2519 = vadd.f32 %v2179, %v2518
        %v2520 = vpop.f32.mrb[0].mxu0
        %v2521 = vadd.f32 %v2175, %v2520
        %v2522 = vpop.f32.mrb[0].mxu0
        %v2523 = vadd.f32 %v2179, %v2522
        %2524 = vmatprep.mubr.bf16.mxu0 %v2137
        %2525 = vmatmul.mubr.bf16.gmra.mrb[0].mxu0 %v2136
        %v2526 = vpop.f32.mrb[0].mxu0
        %v2527 = vadd.f32 %v2175, %v2526
        %v2528 = vpop.f32.mrb[0].mxu0
        %v2529 = vadd.f32 %v2179, %v2528
        %v2530 = vpop.f32.mrb[0].mxu0
        %v2531 = vadd.f32 %v2175, %v2530
        %v2532 = vpop.f32.mrb[0].mxu0
        %v2533 = vadd.f32 %v2179, %v2532
        %2534 = vdwg.mxu0
        %v2535 = vmax.f32 %v2377, 0.0
        %v2536 = vmax.f32 %v2379, 0.0
        %v2537 = vmax.f32 %v2381, 0.0
        %v2538 = vmax.f32 %v2383, 0.0
        %v2539 = vmax.f32 %v2387, 0.0
        %v2540 = vmax.f32 %v2389, 0.0
        %v2541 = vmax.f32 %v2391, 0.0
        %v2542 = vmax.f32 %v2393, 0.0
        %v2543 = vmax.f32 %v2397, 0.0
        %v2544 = vmax.f32 %v2399, 0.0
        %v2545 = vmax.f32 %v2401, 0.0
        %v2546 = vmax.f32 %v2403, 0.0
        %v2547 = vmax.f32 %v2407, 0.0
        %v2548 = vmax.f32 %v2409, 0.0
        %v2549 = vmax.f32 %v2411, 0.0
        %v2550 = vmax.f32 %v2413, 0.0
        %v2551 = vmax.f32 %v2417, 0.0
        %v2552 = vmax.f32 %v2419, 0.0
        %v2553 = vmax.f32 %v2421, 0.0
        %v2554 = vmax.f32 %v2423, 0.0
        %v2555 = vmax.f32 %v2427, 0.0
        %v2556 = vmax.f32 %v2429, 0.0
        %v2557 = vmax.f32 %v2431, 0.0
        %v2558 = vmax.f32 %v2433, 0.0
        %v2559 = vmax.f32 %v2437, 0.0
        %v2560 = vmax.f32 %v2439, 0.0
        %v2561 = vmax.f32 %v2441, 0.0
        %v2562 = vmax.f32 %v2443, 0.0
        %v2563 = vmax.f32 %v2447, 0.0
        %v2564 = vmax.f32 %v2449, 0.0
        %v2565 = vmax.f32 %v2451, 0.0
        %v2566 = vmax.f32 %v2453, 0.0
        %v2567 = vmax.f32 %v2457, 0.0
        %v2568 = vmax.f32 %v2459, 0.0
        %v2569 = vmax.f32 %v2461, 0.0
        %v2570 = vmax.f32 %v2463, 0.0
        %v2571 = vmax.f32 %v2467, 0.0
        %v2572 = vmax.f32 %v2469, 0.0
        %v2573 = vmax.f32 %v2471, 0.0
        %v2574 = vmax.f32 %v2473, 0.0
        %v2575 = vmax.f32 %v2477, 0.0
        %v2576 = vmax.f32 %v2479, 0.0
        %v2577 = vmax.f32 %v2481, 0.0
        %v2578 = vmax.f32 %v2483, 0.0
        %v2579 = vmax.f32 %v2487, 0.0
        %v2580 = vmax.f32 %v2489, 0.0
        %v2581 = vmax.f32 %v2491, 0.0
        %v2582 = vmax.f32 %v2493, 0.0
        %v2583 = vmax.f32 %v2497, 0.0
        %v2584 = vmax.f32 %v2499, 0.0
        %v2585 = vmax.f32 %v2501, 0.0
        %v2586 = vmax.f32 %v2503, 0.0
        %v2587 = vmax.f32 %v2507, 0.0
        %v2588 = vmax.f32 %v2509, 0.0
        %v2589 = vmax.f32 %v2511, 0.0
        %v2590 = vmax.f32 %v2513, 0.0
        %v2591 = vmax.f32 %v2517, 0.0
        %v2592 = vmax.f32 %v2519, 0.0
        %v2593 = vmax.f32 %v2521, 0.0
        %v2594 = vmax.f32 %v2523, 0.0
        %v2595 = vmax.f32 %v2527, 0.0
        %v2596 = vmax.f32 %v2529, 0.0
        %v2597 = vmax.f32 %v2531, 0.0
        %v2598 = vmax.f32 %v2533, 0.0
        %v2599 = vld [vmem:[%s9] sm:$0x3]
        %v2601 = vlaneseq
        %v2602 = vshrl.u32 %v2601, 7
        %v2603 = vsub.s32 0, %v2602
        %v2604 = vrot.slane %v2599, %v2603
        %v2605 = vlaneseq
        %v2606 = vshrl.u32 %v2605, 7
        %v2607 = vsub.s32 1, %v2606
        %v2608 = vrot.slane %v2599, %v2607
        %v2611 = vmul.f32 %v2535, %v2604
        %v2612 = vmul.f32 %v2536, %v2608
        %v2613 = vmul.f32 %v2537, %v2604
        %v2614 = vmul.f32 %v2538, %v2608
        %v2615 = vmul.f32 %v2539, %v2604
        %v2616 = vmul.f32 %v2540, %v2608
        %v2617 = vmul.f32 %v2541, %v2604
        %v2618 = vmul.f32 %v2542, %v2608
        %v2619 = vmul.f32 %v2543, %v2604
        %v2620 = vmul.f32 %v2544, %v2608
        %v2621 = vmul.f32 %v2545, %v2604
        %v2622 = vmul.f32 %v2546, %v2608
        %v2623 = vmul.f32 %v2547, %v2604
        %v2624 = vmul.f32 %v2548, %v2608
        %v2625 = vmul.f32 %v2549, %v2604
        %v2626 = vmul.f32 %v2550, %v2608
        %v2627 = vmul.f32 %v2551, %v2604
        %v2628 = vmul.f32 %v2552, %v2608
        %v2629 = vmul.f32 %v2553, %v2604
        %v2630 = vmul.f32 %v2554, %v2608
        %v2631 = vmul.f32 %v2555, %v2604
        %v2632 = vmul.f32 %v2556, %v2608
        %v2633 = vmul.f32 %v2557, %v2604
        %v2634 = vmul.f32 %v2558, %v2608
        %v2635 = vmul.f32 %v2559, %v2604
        %v2636 = vmul.f32 %v2560, %v2608
        %v2637 = vmul.f32 %v2561, %v2604
        %v2638 = vmul.f32 %v2562, %v2608
        %v2639 = vmul.f32 %v2563, %v2604
        %v2640 = vmul.f32 %v2564, %v2608
        %v2641 = vmul.f32 %v2565, %v2604
        %v2642 = vmul.f32 %v2566, %v2608
        %v2643 = vmul.f32 %v2567, %v2604
        %v2644 = vmul.f32 %v2568, %v2608
        %v2645 = vmul.f32 %v2569, %v2604
        %v2646 = vmul.f32 %v2570, %v2608
        %v2647 = vmul.f32 %v2571, %v2604
        %v2648 = vmul.f32 %v2572, %v2608
        %v2649 = vmul.f32 %v2573, %v2604
        %v2650 = vmul.f32 %v2574, %v2608
        %v2651 = vmul.f32 %v2575, %v2604
        %v2652 = vmul.f32 %v2576, %v2608
        %v2653 = vmul.f32 %v2577, %v2604
        %v2654 = vmul.f32 %v2578, %v2608
        %v2655 = vmul.f32 %v2579, %v2604
        %v2656 = vmul.f32 %v2580, %v2608
        %v2657 = vmul.f32 %v2581, %v2604
        %v2658 = vmul.f32 %v2582, %v2608
        %v2659 = vmul.f32 %v2583, %v2604
        %v2660 = vmul.f32 %v2584, %v2608
        %v2661 = vmul.f32 %v2585, %v2604
        %v2662 = vmul.f32 %v2586, %v2608
        %v2663 = vmul.f32 %v2587, %v2604
        %v2664 = vmul.f32 %v2588, %v2608
        %v2665 = vmul.f32 %v2589, %v2604
        %v2666 = vmul.f32 %v2590, %v2608
        %v2667 = vmul.f32 %v2591, %v2604
        %v2668 = vmul.f32 %v2592, %v2608
        %v2669 = vmul.f32 %v2593, %v2604
        %v2670 = vmul.f32 %v2594, %v2608
        %v2671 = vmul.f32 %v2595, %v2604
        %v2672 = vmul.f32 %v2596, %v2608
        %v2673 = vmul.f32 %v2597, %v2604
        %v2674 = vmul.f32 %v2598, %v2608
        %v2675 = vadd.f32 %v2611, %v2612
        %2676 = vadd.xlane.f32.xlu0 %v2675
        %v2677 = vpop.xlane.xlu0 %2676
        %v2678 = vadd.f32 %v2613, %v2614
        %2679 = vadd.xlane.f32.xlu0 %v2678
        %v2680 = vpop.xlane.xlu0 %2679
        %v2681 = vadd.f32 %v2615, %v2616
        %2682 = vadd.xlane.f32.xlu0 %v2681
        %v2683 = vpop.xlane.xlu0 %2682
        %v2684 = vadd.f32 %v2617, %v2618
        %2685 = vadd.xlane.f32.xlu0 %v2684
        %v2686 = vpop.xlane.xlu0 %2685
        %v2687 = vadd.f32 %v2619, %v2620
        %2688 = vadd.xlane.f32.xlu0 %v2687
        %v2689 = vpop.xlane.xlu0 %2688
        %v2690 = vadd.f32 %v2621, %v2622
        %2691 = vadd.xlane.f32.xlu0 %v2690
        %v2692 = vpop.xlane.xlu0 %2691
        %v2693 = vadd.f32 %v2623, %v2624
        %2694 = vadd.xlane.f32.xlu0 %v2693
        %v2695 = vpop.xlane.xlu0 %2694
        %v2696 = vadd.f32 %v2625, %v2626
        %2697 = vadd.xlane.f32.xlu0 %v2696
        %v2698 = vpop.xlane.xlu0 %2697
        %v2699 = vadd.f32 %v2627, %v2628
        %2700 = vadd.xlane.f32.xlu0 %v2699
        %v2701 = vpop.xlane.xlu0 %2700
        %v2702 = vadd.f32 %v2629, %v2630
        %2703 = vadd.xlane.f32.xlu0 %v2702
        %v2704 = vpop.xlane.xlu0 %2703
        %v2705 = vadd.f32 %v2631, %v2632
        %2706 = vadd.xlane.f32.xlu0 %v2705
        %v2707 = vpop.xlane.xlu0 %2706
        %v2708 = vadd.f32 %v2633, %v2634
        %2709 = vadd.xlane.f32.xlu0 %v2708
        %v2710 = vpop.xlane.xlu0 %2709
        %v2711 = vadd.f32 %v2635, %v2636
        %2712 = vadd.xlane.f32.xlu0 %v2711
        %v2713 = vpop.xlane.xlu0 %2712
        %v2714 = vadd.f32 %v2637, %v2638
        %2715 = vadd.xlane.f32.xlu0 %v2714
        %v2716 = vpop.xlane.xlu0 %2715
        %v2717 = vadd.f32 %v2639, %v2640
        %2718 = vadd.xlane.f32.xlu0 %v2717
        %v2719 = vpop.xlane.xlu0 %2718
        %v2720 = vadd.f32 %v2641, %v2642
        %2721 = vadd.xlane.f32.xlu0 %v2720
        %v2722 = vpop.xlane.xlu0 %2721
        %v2723 = vadd.f32 %v2643, %v2644
        %2724 = vadd.xlane.f32.xlu0 %v2723
        %v2725 = vpop.xlane.xlu0 %2724
        %v2726 = vadd.f32 %v2645, %v2646
        %2727 = vadd.xlane.f32.xlu0 %v2726
        %v2728 = vpop.xlane.xlu0 %2727
        %v2729 = vadd.f32 %v2647, %v2648
        %2730 = vadd.xlane.f32.xlu0 %v2729
        %v2731 = vpop.xlane.xlu0 %2730
        %v2732 = vadd.f32 %v2649, %v2650
        %2733 = vadd.xlane.f32.xlu0 %v2732
        %v2734 = vpop.xlane.xlu0 %2733
        %v2735 = vadd.f32 %v2651, %v2652
        %2736 = vadd.xlane.f32.xlu0 %v2735
        %v2737 = vpop.xlane.xlu0 %2736
        %v2738 = vadd.f32 %v2653, %v2654
        %2739 = vadd.xlane.f32.xlu0 %v2738
        %v2740 = vpop.xlane.xlu0 %2739
        %v2741 = vadd.f32 %v2655, %v2656
        %2742 = vadd.xlane.f32.xlu0 %v2741
        %v2743 = vpop.xlane.xlu0 %2742
        %v2744 = vadd.f32 %v2657, %v2658
        %2745 = vadd.xlane.f32.xlu0 %v2744
        %v2746 = vpop.xlane.xlu0 %2745
        %v2747 = vadd.f32 %v2659, %v2660
        %2748 = vadd.xlane.f32.xlu0 %v2747
        %v2749 = vpop.xlane.xlu0 %2748
        %v2750 = vadd.f32 %v2661, %v2662
        %2751 = vadd.xlane.f32.xlu0 %v2750
        %v2752 = vpop.xlane.xlu0 %2751
        %v2753 = vadd.f32 %v2663, %v2664
        %2754 = vadd.xlane.f32.xlu0 %v2753
        %v2755 = vpop.xlane.xlu0 %2754
        %v2756 = vadd.f32 %v2665, %v2666
        %2757 = vadd.xlane.f32.xlu0 %v2756
        %v2758 = vpop.xlane.xlu0 %2757
        %v2759 = vadd.f32 %v2667, %v2668
        %2760 = vadd.xlane.f32.xlu0 %v2759
        %v2761 = vpop.xlane.xlu0 %2760
        %v2762 = vadd.f32 %v2669, %v2670
        %2763 = vadd.xlane.f32.xlu0 %v2762
        %v2764 = vpop.xlane.xlu0 %2763
        %v2765 = vadd.f32 %v2671, %v2672
        %2766 = vadd.xlane.f32.xlu0 %v2765
        %v2767 = vpop.xlane.xlu0 %2766
        %v2768 = vadd.f32 %v2673, %v2674
        %2769 = vadd.xlane.f32.xlu0 %v2768
        %v2770 = vpop.xlane.xlu0 %2769
        %v2771 = vld [vmem:[#allocation3] sm:$0x1]
        %v2773 = vlaneseq
        %v2774 = vshrl.u32 %v2773, 7
        %v2775 = vsub.s32 0, %v2774
        %v2776 = vrot.slane %v2771, %v2775
        %v2778 = vadd.f32 %v2677, %v2776
        %v2779 = vadd.f32 %v2680, %v2776
        %v2780 = vadd.f32 %v2683, %v2776
        %v2781 = vadd.f32 %v2686, %v2776
        %v2782 = vadd.f32 %v2689, %v2776
        %v2783 = vadd.f32 %v2692, %v2776
        %v2784 = vadd.f32 %v2695, %v2776
        %v2785 = vadd.f32 %v2698, %v2776
        %v2786 = vadd.f32 %v2701, %v2776
        %v2787 = vadd.f32 %v2704, %v2776
        %v2788 = vadd.f32 %v2707, %v2776
        %v2789 = vadd.f32 %v2710, %v2776
        %v2790 = vadd.f32 %v2713, %v2776
        %v2791 = vadd.f32 %v2716, %v2776
        %v2792 = vadd.f32 %v2719, %v2776
        %v2793 = vadd.f32 %v2722, %v2776
        %v2794 = vadd.f32 %v2725, %v2776
        %v2795 = vadd.f32 %v2728, %v2776
        %v2796 = vadd.f32 %v2731, %v2776
        %v2797 = vadd.f32 %v2734, %v2776
        %v2798 = vadd.f32 %v2737, %v2776
        %v2799 = vadd.f32 %v2740, %v2776
        %v2800 = vadd.f32 %v2743, %v2776
        %v2801 = vadd.f32 %v2746, %v2776
        %v2802 = vadd.f32 %v2749, %v2776
        %v2803 = vadd.f32 %v2752, %v2776
        %v2804 = vadd.f32 %v2755, %v2776
        %v2805 = vadd.f32 %v2758, %v2776
        %v2806 = vadd.f32 %v2761, %v2776
        %v2807 = vadd.f32 %v2764, %v2776
        %v2808 = vadd.f32 %v2767, %v2776
        %v2809 = vadd.f32 %v2770, %v2776
        %vm2810 = vcmask 7168
        %2811 = vst.msk [vmem:[%s468] sm:$0xff] %vm2810, %v2778
        %2812 = vst.msk [vmem:[%s468 + $0x8] sm:$0xff] %vm2810, %v2779
        %2813 = vst.msk [vmem:[%s468 + $0x10] sm:$0xff] %vm2810, %v2780
        %2814 = vst.msk [vmem:[%s468 + $0x18] sm:$0xff] %vm2810, %v2781
        %2815 = vst.msk [vmem:[%s468 + $0x20] sm:$0xff] %vm2810, %v2782
        %2816 = vst.msk [vmem:[%s468 + $0x28] sm:$0xff] %vm2810, %v2783
        %2817 = vst.msk [vmem:[%s468 + $0x30] sm:$0xff] %vm2810, %v2784
        %2818 = vst.msk [vmem:[%s468 + $0x38] sm:$0xff] %vm2810, %v2785
        %2819 = vst.msk [vmem:[%s468 + $0x40] sm:$0xff] %vm2810, %v2786
        %2820 = vst.msk [vmem:[%s468 + $0x48] sm:$0xff] %vm2810, %v2787
        %2821 = vst.msk [vmem:[%s468 + $0x50] sm:$0xff] %vm2810, %v2788
        %2822 = vst.msk [vmem:[%s468 + $0x58] sm:$0xff] %vm2810, %v2789
        %2823 = vst.msk [vmem:[%s468 + $0x60] sm:$0xff] %vm2810, %v2790
        %2824 = vst.msk [vmem:[%s468 + $0x68] sm:$0xff] %vm2810, %v2791
        %2825 = vst.msk [vmem:[%s468 + $0x70] sm:$0xff] %vm2810, %v2792
        %2826 = vst.msk [vmem:[%s468 + $0x78] sm:$0xff] %vm2810, %v2793
        %2827 = vst.msk [vmem:[%s468 + $0x80] sm:$0xff] %vm2810, %v2794
        %2828 = vst.msk [vmem:[%s468 + $0x88] sm:$0xff] %vm2810, %v2795
        %2829 = vst.msk [vmem:[%s468 + $0x90] sm:$0xff] %vm2810, %v2796
        %2830 = vst.msk [vmem:[%s468 + $0x98] sm:$0xff] %vm2810, %v2797
        %2831 = vst.msk [vmem:[%s468 + $0xa0] sm:$0xff] %vm2810, %v2798
        %2832 = vst.msk [vmem:[%s468 + $0xa8] sm:$0xff] %vm2810, %v2799
        %2833 = vst.msk [vmem:[%s468 + $0xb0] sm:$0xff] %vm2810, %v2800
        %2834 = vst.msk [vmem:[%s468 + $0xb8] sm:$0xff] %vm2810, %v2801
        %2835 = vst.msk [vmem:[%s468 + $0xc0] sm:$0xff] %vm2810, %v2802
        %2836 = vst.msk [vmem:[%s468 + $0xc8] sm:$0xff] %vm2810, %v2803
        %2837 = vst.msk [vmem:[%s468 + $0xd0] sm:$0xff] %vm2810, %v2804
        %2838 = vst.msk [vmem:[%s468 + $0xd8] sm:$0xff] %vm2810, %v2805
        %2839 = vst.msk [vmem:[%s468 + $0xe0] sm:$0xff] %vm2810, %v2806
        %2840 = vst.msk [vmem:[%s468 + $0xe8] sm:$0xff] %vm2810, %v2807
        %2841 = vst.msk [vmem:[%s468 + $0xf0] sm:$0xff] %vm2810, %v2808
        %2842 = vst.msk [vmem:[%s468 + $0xf8] sm:$0xff] %vm2810, %v2809
        %s2843 = sand.u32 %s273, 1
        %s2844 = sand.u32 %s273, 1
        %s2845 = smul.addr %s2844, 256
        %s2846 = scalar_lea.vmem [#allocation12], %s2845
        // Predicated region
        $region85: #{dense_model_forward.1} parent=63 // pred_check
          %p2847 = pneg %p283
        $region86: #{dense_model_forward.1} parent=63 // pred_check_branch
          %2849 = sbr.rel (%p2847) target = $region88
        $region87: #{dense_model_forward.1} parent=63 // pred_region
          %s2850 = smul.u32 32, %s29
          %s2851 = ssub.s32 38, %s2850
          %p2852 = scmp.lt.s32.totalorder %s2851, 32
          %s2853 = scalar_select %p2852, %s2851, 32
          %s2854 = smul.u32 128, %s2853
          %p2855 = scmp.ne.s32.totalorder 0, %s2854
          %s2856 = smul.addr %s2850, 8
          %s2857 = scalar_lea.vmem %s11, %s2856
          // Predicated region
          $region89: #{dense_model_forward.1} parent=87 // pred_check
            %p2858 = pneg %p2855
          $region90: #{dense_model_forward.1} parent=87 // pred_check_branch
            %2860 = sbr.rel (%p2858) target = $region92
          $region91: #{dense_model_forward.1} parent=87 // pred_region
            // Predicated region
            $region93: #{dense_model_forward.1} parent=91 // pred_check
              _
            $region94: #{dense_model_forward.1} parent=91 // pred_check_branch
              %2862 = sbr.rel (0) target = $region96
            $region95: #{dense_model_forward.1} parent=91 // pred_region
              // Predicated region
              $region115: #{dense_model_forward.1} parent=95 // pred_check
                _
              $region116: #{dense_model_forward.1} parent=95 // pred_check_branch
                %2973 = sbr.rel (0) target = $region118
              $region117: #{dense_model_forward.1} parent=95 // pred_region
                %s2974 = sshrl.u32 %s2853, 5
                // While loop
                $region119: #{dense_model_forward.1} parent=117 // loop_pre_header
                  _
                $region120: #{dense_model_forward.1} parent=117 // loop_header
                  %s2976 = sphi 0, %s2978
                  %p2977 = scmp.ge.s32.totalorder %s2976, %s2974
                  %s2981 = sphi 0, %s3050
                  %s2982 = sphi %s2846, %s3053
                  %s2983 = sphi %s2857, %s3054
                $region121: #{dense_model_forward.1} parent=117 // loop_header_branch
                  %2980 = sbr.rel (%p2977) target = $region125
                $region122: #{dense_model_forward.1} parent=117 // loop_body
                  %v2984 = vld [vmem:[%s2982] sm:$0xff]
                  %2985 = vst [vmem:[%s2983] sm:$0xff] %v2984
                  %v2986 = vld [vmem:[%s2982 + $0x8] sm:$0xff]
                  %2987 = vst [vmem:[%s2983 + $0x8] sm:$0xff] %v2986
                  %v2988 = vld [vmem:[%s2982 + $0x10] sm:$0xff]
                  %2989 = vst [vmem:[%s2983 + $0x10] sm:$0xff] %v2988
                  %v2990 = vld [vmem:[%s2982 + $0x18] sm:$0xff]
                  %2991 = vst [vmem:[%s2983 + $0x18] sm:$0xff] %v2990
                  %v2992 = vld [vmem:[%s2982 + $0x20] sm:$0xff]
                  %2993 = vst [vmem:[%s2983 + $0x20] sm:$0xff] %v2992
                  %v2994 = vld [vmem:[%s2982 + $0x28] sm:$0xff]
                  %2995 = vst [vmem:[%s2983 + $0x28] sm:$0xff] %v2994
                  %v2996 = vld [vmem:[%s2982 + $0x30] sm:$0xff]
                  %2997 = vst [vmem:[%s2983 + $0x30] sm:$0xff] %v2996
                  %v2998 = vld [vmem:[%s2982 + $0x38] sm:$0xff]
                  %2999 = vst [vmem:[%s2983 + $0x38] sm:$0xff] %v2998
                  %v3000 = vld [vmem:[%s2982 + $0x40] sm:$0xff]
                  %3001 = vst [vmem:[%s2983 + $0x40] sm:$0xff] %v3000
                  %v3002 = vld [vmem:[%s2982 + $0x48] sm:$0xff]
                  %3003 = vst [vmem:[%s2983 + $0x48] sm:$0xff] %v3002
                  %v3004 = vld [vmem:[%s2982 + $0x50] sm:$0xff]
                  %3005 = vst [vmem:[%s2983 + $0x50] sm:$0xff] %v3004
                  %v3006 = vld [vmem:[%s2982 + $0x58] sm:$0xff]
                  %3007 = vst [vmem:[%s2983 + $0x58] sm:$0xff] %v3006
                  %v3008 = vld [vmem:[%s2982 + $0x60] sm:$0xff]
                  %3009 = vst [vmem:[%s2983 + $0x60] sm:$0xff] %v3008
                  %v3010 = vld [vmem:[%s2982 + $0x68] sm:$0xff]
                  %3011 = vst [vmem:[%s2983 + $0x68] sm:$0xff] %v3010
                  %v3012 = vld [vmem:[%s2982 + $0x70] sm:$0xff]
                  %3013 = vst [vmem:[%s2983 + $0x70] sm:$0xff] %v3012
                  %v3014 = vld [vmem:[%s2982 + $0x78] sm:$0xff]
                  %3015 = vst [vmem:[%s2983 + $0x78] sm:$0xff] %v3014
                  %v3016 = vld [vmem:[%s2982 + $0x80] sm:$0xff]
                  %3017 = vst [vmem:[%s2983 + $0x80] sm:$0xff] %v3016
                  %v3018 = vld [vmem:[%s2982 + $0x88] sm:$0xff]
                  %3019 = vst [vmem:[%s2983 + $0x88] sm:$0xff] %v3018
                  %v3020 = vld [vmem:[%s2982 + $0x90] sm:$0xff]
                  %3021 = vst [vmem:[%s2983 + $0x90] sm:$0xff] %v3020
                  %v3022 = vld [vmem:[%s2982 + $0x98] sm:$0xff]
                  %3023 = vst [vmem:[%s2983 + $0x98] sm:$0xff] %v3022
                  %v3024 = vld [vmem:[%s2982 + $0xa0] sm:$0xff]
                  %3025 = vst [vmem:[%s2983 + $0xa0] sm:$0xff] %v3024
                  %v3026 = vld [vmem:[%s2982 + $0xa8] sm:$0xff]
                  %3027 = vst [vmem:[%s2983 + $0xa8] sm:$0xff] %v3026
                  %v3028 = vld [vmem:[%s2982 + $0xb0] sm:$0xff]
                  %3029 = vst [vmem:[%s2983 + $0xb0] sm:$0xff] %v3028
                  %v3030 = vld [vmem:[%s2982 + $0xb8] sm:$0xff]
                  %3031 = vst [vmem:[%s2983 + $0xb8] sm:$0xff] %v3030
                  %v3032 = vld [vmem:[%s2982 + $0xc0] sm:$0xff]
                  %3033 = vst [vmem:[%s2983 + $0xc0] sm:$0xff] %v3032
                  %v3034 = vld [vmem:[%s2982 + $0xc8] sm:$0xff]
                  %3035 = vst [vmem:[%s2983 + $0xc8] sm:$0xff] %v3034
                  %v3036 = vld [vmem:[%s2982 + $0xd0] sm:$0xff]
                  %3037 = vst [vmem:[%s2983 + $0xd0] sm:$0xff] %v3036
                  %v3038 = vld [vmem:[%s2982 + $0xd8] sm:$0xff]
                  %3039 = vst [vmem:[%s2983 + $0xd8] sm:$0xff] %v3038
                  %v3040 = vld [vmem:[%s2982 + $0xe0] sm:$0xff]
                  %3041 = vst [vmem:[%s2983 + $0xe0] sm:$0xff] %v3040
                  %v3042 = vld [vmem:[%s2982 + $0xe8] sm:$0xff]
                  %3043 = vst [vmem:[%s2983 + $0xe8] sm:$0xff] %v3042
                  %v3044 = vld [vmem:[%s2982 + $0xf0] sm:$0xff]
                  %3045 = vst [vmem:[%s2983 + $0xf0] sm:$0xff] %v3044
                  %v3046 = vld [vmem:[%s2982 + $0xf8] sm:$0xff]
                  %3047 = vst [vmem:[%s2983 + $0xf8] sm:$0xff] %v3046
                  %s3048 = sadd.s32 1, %s2981
                  %p3049 = scmp.ge.s32.totalorder %s3048, %s2974
                  %s3050 = scalar_select %p3049, 0, %s3048
                  %s3051 = smul.u32 %s3050, 256
                  %s3052 = smul.u32 %s3050, 256
                  %s3053 = scalar_lea.vmem %s2846, %s3051 [#allocation12]
                  %s3054 = scalar_lea.vmem %s2857, %s3052
                $region123: #{dense_model_forward.1} parent=117 // loop_footer
                  %s2978 = sadd.s32 %s2976, 1
                $region124: #{dense_model_forward.1} parent=117 // loop_footer_branch
                  %2975 = sbr.rel target = $region120
                $region125: #{dense_model_forward.1} parent=117 // loop_exit
                  _
                %s3055 = sshrl.u32 %s2853, 5
                %s3056 = sand.u32 %s2853, 31
                %s3057 = smul.u32 %s3055, 32
                %s3058 = smul.u32 8, %s3057
                %s3059 = scalar_lea.vmem %s2846, %s3058 [#allocation12]
                %s3060 = smul.u32 8, %s3057
                %s3061 = scalar_lea.vmem %s2857, %s3060
                // While loop
                $region126: #{dense_model_forward.1} parent=117 // loop_pre_header
                  _
                $region127: #{dense_model_forward.1} parent=117 // loop_header
                  %s3063 = sphi 0, %s3065
                  %p3064 = scmp.ge.s32.totalorder %s3063, %s3056
                  %s3068 = sphi 0, %s3075
                  %s3069 = sphi %s3059, %s3078
                  %s3070 = sphi %s3061, %s3079
                $region128: #{dense_model_forward.1} parent=117 // loop_header_branch
                  %3067 = sbr.rel (%p3064) target = $region132
                $region129: #{dense_model_forward.1} parent=117 // loop_body
                  %v3071 = vld [vmem:[%s3069] sm:$0xff]
                  %3072 = vst [vmem:[%s3070] sm:$0xff] %v3071
                  %s3073 = sadd.s32 1, %s3068
                  %p3074 = scmp.ge.s32.totalorder %s3073, %s3056
                  %s3075 = scalar_select %p3074, 0, %s3073
                  %s3076 = smul.u32 %s3075, 8
                  %s3077 = smul.u32 %s3075, 8
                  %s3078 = scalar_lea.vmem %s3059, %s3076 [#allocation12]
                  %s3079 = scalar_lea.vmem %s3061, %s3077
                $region130: #{dense_model_forward.1} parent=117 // loop_footer
                  %s3065 = sadd.s32 %s3063, 1
                $region131: #{dense_model_forward.1} parent=117 // loop_footer_branch
                  %3062 = sbr.rel target = $region127
                $region132: #{dense_model_forward.1} parent=117 // loop_exit
                  _
              $region118: #{dense_model_forward.1} parent=95 // pred_fallthru
                _
              // Predicated region
              $region133: #{dense_model_forward.1} parent=95 // pred_check
                _
              $region134: #{dense_model_forward.1} parent=95 // pred_check_branch
                %3081 = sbr.rel target = $region136
              $region135: #{dense_model_forward.1} parent=95 // pred_region
                _
              $region136: #{dense_model_forward.1} parent=95 // pred_fallthru
                _
            $region96: #{dense_model_forward.1} parent=91 // pred_fallthru
              _
            // Predicated region
            $region97: #{dense_model_forward.1} parent=91 // pred_check
              _
            $region98: #{dense_model_forward.1} parent=91 // pred_check_branch
              %2864 = sbr.rel target = $region100
            $region99: #{dense_model_forward.1} parent=91 // pred_region
              %s2866 = sshrl.u32 %s2853, 5
              // While loop
              $region101: #{dense_model_forward.1} parent=99 // loop_pre_header
                _
              $region102: #{dense_model_forward.1} parent=99 // loop_header
                %s2868 = sphi 0, %s2870
                %p2869 = scmp.ge.s32.totalorder %s2868, %s2866
                %s2873 = sphi 0, %s2942
                %s2874 = sphi %s2846, %s2945
                %s2875 = sphi %s2857, %s2946
              $region103: #{dense_model_forward.1} parent=99 // loop_header_branch
                %2872 = sbr.rel (%p2869) target = $region107
              $region104: #{dense_model_forward.1} parent=99 // loop_body
                %v2876 = vld [vmem:[%s2874] sm:$0xff]
                %2877 = vst [vmem:[%s2875] sm:$0xff] %v2876
                %v2878 = vld [vmem:[%s2874 + $0x8] sm:$0xff]
                %2879 = vst [vmem:[%s2875 + $0x8] sm:$0xff] %v2878
                %v2880 = vld [vmem:[%s2874 + $0x10] sm:$0xff]
                %2881 = vst [vmem:[%s2875 + $0x10] sm:$0xff] %v2880
                %v2882 = vld [vmem:[%s2874 + $0x18] sm:$0xff]
                %2883 = vst [vmem:[%s2875 + $0x18] sm:$0xff] %v2882
                %v2884 = vld [vmem:[%s2874 + $0x20] sm:$0xff]
                %2885 = vst [vmem:[%s2875 + $0x20] sm:$0xff] %v2884
                %v2886 = vld [vmem:[%s2874 + $0x28] sm:$0xff]
                %2887 = vst [vmem:[%s2875 + $0x28] sm:$0xff] %v2886
                %v2888 = vld [vmem:[%s2874 + $0x30] sm:$0xff]
                %2889 = vst [vmem:[%s2875 + $0x30] sm:$0xff] %v2888
                %v2890 = vld [vmem:[%s2874 + $0x38] sm:$0xff]
                %2891 = vst [vmem:[%s2875 + $0x38] sm:$0xff] %v2890
                %v2892 = vld [vmem:[%s2874 + $0x40] sm:$0xff]
                %2893 = vst [vmem:[%s2875 + $0x40] sm:$0xff] %v2892
                %v2894 = vld [vmem:[%s2874 + $0x48] sm:$0xff]
                %2895 = vst [vmem:[%s2875 + $0x48] sm:$0xff] %v2894
                %v2896 = vld [vmem:[%s2874 + $0x50] sm:$0xff]
                %2897 = vst [vmem:[%s2875 + $0x50] sm:$0xff] %v2896
                %v2898 = vld [vmem:[%s2874 + $0x58] sm:$0xff]
                %2899 = vst [vmem:[%s2875 + $0x58] sm:$0xff] %v2898
                %v2900 = vld [vmem:[%s2874 + $0x60] sm:$0xff]
                %2901 = vst [vmem:[%s2875 + $0x60] sm:$0xff] %v2900
                %v2902 = vld [vmem:[%s2874 + $0x68] sm:$0xff]
                %2903 = vst [vmem:[%s2875 + $0x68] sm:$0xff] %v2902
                %v2904 = vld [vmem:[%s2874 + $0x70] sm:$0xff]
                %2905 = vst [vmem:[%s2875 + $0x70] sm:$0xff] %v2904
                %v2906 = vld [vmem:[%s2874 + $0x78] sm:$0xff]
                %2907 = vst [vmem:[%s2875 + $0x78] sm:$0xff] %v2906
                %v2908 = vld [vmem:[%s2874 + $0x80] sm:$0xff]
                %2909 = vst [vmem:[%s2875 + $0x80] sm:$0xff] %v2908
                %v2910 = vld [vmem:[%s2874 + $0x88] sm:$0xff]
                %2911 = vst [vmem:[%s2875 + $0x88] sm:$0xff] %v2910
                %v2912 = vld [vmem:[%s2874 + $0x90] sm:$0xff]
                %2913 = vst [vmem:[%s2875 + $0x90] sm:$0xff] %v2912
                %v2914 = vld [vmem:[%s2874 + $0x98] sm:$0xff]
                %2915 = vst [vmem:[%s2875 + $0x98] sm:$0xff] %v2914
                %v2916 = vld [vmem:[%s2874 + $0xa0] sm:$0xff]
                %2917 = vst [vmem:[%s2875 + $0xa0] sm:$0xff] %v2916
                %v2918 = vld [vmem:[%s2874 + $0xa8] sm:$0xff]
                %2919 = vst [vmem:[%s2875 + $0xa8] sm:$0xff] %v2918
                %v2920 = vld [vmem:[%s2874 + $0xb0] sm:$0xff]
                %2921 = vst [vmem:[%s2875 + $0xb0] sm:$0xff] %v2920
                %v2922 = vld [vmem:[%s2874 + $0xb8] sm:$0xff]
                %2923 = vst [vmem:[%s2875 + $0xb8] sm:$0xff] %v2922
                %v2924 = vld [vmem:[%s2874 + $0xc0] sm:$0xff]
                %2925 = vst [vmem:[%s2875 + $0xc0] sm:$0xff] %v2924
                %v2926 = vld [vmem:[%s2874 + $0xc8] sm:$0xff]
                %2927 = vst [vmem:[%s2875 + $0xc8] sm:$0xff] %v2926
                %v2928 = vld [vmem:[%s2874 + $0xd0] sm:$0xff]
                %2929 = vst [vmem:[%s2875 + $0xd0] sm:$0xff] %v2928
                %v2930 = vld [vmem:[%s2874 + $0xd8] sm:$0xff]
                %2931 = vst [vmem:[%s2875 + $0xd8] sm:$0xff] %v2930
                %v2932 = vld [vmem:[%s2874 + $0xe0] sm:$0xff]
                %2933 = vst [vmem:[%s2875 + $0xe0] sm:$0xff] %v2932
                %v2934 = vld [vmem:[%s2874 + $0xe8] sm:$0xff]
                %2935 = vst [vmem:[%s2875 + $0xe8] sm:$0xff] %v2934
                %v2936 = vld [vmem:[%s2874 + $0xf0] sm:$0xff]
                %2937 = vst [vmem:[%s2875 + $0xf0] sm:$0xff] %v2936
                %v2938 = vld [vmem:[%s2874 + $0xf8] sm:$0xff]
                %2939 = vst [vmem:[%s2875 + $0xf8] sm:$0xff] %v2938
                %s2940 = sadd.s32 1, %s2873
                %p2941 = scmp.ge.s32.totalorder %s2940, %s2866
                %s2942 = scalar_select %p2941, 0, %s2940
                %s2943 = smul.u32 %s2942, 256
                %s2944 = smul.u32 %s2942, 256
                %s2945 = scalar_lea.vmem %s2846, %s2943 [#allocation12]
                %s2946 = scalar_lea.vmem %s2857, %s2944
              $region105: #{dense_model_forward.1} parent=99 // loop_footer
                %s2870 = sadd.s32 %s2868, 1
              $region106: #{dense_model_forward.1} parent=99 // loop_footer_branch
                %2867 = sbr.rel target = $region102
              $region107: #{dense_model_forward.1} parent=99 // loop_exit
                _
              %s2947 = sshrl.u32 %s2853, 5
              %s2948 = sand.u32 %s2853, 31
              %s2949 = smul.u32 %s2947, 32
              %s2950 = smul.u32 8, %s2949
              %s2951 = scalar_lea.vmem %s2846, %s2950 [#allocation12]
              %s2952 = smul.u32 8, %s2949
              %s2953 = scalar_lea.vmem %s2857, %s2952
              // While loop
              $region108: #{dense_model_forward.1} parent=99 // loop_pre_header
                _
              $region109: #{dense_model_forward.1} parent=99 // loop_header
                %s2955 = sphi 0, %s2957
                %p2956 = scmp.ge.s32.totalorder %s2955, %s2948
                %s2960 = sphi 0, %s2967
                %s2961 = sphi %s2951, %s2970
                %s2962 = sphi %s2953, %s2971
              $region110: #{dense_model_forward.1} parent=99 // loop_header_branch
                %2959 = sbr.rel (%p2956) target = $region114
              $region111: #{dense_model_forward.1} parent=99 // loop_body
                %v2963 = vld [vmem:[%s2961] sm:$0xff]
                %2964 = vst [vmem:[%s2962] sm:$0xff] %v2963
                %s2965 = sadd.s32 1, %s2960
                %p2966 = scmp.ge.s32.totalorder %s2965, %s2948
                %s2967 = scalar_select %p2966, 0, %s2965
                %s2968 = smul.u32 %s2967, 8
                %s2969 = smul.u32 %s2967, 8
                %s2970 = scalar_lea.vmem %s2951, %s2968 [#allocation12]
                %s2971 = scalar_lea.vmem %s2953, %s2969
              $region112: #{dense_model_forward.1} parent=99 // loop_footer
                %s2957 = sadd.s32 %s2955, 1
              $region113: #{dense_model_forward.1} parent=99 // loop_footer_branch
                %2954 = sbr.rel target = $region109
              $region114: #{dense_model_forward.1} parent=99 // loop_exit
                _
            $region100: #{dense_model_forward.1} parent=91 // pred_fallthru
              _
          $region92: #{dense_model_forward.1} parent=87 // pred_fallthru
            _
          %3082 = vnop
        $region88: #{dense_model_forward.1} parent=63 // pred_fallthru
          _
      $region64: #{dense_model_forward.1} parent=5 // pred_fallthru
        _
      %p3083 = scmp.le.s32.totalorder 2, %s24
      // Predicated region
      $region137: #{dense_model_forward.1} parent=5 // pred_check
        %p3084 = pneg %p3083
      $region138: #{dense_model_forward.1} parent=5 // pred_check_branch
        %3086 = sbr.rel (%p3084) target = $region140
      $region139: #{dense_model_forward.1} parent=5 // pred_region
        %s3087 = ssub.s32 %s24, 2
        // Predicated region
        $region141: #{dense_model_forward.1} parent=139 // pred_check
          %p3088 = pneg %p289
        $region142: #{dense_model_forward.1} parent=139 // pred_check_branch
          %3090 = sbr.rel (%p3088) target = $region144
        $region143: #{dense_model_forward.1} parent=139 // pred_region
          %s3091 = sand.u32 %s274, 1
          %s3092 = sand.u32 %s274, 1
          %s3093 = smul.addr %s3092, 256
          %s3094 = scalar_lea.vmem [#allocation12], %s3093
        $region144: #{dense_model_forward.1} parent=139 // pred_fallthru
          _
      $region140: #{dense_model_forward.1} parent=5 // pred_fallthru
        _
    $region6: #{dense_model_forward.1} parent=1 // loop_footer
      %s28 = sadd.s32 1, %s24
    $region7: #{dense_model_forward.1} parent=1 // loop_footer_branch
      %23 = sbr.rel target = $region3
    $region8: #{dense_model_forward.1} parent=1 // loop_exit
      _
    %3095 = vsyncpa [#allocation5], 1
    %s3096 = scalar_lea.sflag [#allocation5], 1
    %3097 = vsyncpa %s3096, 1
    %3098 = vsyncpa [#allocation7], 1
    %3099 = vsyncpa [#allocation10], 1

</llo_original>
